<compile_context>
chip_gen: v7x
topology: tpu7x:2x2x1
jax: 0.10.0
libtpu: 0.0.40
codegen_flags: <defaults>
</compile_context>

<pallas_src>
import functools

import numpy as np
import jax
import jax.numpy as jnp
from jax.experimental import pallas as pl
from jax.experimental.pallas import tpu as pltpu


def _ps_roi_align_kernel(block_b_ref, rois_ref, feat_ref, out_ref, *,
                         spatial_scale, RS, SR, D, H, W, B):
    """One grid step == one block of B ROIs, all belonging to one batch image.

    block_b_ref : SMEM int32 [G]         (scalar prefetch; consumed by index_map only)
    rois_ref    : SMEM f32   [5, R_pad]  rows = (batch_idx, x1, y1, x2, y2)
    feat_ref    : VMEM f32   [H*RS*RS*W, D]   row index = (h*RS*RS + k)*W + w
    out_ref     : VMEM f32   [B, RS*RS*D]
    """
    del block_b_ref
    RS2 = RS * RS
    g = pl.program_id(0)
    neg_init = jnp.full((1, D), -1e10, jnp.float32)   # hoisted out of the loop

    @pl.loop(0, B)
    def _(i):
        r = g * B + i
        x1 = rois_ref[1, r] * spatial_scale
        y1 = rois_ref[2, r] * spatial_scale
        x2 = rois_ref[3, r] * spatial_scale
        y2 = rois_ref[4, r] * spatial_scale
        roi_w = jnp.maximum(x2 - x1, 0.1)
        roi_h = jnp.maximum(y2 - y1, 0.1)
        bin_w = roi_w / RS
        bin_h = roi_h / RS

        # ---- hoisted scalar prep: y-side per (ph, iy) ----
        ys = []
        for ph in range(RS):
            for iy in range(SR):
                y = y1 + ph * bin_h + (iy + 0.5) * bin_h / SR
                oob = (y < -1.0) | (y > H)
                yc = jnp.clip(y, 0.0, float(H - 1))
                y_low = jnp.minimum(yc.astype(jnp.int32), H - 2)
                ly = yc - y_low.astype(jnp.float32)
                ys.append((oob, y_low * (RS2 * W), ly, 1.0 - ly))

        # ---- hoisted scalar prep: x-side per (pw, ix) ----
        xs = []
        for pw in range(RS):
            for ix in range(SR):
                x = x1 + pw * bin_w + (ix + 0.5) * bin_w / SR
                oob = (x < -1.0) | (x > W)
                xc = jnp.clip(x, 0.0, float(W - 1))
                x_low = jnp.minimum(xc.astype(jnp.int32), W - 2)
                lx = xc - x_low.astype(jnp.float32)
                xs.append((oob, x_low, lx, 1.0 - lx))

        bins = []
        for ph in range(RS):
            for pw in range(RS):
                k = ph * RS + pw
                maxv = neg_init
                for iy in range(SR):
                    oob_y, row_y, ly, hy = ys[ph * SR + iy]
                    base = row_y + k * W
                    for ix in range(SR):
                        oob_x, x_low, lx, hx = xs[pw * SR + ix]
                        r_lo = base + x_low
                        # two contiguous rows = (y_low, x_low) and (y_low, x_low+1)
                        v_lo = feat_ref[pl.ds(r_lo, 2), :]            # (2, D)
                        v_hi = feat_ref[pl.ds(r_lo + RS2 * W, 2), :]  # (2, D)
                        wl = hx * v_lo[0:1, :] + lx * v_lo[1:2, :]
                        wh = hx * v_hi[0:1, :] + lx * v_hi[1:2, :]
                        val = hy * wl + ly * wh
                        val = jnp.where(oob_y | oob_x, 0.0, val)
                        maxv = jnp.maximum(maxv, val)
                bins.append(maxv)
        # single lane-dense store per ROI: (1, RS*RS*D)
        out_ref[pl.ds(i, 1), :] = jnp.concatenate(bins, axis=-1)


def ps_roi_align(bottom_data, bottom_rois, spatial_scale, roi_size,
                 sampling_ratio, pooled_dim, roi_block=8):
    """Forward of PSROIAlign_ori.

    bottom_data: f32 [N, pooled_dim*roi_size*roi_size, H, W]  (NCHW)
    bottom_rois: f32 [num_rois, 5]  rows = (batch_idx, x1, y1, x2, y2)
    returns:     f32 [num_rois, pooled_dim, roi_size, roi_size]
    """
    N, C, H, W = bottom_data.shape
    RS, D = int(roi_size), int(pooled_dim)
    RS2 = RS * RS
    assert C == D * RS2, "channels must equal pooled_dim * roi_size^2"
    assert sampling_ratio > 0, "adaptive sampling (sampling_ratio<=0) unsupported"
    assert H >= 2 and W >= 2
    SR = int(sampling_ratio)
    R = int(bottom_rois.shape[0])
    B = int(roi_block)

    # NCHW -> [N, (h*RS2 + k)*W + w, D]
    feat = bottom_data.astype(jnp.float32).reshape(N, D, RS2, H, W)
    feat = jnp.transpose(feat, (0, 3, 2, 4, 1)).reshape(N, H * RS2 * W, D)

    rois = bottom_rois.astype(jnp.float32)
    bidx = jnp.clip(rois[:, 0].astype(jnp.int32), 0, N - 1)

    # ---- build batch-homogeneous blocks of B ROIs (sorted by batch index) ----
    order = jnp.argsort(bidx)                              # sorted by batch
    sorted_b = bidx[order]
    counts = jnp.bincount(bidx, length=N)                  # rois per image
    start = jnp.cumsum(counts) - counts                    # exclusive cumsum
    padded = ((counts + B - 1) // B) * B                   # per-image padded count
    slot_base = jnp.cumsum(padded) - padded                # exclusive cumsum
    rank = jnp.arange(R, dtype=jnp.int32) - start[sorted_b]
    slot = (slot_base[sorted_b] + rank).astype(jnp.int32)  # schedule slot per sorted ROI

    R_pad = int(-(-(R + N * (B - 1)) // B) * B)            # static upper bound
    G = R_pad // B

    sched_rois = jnp.zeros((R_pad, 5), jnp.float32).at[slot].set(rois[order])
    block_b = jnp.zeros((G,), jnp.int32).at[slot // B].set(sorted_b)
    inv_slot = jnp.zeros((R,), jnp.int32).at[order].set(slot)

    rois_t = sched_rois.T                                  # [5, R_pad]: SMEM friendly

    kernel = functools.partial(
        _ps_roi_align_kernel,
        spatial_scale=float(spatial_scale), RS=RS, SR=SR, D=D, H=H, W=W, B=B)

    slab_bytes = H * RS2 * W * D * 4
    vmem_need = 2 * slab_bytes + 2 * B * RS2 * D * 4 + (1 << 20)
    vmem_limit = int(min(max(vmem_need, 32 * 1024 * 1024), 100 * 1024 * 1024))

    out = pl.pallas_call(
        kernel,
        out_shape=jax.ShapeDtypeStruct((R_pad, RS2 * D), jnp.float32),
        grid_spec=pltpu.PrefetchScalarGridSpec(
            num_scalar_prefetch=2,            # (block_b, rois_t) land in SMEM
            grid=(G,),
            in_specs=[
                # whole feature slab of the block's batch image; consecutive
                # blocks with the same batch index skip the re-DMA.
                pl.BlockSpec((None, H * RS2 * W, D),
                             lambda g, bb, rr: (bb[g], 0, 0)),
            ],
            out_specs=pl.BlockSpec((B, RS2 * D), lambda g, bb, rr: (g, 0)),
        ),
        compiler_params=pltpu.CompilerParams(
            dimension_semantics=("parallel",),
            vmem_limit_bytes=vmem_limit),
    )(block_b, rois_t, feat)

    # un-permute back to the original ROI order, then to PyTorch layout
    out = out[inv_slot]                                     # [R, RS2*D]
    return out.reshape(R, RS, RS, D).transpose(0, 3, 1, 2)  # [R, D, RS, RS]


class PSROIAlignOri:
    """JAX/Pallas port of PSROIAlign_ori (no learnable parameters)."""

    def __init__(self, spatial_scale, roi_size, sampling_ratio, pooled_dim):
        self.spatial_scale = spatial_scale
        self.roi_size = roi_size
        self.sampling_ratio = sampling_ratio
        self.pooled_dim = pooled_dim

    def __call__(self, bottom_data, bottom_rois):
        return ps_roi_align(bottom_data, bottom_rois, self.spatial_scale,
                            self.roi_size, self.sampling_ratio, self.pooled_dim)


# ------------------------- pure-numpy reference -------------------------

def _bilinear_np(plane, H, W, y, x):
    if y < -1.0 or y > H or x < -1.0 or x > W:
        return 0.0
    y = max(y, 0.0)
    x = max(x, 0.0)
    y_low = int(y)
    x_low = int(x)
    if y_low >= H - 1:
        y_high = y_low = H - 1
        y = float(y_low)
    else:
        y_high = y_low + 1
    if x_low >= W - 1:
        x_high = x_low = W - 1
        x = float(x_low)
    else:
        x_high = x_low + 1
    ly = y - y_low
    lx = x - x_low
    hy = 1.0 - ly
    hx = 1.0 - lx
    v1 = plane[y_low, x_low]
    v2 = plane[y_low, x_high]
    v3 = plane[y_high, x_low]
    v4 = plane[y_high, x_high]
    return hy * hx * v1 + hy * lx * v2 + ly * hx * v3 + ly * lx * v4


def ps_roi_align_ref(feat_nchw, rois, spatial_scale, RS, SR, D):
    feat_nchw = np.asarray(feat_nchw, np.float32)
    rois = np.asarray(rois, np.float32)
    N, C, H, W = feat_nchw.shape
    R = rois.shape[0]
    out = np.zeros((R, D, RS, RS), np.float32)
    for n in range(R):
        b = int(rois[n, 0])
        x1 = rois[n, 1] * spatial_scale
        y1 = rois[n, 2] * spatial_scale
        x2 = rois[n, 3] * spatial_scale
        y2 = rois[n, 4] * spatial_scale
        roi_w = max(x2 - x1, 0.1)
        roi_h = max(y2 - y1, 0.1)
        bin_h = roi_h / RS
        bin_w = roi_w / RS
        for d in range(D):
            for ph in range(RS):
                for pw in range(RS):
                    c = (d * RS + ph) * RS + pw
                    maxval = -1e10
                    for iy in range(SR):
                        y = y1 + ph * bin_h + (iy + 0.5) * bin_h / SR
                        for ix in range(SR):
                            x = x1 + pw * bin_w + (ix + 0.5) * bin_w / SR
                            val = _bilinear_np(feat_nchw[b, c], H, W, y, x)
                            maxval = max(maxval, val)
                    out[n, d, ph, pw] = maxval
    return out


if __name__ == "__main__":
    spatial_scale = 0.25
    roi_size = 3
    sampling_ratio = 2
    pooled_dim = 8

    N, H, W = 2, 16, 16
    C = pooled_dim * roi_size * roi_size          # 72

    key = jax.random.PRNGKey(0)
    x = jax.random.normal(key, (N, C, H, W), dtype=jnp.float32)

    # rois in input-image coordinates: (batch_idx, x1, y1, x2, y2)
    # (deliberately not batch-sorted; last ROI partially out of bounds)
    rois = jnp.array([
        [0.,  4.,  4., 40., 40.],
        [1., 10.,  2., 30., 50.],
        [0.,  0.,  0., 63., 63.],
        [1., 20., 12., 28., 44.],
        [1., -8., -8., 70., 70.],
    ], dtype=jnp.float32)

    module = PSROIAlignOri(spatial_scale, roi_size, sampling_ratio, pooled_dim)
    out = module(x, rois)
    out = jax.block_until_ready(out)

    ref = ps_roi_align_ref(np.asarray(x), np.asarray(rois), spatial_scale,
                           roi_size, sampling_ratio, pooled_dim)
    np.testing.assert_allclose(np.asarray(out), ref, rtol=2e-4, atol=2e-4)
    assert out.shape == (rois.shape[0], pooled_dim, roi_size, roi_size)
    print("KERNEL_OK")
</pallas_src>

<mosaic_0001>
module attributes {stable_mosaic.version = 11 : i64} {
  func.func @_ps_roi_align_kernel(%arg0: i32, %arg1: memref<3xi32, #tpu.memory_space<smem>>, %arg2: memref<5x24xf32, #tpu.memory_space<smem>>, %arg3: memref<1x2304x8xf32, #tpu.memory_space<vmem>>, %arg4: memref<8x72xf32, #tpu.memory_space<vmem>>) attributes {dimension_semantics = [#tpu.dimension_semantics<parallel>], iteration_bounds = array<i64: 3>, scalar_prefetch = 2 : i64, scratch_operands = 0 : i64, tpu.core_type = #tpu.core_type<tc>, window_params = [{transform_indices = @transform_0, window_bounds = array<i64: 1, 2304, 8>}, {transform_indices = @transform_1, window_bounds = array<i64: 8, 72>}]} {
    %cst = arith.constant -1.000000e+10 : f32
    %0 = vector.broadcast %cst : f32 to vector<1x8xf32>
    %c0_i32 = arith.constant 0 : i32
    %c8_i32 = arith.constant 8 : i32
    %1 = arith.addi %c0_i32, %c8_i32 : i32
    %c1_i32 = arith.constant 1 : i32
    scf.for %arg5 = %c0_i32 to %1 step %c1_i32  : i32 {
      %c1_i32_1 = arith.constant 1 : i32
      %2 = arith.muli %arg5, %c1_i32_1 : i32
      %c0_i32_2 = arith.constant 0 : i32
      %3 = arith.addi %c0_i32_2, %2 : i32
      %c8_i32_3 = arith.constant 8 : i32
      %4 = arith.muli %arg0, %c8_i32_3 : i32
      %5 = arith.addi %4, %3 : i32
      %c1 = arith.constant 1 : index
      %6 = arith.index_cast %5 : i32 to index
      %7 = memref.load %arg2[%c1, %6] : memref<5x24xf32, #tpu.memory_space<smem>>
      %cst_4 = arith.constant 2.500000e-01 : f32
      %8 = arith.mulf %7, %cst_4 : f32
      %c2 = arith.constant 2 : index
      %9 = arith.index_cast %5 : i32 to index
      %10 = memref.load %arg2[%c2, %9] : memref<5x24xf32, #tpu.memory_space<smem>>
      %cst_5 = arith.constant 2.500000e-01 : f32
      %11 = arith.mulf %10, %cst_5 : f32
      %c3 = arith.constant 3 : index
      %12 = arith.index_cast %5 : i32 to index
      %13 = memref.load %arg2[%c3, %12] : memref<5x24xf32, #tpu.memory_space<smem>>
      %cst_6 = arith.constant 2.500000e-01 : f32
      %14 = arith.mulf %13, %cst_6 : f32
      %c4 = arith.constant 4 : index
      %15 = arith.index_cast %5 : i32 to index
      %16 = memref.load %arg2[%c4, %15] : memref<5x24xf32, #tpu.memory_space<smem>>
      %cst_7 = arith.constant 2.500000e-01 : f32
      %17 = arith.mulf %16, %cst_7 : f32
      %18 = arith.subf %14, %8 : f32
      %cst_8 = arith.constant 1.000000e-01 : f32
      %19 = arith.maximumf %18, %cst_8 : f32
      %20 = arith.subf %17, %11 : f32
      %cst_9 = arith.constant 1.000000e-01 : f32
      %21 = arith.maximumf %20, %cst_9 : f32
      %cst_10 = arith.constant 3.000000e+00 : f32
      %22 = arith.divf %19, %cst_10 : f32
      %cst_11 = arith.constant 3.000000e+00 : f32
      %23 = arith.divf %21, %cst_11 : f32
      %cst_12 = arith.constant 0.000000e+00 : f32
      %24 = arith.mulf %cst_12, %23 : f32
      %25 = arith.addf %11, %24 : f32
      %cst_13 = arith.constant 5.000000e-01 : f32
      %26 = arith.mulf %cst_13, %23 : f32
      %cst_14 = arith.constant 2.000000e+00 : f32
      %27 = arith.divf %26, %cst_14 : f32
      %28 = arith.addf %25, %27 : f32
      %cst_15 = arith.constant -1.000000e+00 : f32
      %29 = arith.cmpf olt, %28, %cst_15 : f32
      %cst_16 = arith.constant 1.600000e+01 : f32
      %30 = arith.cmpf ogt, %28, %cst_16 : f32
      %31 = arith.ori %29, %30 : i1
      %cst_17 = arith.constant 0.000000e+00 : f32
      %cst_18 = arith.constant 1.500000e+01 : f32
      %32 = arith.maximumf %cst_17, %28 : f32
      %33 = arith.minimumf %cst_18, %32 : f32
      %34 = arith.fptosi %33 : f32 to i32
      %c14_i32 = arith.constant 14 : i32
      %35 = arith.minsi %34, %c14_i32 : i32
      %36 = arith.sitofp %35 : i32 to f32
      %37 = arith.subf %33, %36 : f32
      %c144_i32 = arith.constant 144 : i32
      %38 = arith.muli %35, %c144_i32 : i32
      %cst_19 = arith.constant 1.000000e+00 : f32
      %39 = arith.subf %cst_19, %37 : f32
      %cst_20 = arith.constant 0.000000e+00 : f32
      %40 = arith.mulf %cst_20, %23 : f32
      %41 = arith.addf %11, %40 : f32
      %cst_21 = arith.constant 1.500000e+00 : f32
      %42 = arith.mulf %cst_21, %23 : f32
      %cst_22 = arith.constant 2.000000e+00 : f32
      %43 = arith.divf %42, %cst_22 : f32
      %44 = arith.addf %41, %43 : f32
      %cst_23 = arith.constant -1.000000e+00 : f32
      %45 = arith.cmpf olt, %44, %cst_23 : f32
      %cst_24 = arith.constant 1.600000e+01 : f32
      %46 = arith.cmpf ogt, %44, %cst_24 : f32
      %47 = arith.ori %45, %46 : i1
      %cst_25 = arith.constant 0.000000e+00 : f32
      %cst_26 = arith.constant 1.500000e+01 : f32
      %48 = arith.maximumf %cst_25, %44 : f32
      %49 = arith.minimumf %cst_26, %48 : f32
      %50 = arith.fptosi %49 : f32 to i32
      %c14_i32_27 = arith.constant 14 : i32
      %51 = arith.minsi %50, %c14_i32_27 : i32
      %52 = arith.sitofp %51 : i32 to f32
      %53 = arith.subf %49, %52 : f32
      %c144_i32_28 = arith.constant 144 : i32
      %54 = arith.muli %51, %c144_i32_28 : i32
      %cst_29 = arith.constant 1.000000e+00 : f32
      %55 = arith.subf %cst_29, %53 : f32
      %cst_30 = arith.constant 1.000000e+00 : f32
      %56 = arith.mulf %cst_30, %23 : f32
      %57 = arith.addf %11, %56 : f32
      %cst_31 = arith.constant 5.000000e-01 : f32
      %58 = arith.mulf %cst_31, %23 : f32
      %cst_32 = arith.constant 2.000000e+00 : f32
      %59 = arith.divf %58, %cst_32 : f32
      %60 = arith.addf %57, %59 : f32
      %cst_33 = arith.constant -1.000000e+00 : f32
      %61 = arith.cmpf olt, %60, %cst_33 : f32
      %cst_34 = arith.constant 1.600000e+01 : f32
      %62 = arith.cmpf ogt, %60, %cst_34 : f32
      %63 = arith.ori %61, %62 : i1
      %cst_35 = arith.constant 0.000000e+00 : f32
      %cst_36 = arith.constant 1.500000e+01 : f32
      %64 = arith.maximumf %cst_35, %60 : f32
      %65 = arith.minimumf %cst_36, %64 : f32
      %66 = arith.fptosi %65 : f32 to i32
      %c14_i32_37 = arith.constant 14 : i32
      %67 = arith.minsi %66, %c14_i32_37 : i32
      %68 = arith.sitofp %67 : i32 to f32
      %69 = arith.subf %65, %68 : f32
      %c144_i32_38 = arith.constant 144 : i32
      %70 = arith.muli %67, %c144_i32_38 : i32
      %cst_39 = arith.constant 1.000000e+00 : f32
      %71 = arith.subf %cst_39, %69 : f32
      %cst_40 = arith.constant 1.000000e+00 : f32
      %72 = arith.mulf %cst_40, %23 : f32
      %73 = arith.addf %11, %72 : f32
      %cst_41 = arith.constant 1.500000e+00 : f32
      %74 = arith.mulf %cst_41, %23 : f32
      %cst_42 = arith.constant 2.000000e+00 : f32
      %75 = arith.divf %74, %cst_42 : f32
      %76 = arith.addf %73, %75 : f32
      %cst_43 = arith.constant -1.000000e+00 : f32
      %77 = arith.cmpf olt, %76, %cst_43 : f32
      %cst_44 = arith.constant 1.600000e+01 : f32
      %78 = arith.cmpf ogt, %76, %cst_44 : f32
      %79 = arith.ori %77, %78 : i1
      %cst_45 = arith.constant 0.000000e+00 : f32
      %cst_46 = arith.constant 1.500000e+01 : f32
      %80 = arith.maximumf %cst_45, %76 : f32
      %81 = arith.minimumf %cst_46, %80 : f32
      %82 = arith.fptosi %81 : f32 to i32
      %c14_i32_47 = arith.constant 14 : i32
      %83 = arith.minsi %82, %c14_i32_47 : i32
      %84 = arith.sitofp %83 : i32 to f32
      %85 = arith.subf %81, %84 : f32
      %c144_i32_48 = arith.constant 144 : i32
      %86 = arith.muli %83, %c144_i32_48 : i32
      %cst_49 = arith.constant 1.000000e+00 : f32
      %87 = arith.subf %cst_49, %85 : f32
      %cst_50 = arith.constant 2.000000e+00 : f32
      %88 = arith.mulf %cst_50, %23 : f32
      %89 = arith.addf %11, %88 : f32
      %cst_51 = arith.constant 5.000000e-01 : f32
      %90 = arith.mulf %cst_51, %23 : f32
      %cst_52 = arith.constant 2.000000e+00 : f32
      %91 = arith.divf %90, %cst_52 : f32
      %92 = arith.addf %89, %91 : f32
      %cst_53 = arith.constant -1.000000e+00 : f32
      %93 = arith.cmpf olt, %92, %cst_53 : f32
      %cst_54 = arith.constant 1.600000e+01 : f32
      %94 = arith.cmpf ogt, %92, %cst_54 : f32
      %95 = arith.ori %93, %94 : i1
      %cst_55 = arith.constant 0.000000e+00 : f32
      %cst_56 = arith.constant 1.500000e+01 : f32
      %96 = arith.maximumf %cst_55, %92 : f32
      %97 = arith.minimumf %cst_56, %96 : f32
      %98 = arith.fptosi %97 : f32 to i32
      %c14_i32_57 = arith.constant 14 : i32
      %99 = arith.minsi %98, %c14_i32_57 : i32
      %100 = arith.sitofp %99 : i32 to f32
      %101 = arith.subf %97, %100 : f32
      %c144_i32_58 = arith.constant 144 : i32
      %102 = arith.muli %99, %c144_i32_58 : i32
      %cst_59 = arith.constant 1.000000e+00 : f32
      %103 = arith.subf %cst_59, %101 : f32
      %cst_60 = arith.constant 2.000000e+00 : f32
      %104 = arith.mulf %cst_60, %23 : f32
      %105 = arith.addf %11, %104 : f32
      %cst_61 = arith.constant 1.500000e+00 : f32
      %106 = arith.mulf %cst_61, %23 : f32
      %cst_62 = arith.constant 2.000000e+00 : f32
      %107 = arith.divf %106, %cst_62 : f32
      %108 = arith.addf %105, %107 : f32
      %cst_63 = arith.constant -1.000000e+00 : f32
      %109 = arith.cmpf olt, %108, %cst_63 : f32
      %cst_64 = arith.constant 1.600000e+01 : f32
      %110 = arith.cmpf ogt, %108, %cst_64 : f32
      %111 = arith.ori %109, %110 : i1
      %cst_65 = arith.constant 0.000000e+00 : f32
      %cst_66 = arith.constant 1.500000e+01 : f32
      %112 = arith.maximumf %cst_65, %108 : f32
      %113 = arith.minimumf %cst_66, %112 : f32
      %114 = arith.fptosi %113 : f32 to i32
      %c14_i32_67 = arith.constant 14 : i32
      %115 = arith.minsi %114, %c14_i32_67 : i32
      %116 = arith.sitofp %115 : i32 to f32
      %117 = arith.subf %113, %116 : f32
      %c144_i32_68 = arith.constant 144 : i32
      %118 = arith.muli %115, %c144_i32_68 : i32
      %cst_69 = arith.constant 1.000000e+00 : f32
      %119 = arith.subf %cst_69, %117 : f32
      %cst_70 = arith.constant 0.000000e+00 : f32
      %120 = arith.mulf %cst_70, %22 : f32
      %121 = arith.addf %8, %120 : f32
      %cst_71 = arith.constant 5.000000e-01 : f32
      %122 = arith.mulf %cst_71, %22 : f32
      %cst_72 = arith.constant 2.000000e+00 : f32
      %123 = arith.divf %122, %cst_72 : f32
      %124 = arith.addf %121, %123 : f32
      %cst_73 = arith.constant -1.000000e+00 : f32
      %125 = arith.cmpf olt, %124, %cst_73 : f32
      %cst_74 = arith.constant 1.600000e+01 : f32
      %126 = arith.cmpf ogt, %124, %cst_74 : f32
      %127 = arith.ori %125, %126 : i1
      %cst_75 = arith.constant 0.000000e+00 : f32
      %cst_76 = arith.constant 1.500000e+01 : f32
      %128 = arith.maximumf %cst_75, %124 : f32
      %129 = arith.minimumf %cst_76, %128 : f32
      %130 = arith.fptosi %129 : f32 to i32
      %c14_i32_77 = arith.constant 14 : i32
      %131 = arith.minsi %130, %c14_i32_77 : i32
      %132 = arith.sitofp %131 : i32 to f32
      %133 = arith.subf %129, %132 : f32
      %cst_78 = arith.constant 1.000000e+00 : f32
      %134 = arith.subf %cst_78, %133 : f32
      %cst_79 = arith.constant 0.000000e+00 : f32
      %135 = arith.mulf %cst_79, %22 : f32
      %136 = arith.addf %8, %135 : f32
      %cst_80 = arith.constant 1.500000e+00 : f32
      %137 = arith.mulf %cst_80, %22 : f32
      %cst_81 = arith.constant 2.000000e+00 : f32
      %138 = arith.divf %137, %cst_81 : f32
      %139 = arith.addf %136, %138 : f32
      %cst_82 = arith.constant -1.000000e+00 : f32
      %140 = arith.cmpf olt, %139, %cst_82 : f32
      %cst_83 = arith.constant 1.600000e+01 : f32
      %141 = arith.cmpf ogt, %139, %cst_83 : f32
      %142 = arith.ori %140, %141 : i1
      %cst_84 = arith.constant 0.000000e+00 : f32
      %cst_85 = arith.constant 1.500000e+01 : f32
      %143 = arith.maximumf %cst_84, %139 : f32
      %144 = arith.minimumf %cst_85, %143 : f32
      %145 = arith.fptosi %144 : f32 to i32
      %c14_i32_86 = arith.constant 14 : i32
      %146 = arith.minsi %145, %c14_i32_86 : i32
      %147 = arith.sitofp %146 : i32 to f32
      %148 = arith.subf %144, %147 : f32
      %cst_87 = arith.constant 1.000000e+00 : f32
      %149 = arith.subf %cst_87, %148 : f32
      %cst_88 = arith.constant 1.000000e+00 : f32
      %150 = arith.mulf %cst_88, %22 : f32
      %151 = arith.addf %8, %150 : f32
      %cst_89 = arith.constant 5.000000e-01 : f32
      %152 = arith.mulf %cst_89, %22 : f32
      %cst_90 = arith.constant 2.000000e+00 : f32
      %153 = arith.divf %152, %cst_90 : f32
      %154 = arith.addf %151, %153 : f32
      %cst_91 = arith.constant -1.000000e+00 : f32
      %155 = arith.cmpf olt, %154, %cst_91 : f32
      %cst_92 = arith.constant 1.600000e+01 : f32
      %156 = arith.cmpf ogt, %154, %cst_92 : f32
      %157 = arith.ori %155, %156 : i1
      %cst_93 = arith.constant 0.000000e+00 : f32
      %cst_94 = arith.constant 1.500000e+01 : f32
      %158 = arith.maximumf %cst_93, %154 : f32
      %159 = arith.minimumf %cst_94, %158 : f32
      %160 = arith.fptosi %159 : f32 to i32
      %c14_i32_95 = arith.constant 14 : i32
      %161 = arith.minsi %160, %c14_i32_95 : i32
      %162 = arith.sitofp %161 : i32 to f32
      %163 = arith.subf %159, %162 : f32
      %cst_96 = arith.constant 1.000000e+00 : f32
      %164 = arith.subf %cst_96, %163 : f32
      %cst_97 = arith.constant 1.000000e+00 : f32
      %165 = arith.mulf %cst_97, %22 : f32
      %166 = arith.addf %8, %165 : f32
      %cst_98 = arith.constant 1.500000e+00 : f32
      %167 = arith.mulf %cst_98, %22 : f32
      %cst_99 = arith.constant 2.000000e+00 : f32
      %168 = arith.divf %167, %cst_99 : f32
      %169 = arith.addf %166, %168 : f32
      %cst_100 = arith.constant -1.000000e+00 : f32
      %170 = arith.cmpf olt, %169, %cst_100 : f32
      %cst_101 = arith.constant 1.600000e+01 : f32
      %171 = arith.cmpf ogt, %169, %cst_101 : f32
      %172 = arith.ori %170, %171 : i1
      %cst_102 = arith.constant 0.000000e+00 : f32
      %cst_103 = arith.constant 1.500000e+01 : f32
      %173 = arith.maximumf %cst_102, %169 : f32
      %174 = arith.minimumf %cst_103, %173 : f32
      %175 = arith.fptosi %174 : f32 to i32
      %c14_i32_104 = arith.constant 14 : i32
      %176 = arith.minsi %175, %c14_i32_104 : i32
      %177 = arith.sitofp %176 : i32 to f32
      %178 = arith.subf %174, %177 : f32
      %cst_105 = arith.constant 1.000000e+00 : f32
      %179 = arith.subf %cst_105, %178 : f32
      %cst_106 = arith.constant 2.000000e+00 : f32
      %180 = arith.mulf %cst_106, %22 : f32
      %181 = arith.addf %8, %180 : f32
      %cst_107 = arith.constant 5.000000e-01 : f32
      %182 = arith.mulf %cst_107, %22 : f32
      %cst_108 = arith.constant 2.000000e+00 : f32
      %183 = arith.divf %182, %cst_108 : f32
      %184 = arith.addf %181, %183 : f32
      %cst_109 = arith.constant -1.000000e+00 : f32
      %185 = arith.cmpf olt, %184, %cst_109 : f32
      %cst_110 = arith.constant 1.600000e+01 : f32
      %186 = arith.cmpf ogt, %184, %cst_110 : f32
      %187 = arith.ori %185, %186 : i1
      %cst_111 = arith.constant 0.000000e+00 : f32
      %cst_112 = arith.constant 1.500000e+01 : f32
      %188 = arith.maximumf %cst_111, %184 : f32
      %189 = arith.minimumf %cst_112, %188 : f32
      %190 = arith.fptosi %189 : f32 to i32
      %c14_i32_113 = arith.constant 14 : i32
      %191 = arith.minsi %190, %c14_i32_113 : i32
      %192 = arith.sitofp %191 : i32 to f32
      %193 = arith.subf %189, %192 : f32
      %cst_114 = arith.constant 1.000000e+00 : f32
      %194 = arith.subf %cst_114, %193 : f32
      %cst_115 = arith.constant 2.000000e+00 : f32
      %195 = arith.mulf %cst_115, %22 : f32
      %196 = arith.addf %8, %195 : f32
      %cst_116 = arith.constant 1.500000e+00 : f32
      %197 = arith.mulf %cst_116, %22 : f32
      %cst_117 = arith.constant 2.000000e+00 : f32
      %198 = arith.divf %197, %cst_117 : f32
      %199 = arith.addf %196, %198 : f32
      %cst_118 = arith.constant -1.000000e+00 : f32
      %200 = arith.cmpf olt, %199, %cst_118 : f32
      %cst_119 = arith.constant 1.600000e+01 : f32
      %201 = arith.cmpf ogt, %199, %cst_119 : f32
      %202 = arith.ori %200, %201 : i1
      %cst_120 = arith.constant 0.000000e+00 : f32
      %cst_121 = arith.constant 1.500000e+01 : f32
      %203 = arith.maximumf %cst_120, %199 : f32
      %204 = arith.minimumf %cst_121, %203 : f32
      %205 = arith.fptosi %204 : f32 to i32
      %c14_i32_122 = arith.constant 14 : i32
      %206 = arith.minsi %205, %c14_i32_122 : i32
      %207 = arith.sitofp %206 : i32 to f32
      %208 = arith.subf %204, %207 : f32
      %cst_123 = arith.constant 1.000000e+00 : f32
      %209 = arith.subf %cst_123, %208 : f32
      %c0_i32_124 = arith.constant 0 : i32
      %210 = arith.addi %38, %c0_i32_124 : i32
      %211 = arith.addi %210, %131 : i32
      %c0 = arith.constant 0 : index
      %212 = arith.index_cast %211 : i32 to index
      %c0_125 = arith.constant 0 : index
      %213 = vector.load %arg3[%c0, %212, %c0_125] : memref<1x2304x8xf32, #tpu.memory_space<vmem>>, vector<1x2x8xf32>
      %214 = vector.shape_cast %213 : vector<1x2x8xf32> to vector<2x8xf32>
      %c144_i32_126 = arith.constant 144 : i32
      %215 = arith.addi %211, %c144_i32_126 : i32
      %c0_127 = arith.constant 0 : index
      %216 = arith.index_cast %215 : i32 to index
      %c0_128 = arith.constant 0 : index
      %217 = vector.load %arg3[%c0_127, %216, %c0_128] : memref<1x2304x8xf32, #tpu.memory_space<vmem>>, vector<1x2x8xf32>
      %218 = vector.shape_cast %217 : vector<1x2x8xf32> to vector<2x8xf32>
      %219 = vector.extract_strided_slice %214 {offsets = [0, 0], sizes = [1, 8], strides = [1, 1]} : vector<2x8xf32> to vector<1x8xf32>
      %220 = vector.broadcast %134 : f32 to vector<1x8xf32>
      %221 = arith.mulf %220, %219 : vector<1x8xf32>
      %222 = vector.extract_strided_slice %214 {offsets = [1, 0], sizes = [1, 8], strides = [1, 1]} : vector<2x8xf32> to vector<1x8xf32>
      %223 = vector.broadcast %133 : f32 to vector<1x8xf32>
      %224 = arith.mulf %223, %222 : vector<1x8xf32>
      %225 = arith.addf %221, %224 : vector<1x8xf32>
      %226 = vector.extract_strided_slice %218 {offsets = [0, 0], sizes = [1, 8], strides = [1, 1]} : vector<2x8xf32> to vector<1x8xf32>
      %227 = vector.broadcast %134 : f32 to vector<1x8xf32>
      %228 = arith.mulf %227, %226 : vector<1x8xf32>
      %229 = vector.extract_strided_slice %218 {offsets = [1, 0], sizes = [1, 8], strides = [1, 1]} : vector<2x8xf32> to vector<1x8xf32>
      %230 = vector.broadcast %133 : f32 to vector<1x8xf32>
      %231 = arith.mulf %230, %229 : vector<1x8xf32>
      %232 = arith.addf %228, %231 : vector<1x8xf32>
      %233 = vector.broadcast %39 : f32 to vector<1x8xf32>
      %234 = arith.mulf %233, %225 : vector<1x8xf32>
      %235 = vector.broadcast %37 : f32 to vector<1x8xf32>
      %236 = arith.mulf %235, %232 : vector<1x8xf32>
      %237 = arith.addf %234, %236 : vector<1x8xf32>
      %238 = arith.ori %31, %127 : i1
      %cst_129 = arith.constant 0.000000e+00 : f32
      %239 = vector.broadcast %cst_129 : f32 to vector<1x8xf32>
      %240 = arith.select %238, %239, %237 : vector<1x8xf32>
      %241 = arith.maximumf %0, %240 : vector<1x8xf32>
      %242 = arith.addi %210, %146 : i32
      %c0_130 = arith.constant 0 : index
      %243 = arith.index_cast %242 : i32 to index
      %c0_131 = arith.constant 0 : index
      %244 = vector.load %arg3[%c0_130, %243, %c0_131] : memref<1x2304x8xf32, #tpu.memory_space<vmem>>, vector<1x2x8xf32>
      %245 = vector.shape_cast %244 : vector<1x2x8xf32> to vector<2x8xf32>
      %c144_i32_132 = arith.constant 144 : i32
      %246 = arith.addi %242, %c144_i32_132 : i32
      %c0_133 = arith.constant 0 : index
      %247 = arith.index_cast %246 : i32 to index
      %c0_134 = arith.constant 0 : index
      %248 = vector.load %arg3[%c0_133, %247, %c0_134] : memref<1x2304x8xf32, #tpu.memory_space<vmem>>, vector<1x2x8xf32>
      %249 = vector.shape_cast %248 : vector<1x2x8xf32> to vector<2x8xf32>
      %250 = vector.extract_strided_slice %245 {offsets = [0, 0], sizes = [1, 8], strides = [1, 1]} : vector<2x8xf32> to vector<1x8xf32>
      %251 = vector.broadcast %149 : f32 to vector<1x8xf32>
      %252 = arith.mulf %251, %250 : vector<1x8xf32>
      %253 = vector.extract_strided_slice %245 {offsets = [1, 0], sizes = [1, 8], strides = [1, 1]} : vector<2x8xf32> to vector<1x8xf32>
      %254 = vector.broadcast %148 : f32 to vector<1x8xf32>
      %255 = arith.mulf %254, %253 : vector<1x8xf32>
      %256 = arith.addf %252, %255 : vector<1x8xf32>
      %257 = vector.extract_strided_slice %249 {offsets = [0, 0], sizes = [1, 8], strides = [1, 1]} : vector<2x8xf32> to vector<1x8xf32>
      %258 = vector.broadcast %149 : f32 to vector<1x8xf32>
      %259 = arith.mulf %258, %257 : vector<1x8xf32>
      %260 = vector.extract_strided_slice %249 {offsets = [1, 0], sizes = [1, 8], strides = [1, 1]} : vector<2x8xf32> to vector<1x8xf32>
      %261 = vector.broadcast %148 : f32 to vector<1x8xf32>
      %262 = arith.mulf %261, %260 : vector<1x8xf32>
      %263 = arith.addf %259, %262 : vector<1x8xf32>
      %264 = vector.broadcast %39 : f32 to vector<1x8xf32>
      %265 = arith.mulf %264, %256 : vector<1x8xf32>
      %266 = vector.broadcast %37 : f32 to vector<1x8xf32>
      %267 = arith.mulf %266, %263 : vector<1x8xf32>
      %268 = arith.addf %265, %267 : vector<1x8xf32>
      %269 = arith.ori %31, %142 : i1
      %cst_135 = arith.constant 0.000000e+00 : f32
      %270 = vector.broadcast %cst_135 : f32 to vector<1x8xf32>
      %271 = arith.select %269, %270, %268 : vector<1x8xf32>
      %272 = arith.maximumf %241, %271 : vector<1x8xf32>
      %c0_i32_136 = arith.constant 0 : i32
      %273 = arith.addi %54, %c0_i32_136 : i32
      %274 = arith.addi %273, %131 : i32
      %c0_137 = arith.constant 0 : index
      %275 = arith.index_cast %274 : i32 to index
      %c0_138 = arith.constant 0 : index
      %276 = vector.load %arg3[%c0_137, %275, %c0_138] : memref<1x2304x8xf32, #tpu.memory_space<vmem>>, vector<1x2x8xf32>
      %277 = vector.shape_cast %276 : vector<1x2x8xf32> to vector<2x8xf32>
      %c144_i32_139 = arith.constant 144 : i32
      %278 = arith.addi %274, %c144_i32_139 : i32
      %c0_140 = arith.constant 0 : index
      %279 = arith.index_cast %278 : i32 to index
      %c0_141 = arith.constant 0 : index
      %280 = vector.load %arg3[%c0_140, %279, %c0_141] : memref<1x2304x8xf32, #tpu.memory_space<vmem>>, vector<1x2x8xf32>
      %281 = vector.shape_cast %280 : vector<1x2x8xf32> to vector<2x8xf32>
      %282 = vector.extract_strided_slice %277 {offsets = [0, 0], sizes = [1, 8], strides = [1, 1]} : vector<2x8xf32> to vector<1x8xf32>
      %283 = vector.broadcast %134 : f32 to vector<1x8xf32>
      %284 = arith.mulf %283, %282 : vector<1x8xf32>
      %285 = vector.extract_strided_slice %277 {offsets = [1, 0], sizes = [1, 8], strides = [1, 1]} : vector<2x8xf32> to vector<1x8xf32>
      %286 = vector.broadcast %133 : f32 to vector<1x8xf32>
      %287 = arith.mulf %286, %285 : vector<1x8xf32>
      %288 = arith.addf %284, %287 : vector<1x8xf32>
      %289 = vector.extract_strided_slice %281 {offsets = [0, 0], sizes = [1, 8], strides = [1, 1]} : vector<2x8xf32> to vector<1x8xf32>
      %290 = vector.broadcast %134 : f32 to vector<1x8xf32>
      %291 = arith.mulf %290, %289 : vector<1x8xf32>
      %292 = vector.extract_strided_slice %281 {offsets = [1, 0], sizes = [1, 8], strides = [1, 1]} : vector<2x8xf32> to vector<1x8xf32>
      %293 = vector.broadcast %133 : f32 to vector<1x8xf32>
      %294 = arith.mulf %293, %292 : vector<1x8xf32>
      %295 = arith.addf %291, %294 : vector<1x8xf32>
      %296 = vector.broadcast %55 : f32 to vector<1x8xf32>
      %297 = arith.mulf %296, %288 : vector<1x8xf32>
      %298 = vector.broadcast %53 : f32 to vector<1x8xf32>
      %299 = arith.mulf %298, %295 : vector<1x8xf32>
      %300 = arith.addf %297, %299 : vector<1x8xf32>
      %301 = arith.ori %47, %127 : i1
      %cst_142 = arith.constant 0.000000e+00 : f32
      %302 = vector.broadcast %cst_142 : f32 to vector<1x8xf32>
      %303 = arith.select %301, %302, %300 : vector<1x8xf32>
      %304 = arith.maximumf %272, %303 : vector<1x8xf32>
      %305 = arith.addi %273, %146 : i32
      %c0_143 = arith.constant 0 : index
      %306 = arith.index_cast %305 : i32 to index
      %c0_144 = arith.constant 0 : index
      %307 = vector.load %arg3[%c0_143, %306, %c0_144] : memref<1x2304x8xf32, #tpu.memory_space<vmem>>, vector<1x2x8xf32>
      %308 = vector.shape_cast %307 : vector<1x2x8xf32> to vector<2x8xf32>
      %c144_i32_145 = arith.constant 144 : i32
      %309 = arith.addi %305, %c144_i32_145 : i32
      %c0_146 = arith.constant 0 : index
      %310 = arith.index_cast %309 : i32 to index
      %c0_147 = arith.constant 0 : index
      %311 = vector.load %arg3[%c0_146, %310, %c0_147] : memref<1x2304x8xf32, #tpu.memory_space<vmem>>, vector<1x2x8xf32>
      %312 = vector.shape_cast %311 : vector<1x2x8xf32> to vector<2x8xf32>
      %313 = vector.extract_strided_slice %308 {offsets = [0, 0], sizes = [1, 8], strides = [1, 1]} : vector<2x8xf32> to vector<1x8xf32>
      %314 = vector.broadcast %149 : f32 to vector<1x8xf32>
      %315 = arith.mulf %314, %313 : vector<1x8xf32>
      %316 = vector.extract_strided_slice %308 {offsets = [1, 0], sizes = [1, 8], strides = [1, 1]} : vector<2x8xf32> to vector<1x8xf32>
      %317 = vector.broadcast %148 : f32 to vector<1x8xf32>
      %318 = arith.mulf %317, %316 : vector<1x8xf32>
      %319 = arith.addf %315, %318 : vector<1x8xf32>
      %320 = vector.extract_strided_slice %312 {offsets = [0, 0], sizes = [1, 8], strides = [1, 1]} : vector<2x8xf32> to vector<1x8xf32>
      %321 = vector.broadcast %149 : f32 to vector<1x8xf32>
      %322 = arith.mulf %321, %320 : vector<1x8xf32>
      %323 = vector.extract_strided_slice %312 {offsets = [1, 0], sizes = [1, 8], strides = [1, 1]} : vector<2x8xf32> to vector<1x8xf32>
      %324 = vector.broadcast %148 : f32 to vector<1x8xf32>
      %325 = arith.mulf %324, %323 : vector<1x8xf32>
      %326 = arith.addf %322, %325 : vector<1x8xf32>
      %327 = vector.broadcast %55 : f32 to vector<1x8xf32>
      %328 = arith.mulf %327, %319 : vector<1x8xf32>
      %329 = vector.broadcast %53 : f32 to vector<1x8xf32>
      %330 = arith.mulf %329, %326 : vector<1x8xf32>
      %331 = arith.addf %328, %330 : vector<1x8xf32>
      %332 = arith.ori %47, %142 : i1
      %cst_148 = arith.constant 0.000000e+00 : f32
      %333 = vector.broadcast %cst_148 : f32 to vector<1x8xf32>
      %334 = arith.select %332, %333, %331 : vector<1x8xf32>
      %335 = arith.maximumf %304, %334 : vector<1x8xf32>
      %c16_i32 = arith.constant 16 : i32
      %336 = arith.addi %38, %c16_i32 : i32
      %337 = arith.addi %336, %161 : i32
      %c0_149 = arith.constant 0 : index
      %338 = arith.index_cast %337 : i32 to index
      %c0_150 = arith.constant 0 : index
      %339 = vector.load %arg3[%c0_149, %338, %c0_150] : memref<1x2304x8xf32, #tpu.memory_space<vmem>>, vector<1x2x8xf32>
      %340 = vector.shape_cast %339 : vector<1x2x8xf32> to vector<2x8xf32>
      %c144_i32_151 = arith.constant 144 : i32
      %341 = arith.addi %337, %c144_i32_151 : i32
      %c0_152 = arith.constant 0 : index
      %342 = arith.index_cast %341 : i32 to index
      %c0_153 = arith.constant 0 : index
      %343 = vector.load %arg3[%c0_152, %342, %c0_153] : memref<1x2304x8xf32, #tpu.memory_space<vmem>>, vector<1x2x8xf32>
      %344 = vector.shape_cast %343 : vector<1x2x8xf32> to vector<2x8xf32>
      %345 = vector.extract_strided_slice %340 {offsets = [0, 0], sizes = [1, 8], strides = [1, 1]} : vector<2x8xf32> to vector<1x8xf32>
      %346 = vector.broadcast %164 : f32 to vector<1x8xf32>
      %347 = arith.mulf %346, %345 : vector<1x8xf32>
      %348 = vector.extract_strided_slice %340 {offsets = [1, 0], sizes = [1, 8], strides = [1, 1]} : vector<2x8xf32> to vector<1x8xf32>
      %349 = vector.broadcast %163 : f32 to vector<1x8xf32>
      %350 = arith.mulf %349, %348 : vector<1x8xf32>
      %351 = arith.addf %347, %350 : vector<1x8xf32>
      %352 = vector.extract_strided_slice %344 {offsets = [0, 0], sizes = [1, 8], strides = [1, 1]} : vector<2x8xf32> to vector<1x8xf32>
      %353 = vector.broadcast %164 : f32 to vector<1x8xf32>
      %354 = arith.mulf %353, %352 : vector<1x8xf32>
      %355 = vector.extract_strided_slice %344 {offsets = [1, 0], sizes = [1, 8], strides = [1, 1]} : vector<2x8xf32> to vector<1x8xf32>
      %356 = vector.broadcast %163 : f32 to vector<1x8xf32>
      %357 = arith.mulf %356, %355 : vector<1x8xf32>
      %358 = arith.addf %354, %357 : vector<1x8xf32>
      %359 = vector.broadcast %39 : f32 to vector<1x8xf32>
      %360 = arith.mulf %359, %351 : vector<1x8xf32>
      %361 = vector.broadcast %37 : f32 to vector<1x8xf32>
      %362 = arith.mulf %361, %358 : vector<1x8xf32>
      %363 = arith.addf %360, %362 : vector<1x8xf32>
      %364 = arith.ori %31, %157 : i1
      %cst_154 = arith.constant 0.000000e+00 : f32
      %365 = vector.broadcast %cst_154 : f32 to vector<1x8xf32>
      %366 = arith.select %364, %365, %363 : vector<1x8xf32>
      %367 = arith.maximumf %0, %366 : vector<1x8xf32>
      %368 = arith.addi %336, %176 : i32
      %c0_155 = arith.constant 0 : index
      %369 = arith.index_cast %368 : i32 to index
      %c0_156 = arith.constant 0 : index
      %370 = vector.load %arg3[%c0_155, %369, %c0_156] : memref<1x2304x8xf32, #tpu.memory_space<vmem>>, vector<1x2x8xf32>
      %371 = vector.shape_cast %370 : vector<1x2x8xf32> to vector<2x8xf32>
      %c144_i32_157 = arith.constant 144 : i32
      %372 = arith.addi %368, %c144_i32_157 : i32
      %c0_158 = arith.constant 0 : index
      %373 = arith.index_cast %372 : i32 to index
      %c0_159 = arith.constant 0 : index
      %374 = vector.load %arg3[%c0_158, %373, %c0_159] : memref<1x2304x8xf32, #tpu.memory_space<vmem>>, vector<1x2x8xf32>
      %375 = vector.shape_cast %374 : vector<1x2x8xf32> to vector<2x8xf32>
      %376 = vector.extract_strided_slice %371 {offsets = [0, 0], sizes = [1, 8], strides = [1, 1]} : vector<2x8xf32> to vector<1x8xf32>
      %377 = vector.broadcast %179 : f32 to vector<1x8xf32>
      %378 = arith.mulf %377, %376 : vector<1x8xf32>
      %379 = vector.extract_strided_slice %371 {offsets = [1, 0], sizes = [1, 8], strides = [1, 1]} : vector<2x8xf32> to vector<1x8xf32>
      %380 = vector.broadcast %178 : f32 to vector<1x8xf32>
      %381 = arith.mulf %380, %379 : vector<1x8xf32>
      %382 = arith.addf %378, %381 : vector<1x8xf32>
      %383 = vector.extract_strided_slice %375 {offsets = [0, 0], sizes = [1, 8], strides = [1, 1]} : vector<2x8xf32> to vector<1x8xf32>
      %384 = vector.broadcast %179 : f32 to vector<1x8xf32>
      %385 = arith.mulf %384, %383 : vector<1x8xf32>
      %386 = vector.extract_strided_slice %375 {offsets = [1, 0], sizes = [1, 8], strides = [1, 1]} : vector<2x8xf32> to vector<1x8xf32>
      %387 = vector.broadcast %178 : f32 to vector<1x8xf32>
      %388 = arith.mulf %387, %386 : vector<1x8xf32>
      %389 = arith.addf %385, %388 : vector<1x8xf32>
      %390 = vector.broadcast %39 : f32 to vector<1x8xf32>
      %391 = arith.mulf %390, %382 : vector<1x8xf32>
      %392 = vector.broadcast %37 : f32 to vector<1x8xf32>
      %393 = arith.mulf %392, %389 : vector<1x8xf32>
      %394 = arith.addf %391, %393 : vector<1x8xf32>
      %395 = arith.ori %31, %172 : i1
      %cst_160 = arith.constant 0.000000e+00 : f32
      %396 = vector.broadcast %cst_160 : f32 to vector<1x8xf32>
      %397 = arith.select %395, %396, %394 : vector<1x8xf32>
      %398 = arith.maximumf %367, %397 : vector<1x8xf32>
      %c16_i32_161 = arith.constant 16 : i32
      %399 = arith.addi %54, %c16_i32_161 : i32
      %400 = arith.addi %399, %161 : i32
      %c0_162 = arith.constant 0 : index
      %401 = arith.index_cast %400 : i32 to index
      %c0_163 = arith.constant 0 : index
      %402 = vector.load %arg3[%c0_162, %401, %c0_163] : memref<1x2304x8xf32, #tpu.memory_space<vmem>>, vector<1x2x8xf32>
      %403 = vector.shape_cast %402 : vector<1x2x8xf32> to vector<2x8xf32>
      %c144_i32_164 = arith.constant 144 : i32
      %404 = arith.addi %400, %c144_i32_164 : i32
      %c0_165 = arith.constant 0 : index
      %405 = arith.index_cast %404 : i32 to index
      %c0_166 = arith.constant 0 : index
      %406 = vector.load %arg3[%c0_165, %405, %c0_166] : memref<1x2304x8xf32, #tpu.memory_space<vmem>>, vector<1x2x8xf32>
      %407 = vector.shape_cast %406 : vector<1x2x8xf32> to vector<2x8xf32>
      %408 = vector.extract_strided_slice %403 {offsets = [0, 0], sizes = [1, 8], strides = [1, 1]} : vector<2x8xf32> to vector<1x8xf32>
      %409 = vector.broadcast %164 : f32 to vector<1x8xf32>
      %410 = arith.mulf %409, %408 : vector<1x8xf32>
      %411 = vector.extract_strided_slice %403 {offsets = [1, 0], sizes = [1, 8], strides = [1, 1]} : vector<2x8xf32> to vector<1x8xf32>
      %412 = vector.broadcast %163 : f32 to vector<1x8xf32>
      %413 = arith.mulf %412, %411 : vector<1x8xf32>
      %414 = arith.addf %410, %413 : vector<1x8xf32>
      %415 = vector.extract_strided_slice %407 {offsets = [0, 0], sizes = [1, 8], strides = [1, 1]} : vector<2x8xf32> to vector<1x8xf32>
      %416 = vector.broadcast %164 : f32 to vector<1x8xf32>
      %417 = arith.mulf %416, %415 : vector<1x8xf32>
      %418 = vector.extract_strided_slice %407 {offsets = [1, 0], sizes = [1, 8], strides = [1, 1]} : vector<2x8xf32> to vector<1x8xf32>
      %419 = vector.broadcast %163 : f32 to vector<1x8xf32>
      %420 = arith.mulf %419, %418 : vector<1x8xf32>
      %421 = arith.addf %417, %420 : vector<1x8xf32>
      %422 = vector.broadcast %55 : f32 to vector<1x8xf32>
      %423 = arith.mulf %422, %414 : vector<1x8xf32>
      %424 = vector.broadcast %53 : f32 to vector<1x8xf32>
      %425 = arith.mulf %424, %421 : vector<1x8xf32>
      %426 = arith.addf %423, %425 : vector<1x8xf32>
      %427 = arith.ori %47, %157 : i1
      %cst_167 = arith.constant 0.000000e+00 : f32
      %428 = vector.broadcast %cst_167 : f32 to vector<1x8xf32>
      %429 = arith.select %427, %428, %426 : vector<1x8xf32>
      %430 = arith.maximumf %398, %429 : vector<1x8xf32>
      %431 = arith.addi %399, %176 : i32
      %c0_168 = arith.constant 0 : index
      %432 = arith.index_cast %431 : i32 to index
      %c0_169 = arith.constant 0 : index
      %433 = vector.load %arg3[%c0_168, %432, %c0_169] : memref<1x2304x8xf32, #tpu.memory_space<vmem>>, vector<1x2x8xf32>
      %434 = vector.shape_cast %433 : vector<1x2x8xf32> to vector<2x8xf32>
      %c144_i32_170 = arith.constant 144 : i32
      %435 = arith.addi %431, %c144_i32_170 : i32
      %c0_171 = arith.constant 0 : index
      %436 = arith.index_cast %435 : i32 to index
      %c0_172 = arith.constant 0 : index
      %437 = vector.load %arg3[%c0_171, %436, %c0_172] : memref<1x2304x8xf32, #tpu.memory_space<vmem>>, vector<1x2x8xf32>
      %438 = vector.shape_cast %437 : vector<1x2x8xf32> to vector<2x8xf32>
      %439 = vector.extract_strided_slice %434 {offsets = [0, 0], sizes = [1, 8], strides = [1, 1]} : vector<2x8xf32> to vector<1x8xf32>
      %440 = vector.broadcast %179 : f32 to vector<1x8xf32>
      %441 = arith.mulf %440, %439 : vector<1x8xf32>
      %442 = vector.extract_strided_slice %434 {offsets = [1, 0], sizes = [1, 8], strides = [1, 1]} : vector<2x8xf32> to vector<1x8xf32>
      %443 = vector.broadcast %178 : f32 to vector<1x8xf32>
      %444 = arith.mulf %443, %442 : vector<1x8xf32>
      %445 = arith.addf %441, %444 : vector<1x8xf32>
      %446 = vector.extract_strided_slice %438 {offsets = [0, 0], sizes = [1, 8], strides = [1, 1]} : vector<2x8xf32> to vector<1x8xf32>
      %447 = vector.broadcast %179 : f32 to vector<1x8xf32>
      %448 = arith.mulf %447, %446 : vector<1x8xf32>
      %449 = vector.extract_strided_slice %438 {offsets = [1, 0], sizes = [1, 8], strides = [1, 1]} : vector<2x8xf32> to vector<1x8xf32>
      %450 = vector.broadcast %178 : f32 to vector<1x8xf32>
      %451 = arith.mulf %450, %449 : vector<1x8xf32>
      %452 = arith.addf %448, %451 : vector<1x8xf32>
      %453 = vector.broadcast %55 : f32 to vector<1x8xf32>
      %454 = arith.mulf %453, %445 : vector<1x8xf32>
      %455 = vector.broadcast %53 : f32 to vector<1x8xf32>
      %456 = arith.mulf %455, %452 : vector<1x8xf32>
      %457 = arith.addf %454, %456 : vector<1x8xf32>
      %458 = arith.ori %47, %172 : i1
      %cst_173 = arith.constant 0.000000e+00 : f32
      %459 = vector.broadcast %cst_173 : f32 to vector<1x8xf32>
      %460 = arith.select %458, %459, %457 : vector<1x8xf32>
      %461 = arith.maximumf %430, %460 : vector<1x8xf32>
      %c32_i32 = arith.constant 32 : i32
      %462 = arith.addi %38, %c32_i32 : i32
      %463 = arith.addi %462, %191 : i32
      %c0_174 = arith.constant 0 : index
      %464 = arith.index_cast %463 : i32 to index
      %c0_175 = arith.constant 0 : index
      %465 = vector.load %arg3[%c0_174, %464, %c0_175] : memref<1x2304x8xf32, #tpu.memory_space<vmem>>, vector<1x2x8xf32>
      %466 = vector.shape_cast %465 : vector<1x2x8xf32> to vector<2x8xf32>
      %c144_i32_176 = arith.constant 144 : i32
      %467 = arith.addi %463, %c144_i32_176 : i32
      %c0_177 = arith.constant 0 : index
      %468 = arith.index_cast %467 : i32 to index
      %c0_178 = arith.constant 0 : index
      %469 = vector.load %arg3[%c0_177, %468, %c0_178] : memref<1x2304x8xf32, #tpu.memory_space<vmem>>, vector<1x2x8xf32>
      %470 = vector.shape_cast %469 : vector<1x2x8xf32> to vector<2x8xf32>
      %471 = vector.extract_strided_slice %466 {offsets = [0, 0], sizes = [1, 8], strides = [1, 1]} : vector<2x8xf32> to vector<1x8xf32>
      %472 = vector.broadcast %194 : f32 to vector<1x8xf32>
      %473 = arith.mulf %472, %471 : vector<1x8xf32>
      %474 = vector.extract_strided_slice %466 {offsets = [1, 0], sizes = [1, 8], strides = [1, 1]} : vector<2x8xf32> to vector<1x8xf32>
      %475 = vector.broadcast %193 : f32 to vector<1x8xf32>
      %476 = arith.mulf %475, %474 : vector<1x8xf32>
      %477 = arith.addf %473, %476 : vector<1x8xf32>
      %478 = vector.extract_strided_slice %470 {offsets = [0, 0], sizes = [1, 8], strides = [1, 1]} : vector<2x8xf32> to vector<1x8xf32>
      %479 = vector.broadcast %194 : f32 to vector<1x8xf32>
      %480 = arith.mulf %479, %478 : vector<1x8xf32>
      %481 = vector.extract_strided_slice %470 {offsets = [1, 0], sizes = [1, 8], strides = [1, 1]} : vector<2x8xf32> to vector<1x8xf32>
      %482 = vector.broadcast %193 : f32 to vector<1x8xf32>
      %483 = arith.mulf %482, %481 : vector<1x8xf32>
      %484 = arith.addf %480, %483 : vector<1x8xf32>
      %485 = vector.broadcast %39 : f32 to vector<1x8xf32>
      %486 = arith.mulf %485, %477 : vector<1x8xf32>
      %487 = vector.broadcast %37 : f32 to vector<1x8xf32>
      %488 = arith.mulf %487, %484 : vector<1x8xf32>
      %489 = arith.addf %486, %488 : vector<1x8xf32>
      %490 = arith.ori %31, %187 : i1
      %cst_179 = arith.constant 0.000000e+00 : f32
      %491 = vector.broadcast %cst_179 : f32 to vector<1x8xf32>
      %492 = arith.select %490, %491, %489 : vector<1x8xf32>
      %493 = arith.maximumf %0, %492 : vector<1x8xf32>
      %494 = arith.addi %462, %206 : i32
      %c0_180 = arith.constant 0 : index
      %495 = arith.index_cast %494 : i32 to index
      %c0_181 = arith.constant 0 : index
      %496 = vector.load %arg3[%c0_180, %495, %c0_181] : memref<1x2304x8xf32, #tpu.memory_space<vmem>>, vector<1x2x8xf32>
      %497 = vector.shape_cast %496 : vector<1x2x8xf32> to vector<2x8xf32>
      %c144_i32_182 = arith.constant 144 : i32
      %498 = arith.addi %494, %c144_i32_182 : i32
      %c0_183 = arith.constant 0 : index
      %499 = arith.index_cast %498 : i32 to index
      %c0_184 = arith.constant 0 : index
      %500 = vector.load %arg3[%c0_183, %499, %c0_184] : memref<1x2304x8xf32, #tpu.memory_space<vmem>>, vector<1x2x8xf32>
      %501 = vector.shape_cast %500 : vector<1x2x8xf32> to vector<2x8xf32>
      %502 = vector.extract_strided_slice %497 {offsets = [0, 0], sizes = [1, 8], strides = [1, 1]} : vector<2x8xf32> to vector<1x8xf32>
      %503 = vector.broadcast %209 : f32 to vector<1x8xf32>
      %504 = arith.mulf %503, %502 : vector<1x8xf32>
      %505 = vector.extract_strided_slice %497 {offsets = [1, 0], sizes = [1, 8], strides = [1, 1]} : vector<2x8xf32> to vector<1x8xf32>
      %506 = vector.broadcast %208 : f32 to vector<1x8xf32>
      %507 = arith.mulf %506, %505 : vector<1x8xf32>
      %508 = arith.addf %504, %507 : vector<1x8xf32>
      %509 = vector.extract_strided_slice %501 {offsets = [0, 0], sizes = [1, 8], strides = [1, 1]} : vector<2x8xf32> to vector<1x8xf32>
      %510 = vector.broadcast %209 : f32 to vector<1x8xf32>
      %511 = arith.mulf %510, %509 : vector<1x8xf32>
      %512 = vector.extract_strided_slice %501 {offsets = [1, 0], sizes = [1, 8], strides = [1, 1]} : vector<2x8xf32> to vector<1x8xf32>
      %513 = vector.broadcast %208 : f32 to vector<1x8xf32>
      %514 = arith.mulf %513, %512 : vector<1x8xf32>
      %515 = arith.addf %511, %514 : vector<1x8xf32>
      %516 = vector.broadcast %39 : f32 to vector<1x8xf32>
      %517 = arith.mulf %516, %508 : vector<1x8xf32>
      %518 = vector.broadcast %37 : f32 to vector<1x8xf32>
      %519 = arith.mulf %518, %515 : vector<1x8xf32>
      %520 = arith.addf %517, %519 : vector<1x8xf32>
      %521 = arith.ori %31, %202 : i1
      %cst_185 = arith.constant 0.000000e+00 : f32
      %522 = vector.broadcast %cst_185 : f32 to vector<1x8xf32>
      %523 = arith.select %521, %522, %520 : vector<1x8xf32>
      %524 = arith.maximumf %493, %523 : vector<1x8xf32>
      %c32_i32_186 = arith.constant 32 : i32
      %525 = arith.addi %54, %c32_i32_186 : i32
      %526 = arith.addi %525, %191 : i32
      %c0_187 = arith.constant 0 : index
      %527 = arith.index_cast %526 : i32 to index
      %c0_188 = arith.constant 0 : index
      %528 = vector.load %arg3[%c0_187, %527, %c0_188] : memref<1x2304x8xf32, #tpu.memory_space<vmem>>, vector<1x2x8xf32>
      %529 = vector.shape_cast %528 : vector<1x2x8xf32> to vector<2x8xf32>
      %c144_i32_189 = arith.constant 144 : i32
      %530 = arith.addi %526, %c144_i32_189 : i32
      %c0_190 = arith.constant 0 : index
      %531 = arith.index_cast %530 : i32 to index
      %c0_191 = arith.constant 0 : index
      %532 = vector.load %arg3[%c0_190, %531, %c0_191] : memref<1x2304x8xf32, #tpu.memory_space<vmem>>, vector<1x2x8xf32>
      %533 = vector.shape_cast %532 : vector<1x2x8xf32> to vector<2x8xf32>
      %534 = vector.extract_strided_slice %529 {offsets = [0, 0], sizes = [1, 8], strides = [1, 1]} : vector<2x8xf32> to vector<1x8xf32>
      %535 = vector.broadcast %194 : f32 to vector<1x8xf32>
      %536 = arith.mulf %535, %534 : vector<1x8xf32>
      %537 = vector.extract_strided_slice %529 {offsets = [1, 0], sizes = [1, 8], strides = [1, 1]} : vector<2x8xf32> to vector<1x8xf32>
      %538 = vector.broadcast %193 : f32 to vector<1x8xf32>
      %539 = arith.mulf %538, %537 : vector<1x8xf32>
      %540 = arith.addf %536, %539 : vector<1x8xf32>
      %541 = vector.extract_strided_slice %533 {offsets = [0, 0], sizes = [1, 8], strides = [1, 1]} : vector<2x8xf32> to vector<1x8xf32>
      %542 = vector.broadcast %194 : f32 to vector<1x8xf32>
      %543 = arith.mulf %542, %541 : vector<1x8xf32>
      %544 = vector.extract_strided_slice %533 {offsets = [1, 0], sizes = [1, 8], strides = [1, 1]} : vector<2x8xf32> to vector<1x8xf32>
      %545 = vector.broadcast %193 : f32 to vector<1x8xf32>
      %546 = arith.mulf %545, %544 : vector<1x8xf32>
      %547 = arith.addf %543, %546 : vector<1x8xf32>
      %548 = vector.broadcast %55 : f32 to vector<1x8xf32>
      %549 = arith.mulf %548, %540 : vector<1x8xf32>
      %550 = vector.broadcast %53 : f32 to vector<1x8xf32>
      %551 = arith.mulf %550, %547 : vector<1x8xf32>
      %552 = arith.addf %549, %551 : vector<1x8xf32>
      %553 = arith.ori %47, %187 : i1
      %cst_192 = arith.constant 0.000000e+00 : f32
      %554 = vector.broadcast %cst_192 : f32 to vector<1x8xf32>
      %555 = arith.select %553, %554, %552 : vector<1x8xf32>
      %556 = arith.maximumf %524, %555 : vector<1x8xf32>
      %557 = arith.addi %525, %206 : i32
      %c0_193 = arith.constant 0 : index
      %558 = arith.index_cast %557 : i32 to index
      %c0_194 = arith.constant 0 : index
      %559 = vector.load %arg3[%c0_193, %558, %c0_194] : memref<1x2304x8xf32, #tpu.memory_space<vmem>>, vector<1x2x8xf32>
      %560 = vector.shape_cast %559 : vector<1x2x8xf32> to vector<2x8xf32>
      %c144_i32_195 = arith.constant 144 : i32
      %561 = arith.addi %557, %c144_i32_195 : i32
      %c0_196 = arith.constant 0 : index
      %562 = arith.index_cast %561 : i32 to index
      %c0_197 = arith.constant 0 : index
      %563 = vector.load %arg3[%c0_196, %562, %c0_197] : memref<1x2304x8xf32, #tpu.memory_space<vmem>>, vector<1x2x8xf32>
      %564 = vector.shape_cast %563 : vector<1x2x8xf32> to vector<2x8xf32>
      %565 = vector.extract_strided_slice %560 {offsets = [0, 0], sizes = [1, 8], strides = [1, 1]} : vector<2x8xf32> to vector<1x8xf32>
      %566 = vector.broadcast %209 : f32 to vector<1x8xf32>
      %567 = arith.mulf %566, %565 : vector<1x8xf32>
      %568 = vector.extract_strided_slice %560 {offsets = [1, 0], sizes = [1, 8], strides = [1, 1]} : vector<2x8xf32> to vector<1x8xf32>
      %569 = vector.broadcast %208 : f32 to vector<1x8xf32>
      %570 = arith.mulf %569, %568 : vector<1x8xf32>
      %571 = arith.addf %567, %570 : vector<1x8xf32>
      %572 = vector.extract_strided_slice %564 {offsets = [0, 0], sizes = [1, 8], strides = [1, 1]} : vector<2x8xf32> to vector<1x8xf32>
      %573 = vector.broadcast %209 : f32 to vector<1x8xf32>
      %574 = arith.mulf %573, %572 : vector<1x8xf32>
      %575 = vector.extract_strided_slice %564 {offsets = [1, 0], sizes = [1, 8], strides = [1, 1]} : vector<2x8xf32> to vector<1x8xf32>
      %576 = vector.broadcast %208 : f32 to vector<1x8xf32>
      %577 = arith.mulf %576, %575 : vector<1x8xf32>
      %578 = arith.addf %574, %577 : vector<1x8xf32>
      %579 = vector.broadcast %55 : f32 to vector<1x8xf32>
      %580 = arith.mulf %579, %571 : vector<1x8xf32>
      %581 = vector.broadcast %53 : f32 to vector<1x8xf32>
      %582 = arith.mulf %581, %578 : vector<1x8xf32>
      %583 = arith.addf %580, %582 : vector<1x8xf32>
      %584 = arith.ori %47, %202 : i1
      %cst_198 = arith.constant 0.000000e+00 : f32
      %585 = vector.broadcast %cst_198 : f32 to vector<1x8xf32>
      %586 = arith.select %584, %585, %583 : vector<1x8xf32>
      %587 = arith.maximumf %556, %586 : vector<1x8xf32>
      %c48_i32 = arith.constant 48 : i32
      %588 = arith.addi %70, %c48_i32 : i32
      %589 = arith.addi %588, %131 : i32
      %c0_199 = arith.constant 0 : index
      %590 = arith.index_cast %589 : i32 to index
      %c0_200 = arith.constant 0 : index
      %591 = vector.load %arg3[%c0_199, %590, %c0_200] : memref<1x2304x8xf32, #tpu.memory_space<vmem>>, vector<1x2x8xf32>
      %592 = vector.shape_cast %591 : vector<1x2x8xf32> to vector<2x8xf32>
      %c144_i32_201 = arith.constant 144 : i32
      %593 = arith.addi %589, %c144_i32_201 : i32
      %c0_202 = arith.constant 0 : index
      %594 = arith.index_cast %593 : i32 to index
      %c0_203 = arith.constant 0 : index
      %595 = vector.load %arg3[%c0_202, %594, %c0_203] : memref<1x2304x8xf32, #tpu.memory_space<vmem>>, vector<1x2x8xf32>
      %596 = vector.shape_cast %595 : vector<1x2x8xf32> to vector<2x8xf32>
      %597 = vector.extract_strided_slice %592 {offsets = [0, 0], sizes = [1, 8], strides = [1, 1]} : vector<2x8xf32> to vector<1x8xf32>
      %598 = vector.broadcast %134 : f32 to vector<1x8xf32>
      %599 = arith.mulf %598, %597 : vector<1x8xf32>
      %600 = vector.extract_strided_slice %592 {offsets = [1, 0], sizes = [1, 8], strides = [1, 1]} : vector<2x8xf32> to vector<1x8xf32>
      %601 = vector.broadcast %133 : f32 to vector<1x8xf32>
      %602 = arith.mulf %601, %600 : vector<1x8xf32>
      %603 = arith.addf %599, %602 : vector<1x8xf32>
      %604 = vector.extract_strided_slice %596 {offsets = [0, 0], sizes = [1, 8], strides = [1, 1]} : vector<2x8xf32> to vector<1x8xf32>
      %605 = vector.broadcast %134 : f32 to vector<1x8xf32>
      %606 = arith.mulf %605, %604 : vector<1x8xf32>
      %607 = vector.extract_strided_slice %596 {offsets = [1, 0], sizes = [1, 8], strides = [1, 1]} : vector<2x8xf32> to vector<1x8xf32>
      %608 = vector.broadcast %133 : f32 to vector<1x8xf32>
      %609 = arith.mulf %608, %607 : vector<1x8xf32>
      %610 = arith.addf %606, %609 : vector<1x8xf32>
      %611 = vector.broadcast %71 : f32 to vector<1x8xf32>
      %612 = arith.mulf %611, %603 : vector<1x8xf32>
      %613 = vector.broadcast %69 : f32 to vector<1x8xf32>
      %614 = arith.mulf %613, %610 : vector<1x8xf32>
      %615 = arith.addf %612, %614 : vector<1x8xf32>
      %616 = arith.ori %63, %127 : i1
      %cst_204 = arith.constant 0.000000e+00 : f32
      %617 = vector.broadcast %cst_204 : f32 to vector<1x8xf32>
      %618 = arith.select %616, %617, %615 : vector<1x8xf32>
      %619 = arith.maximumf %0, %618 : vector<1x8xf32>
      %620 = arith.addi %588, %146 : i32
      %c0_205 = arith.constant 0 : index
      %621 = arith.index_cast %620 : i32 to index
      %c0_206 = arith.constant 0 : index
      %622 = vector.load %arg3[%c0_205, %621, %c0_206] : memref<1x2304x8xf32, #tpu.memory_space<vmem>>, vector<1x2x8xf32>
      %623 = vector.shape_cast %622 : vector<1x2x8xf32> to vector<2x8xf32>
      %c144_i32_207 = arith.constant 144 : i32
      %624 = arith.addi %620, %c144_i32_207 : i32
      %c0_208 = arith.constant 0 : index
      %625 = arith.index_cast %624 : i32 to index
      %c0_209 = arith.constant 0 : index
      %626 = vector.load %arg3[%c0_208, %625, %c0_209] : memref<1x2304x8xf32, #tpu.memory_space<vmem>>, vector<1x2x8xf32>
      %627 = vector.shape_cast %626 : vector<1x2x8xf32> to vector<2x8xf32>
      %628 = vector.extract_strided_slice %623 {offsets = [0, 0], sizes = [1, 8], strides = [1, 1]} : vector<2x8xf32> to vector<1x8xf32>
      %629 = vector.broadcast %149 : f32 to vector<1x8xf32>
      %630 = arith.mulf %629, %628 : vector<1x8xf32>
      %631 = vector.extract_strided_slice %623 {offsets = [1, 0], sizes = [1, 8], strides = [1, 1]} : vector<2x8xf32> to vector<1x8xf32>
      %632 = vector.broadcast %148 : f32 to vector<1x8xf32>
      %633 = arith.mulf %632, %631 : vector<1x8xf32>
      %634 = arith.addf %630, %633 : vector<1x8xf32>
      %635 = vector.extract_strided_slice %627 {offsets = [0, 0], sizes = [1, 8], strides = [1, 1]} : vector<2x8xf32> to vector<1x8xf32>
      %636 = vector.broadcast %149 : f32 to vector<1x8xf32>
      %637 = arith.mulf %636, %635 : vector<1x8xf32>
      %638 = vector.extract_strided_slice %627 {offsets = [1, 0], sizes = [1, 8], strides = [1, 1]} : vector<2x8xf32> to vector<1x8xf32>
      %639 = vector.broadcast %148 : f32 to vector<1x8xf32>
      %640 = arith.mulf %639, %638 : vector<1x8xf32>
      %641 = arith.addf %637, %640 : vector<1x8xf32>
      %642 = vector.broadcast %71 : f32 to vector<1x8xf32>
      %643 = arith.mulf %642, %634 : vector<1x8xf32>
      %644 = vector.broadcast %69 : f32 to vector<1x8xf32>
      %645 = arith.mulf %644, %641 : vector<1x8xf32>
      %646 = arith.addf %643, %645 : vector<1x8xf32>
      %647 = arith.ori %63, %142 : i1
      %cst_210 = arith.constant 0.000000e+00 : f32
      %648 = vector.broadcast %cst_210 : f32 to vector<1x8xf32>
      %649 = arith.select %647, %648, %646 : vector<1x8xf32>
      %650 = arith.maximumf %619, %649 : vector<1x8xf32>
      %c48_i32_211 = arith.constant 48 : i32
      %651 = arith.addi %86, %c48_i32_211 : i32
      %652 = arith.addi %651, %131 : i32
      %c0_212 = arith.constant 0 : index
      %653 = arith.index_cast %652 : i32 to index
      %c0_213 = arith.constant 0 : index
      %654 = vector.load %arg3[%c0_212, %653, %c0_213] : memref<1x2304x8xf32, #tpu.memory_space<vmem>>, vector<1x2x8xf32>
      %655 = vector.shape_cast %654 : vector<1x2x8xf32> to vector<2x8xf32>
      %c144_i32_214 = arith.constant 144 : i32
      %656 = arith.addi %652, %c144_i32_214 : i32
      %c0_215 = arith.constant 0 : index
      %657 = arith.index_cast %656 : i32 to index
      %c0_216 = arith.constant 0 : index
      %658 = vector.load %arg3[%c0_215, %657, %c0_216] : memref<1x2304x8xf32, #tpu.memory_space<vmem>>, vector<1x2x8xf32>
      %659 = vector.shape_cast %658 : vector<1x2x8xf32> to vector<2x8xf32>
      %660 = vector.extract_strided_slice %655 {offsets = [0, 0], sizes = [1, 8], strides = [1, 1]} : vector<2x8xf32> to vector<1x8xf32>
      %661 = vector.broadcast %134 : f32 to vector<1x8xf32>
      %662 = arith.mulf %661, %660 : vector<1x8xf32>
      %663 = vector.extract_strided_slice %655 {offsets = [1, 0], sizes = [1, 8], strides = [1, 1]} : vector<2x8xf32> to vector<1x8xf32>
      %664 = vector.broadcast %133 : f32 to vector<1x8xf32>
      %665 = arith.mulf %664, %663 : vector<1x8xf32>
      %666 = arith.addf %662, %665 : vector<1x8xf32>
      %667 = vector.extract_strided_slice %659 {offsets = [0, 0], sizes = [1, 8], strides = [1, 1]} : vector<2x8xf32> to vector<1x8xf32>
      %668 = vector.broadcast %134 : f32 to vector<1x8xf32>
      %669 = arith.mulf %668, %667 : vector<1x8xf32>
      %670 = vector.extract_strided_slice %659 {offsets = [1, 0], sizes = [1, 8], strides = [1, 1]} : vector<2x8xf32> to vector<1x8xf32>
      %671 = vector.broadcast %133 : f32 to vector<1x8xf32>
      %672 = arith.mulf %671, %670 : vector<1x8xf32>
      %673 = arith.addf %669, %672 : vector<1x8xf32>
      %674 = vector.broadcast %87 : f32 to vector<1x8xf32>
      %675 = arith.mulf %674, %666 : vector<1x8xf32>
      %676 = vector.broadcast %85 : f32 to vector<1x8xf32>
      %677 = arith.mulf %676, %673 : vector<1x8xf32>
      %678 = arith.addf %675, %677 : vector<1x8xf32>
      %679 = arith.ori %79, %127 : i1
      %cst_217 = arith.constant 0.000000e+00 : f32
      %680 = vector.broadcast %cst_217 : f32 to vector<1x8xf32>
      %681 = arith.select %679, %680, %678 : vector<1x8xf32>
      %682 = arith.maximumf %650, %681 : vector<1x8xf32>
      %683 = arith.addi %651, %146 : i32
      %c0_218 = arith.constant 0 : index
      %684 = arith.index_cast %683 : i32 to index
      %c0_219 = arith.constant 0 : index
      %685 = vector.load %arg3[%c0_218, %684, %c0_219] : memref<1x2304x8xf32, #tpu.memory_space<vmem>>, vector<1x2x8xf32>
      %686 = vector.shape_cast %685 : vector<1x2x8xf32> to vector<2x8xf32>
      %c144_i32_220 = arith.constant 144 : i32
      %687 = arith.addi %683, %c144_i32_220 : i32
      %c0_221 = arith.constant 0 : index
      %688 = arith.index_cast %687 : i32 to index
      %c0_222 = arith.constant 0 : index
      %689 = vector.load %arg3[%c0_221, %688, %c0_222] : memref<1x2304x8xf32, #tpu.memory_space<vmem>>, vector<1x2x8xf32>
      %690 = vector.shape_cast %689 : vector<1x2x8xf32> to vector<2x8xf32>
      %691 = vector.extract_strided_slice %686 {offsets = [0, 0], sizes = [1, 8], strides = [1, 1]} : vector<2x8xf32> to vector<1x8xf32>
      %692 = vector.broadcast %149 : f32 to vector<1x8xf32>
      %693 = arith.mulf %692, %691 : vector<1x8xf32>
      %694 = vector.extract_strided_slice %686 {offsets = [1, 0], sizes = [1, 8], strides = [1, 1]} : vector<2x8xf32> to vector<1x8xf32>
      %695 = vector.broadcast %148 : f32 to vector<1x8xf32>
      %696 = arith.mulf %695, %694 : vector<1x8xf32>
      %697 = arith.addf %693, %696 : vector<1x8xf32>
      %698 = vector.extract_strided_slice %690 {offsets = [0, 0], sizes = [1, 8], strides = [1, 1]} : vector<2x8xf32> to vector<1x8xf32>
      %699 = vector.broadcast %149 : f32 to vector<1x8xf32>
      %700 = arith.mulf %699, %698 : vector<1x8xf32>
      %701 = vector.extract_strided_slice %690 {offsets = [1, 0], sizes = [1, 8], strides = [1, 1]} : vector<2x8xf32> to vector<1x8xf32>
      %702 = vector.broadcast %148 : f32 to vector<1x8xf32>
      %703 = arith.mulf %702, %701 : vector<1x8xf32>
      %704 = arith.addf %700, %703 : vector<1x8xf32>
      %705 = vector.broadcast %87 : f32 to vector<1x8xf32>
      %706 = arith.mulf %705, %697 : vector<1x8xf32>
      %707 = vector.broadcast %85 : f32 to vector<1x8xf32>
      %708 = arith.mulf %707, %704 : vector<1x8xf32>
      %709 = arith.addf %706, %708 : vector<1x8xf32>
      %710 = arith.ori %79, %142 : i1
      %cst_223 = arith.constant 0.000000e+00 : f32
      %711 = vector.broadcast %cst_223 : f32 to vector<1x8xf32>
      %712 = arith.select %710, %711, %709 : vector<1x8xf32>
      %713 = arith.maximumf %682, %712 : vector<1x8xf32>
      %c64_i32 = arith.constant 64 : i32
      %714 = arith.addi %70, %c64_i32 : i32
      %715 = arith.addi %714, %161 : i32
      %c0_224 = arith.constant 0 : index
      %716 = arith.index_cast %715 : i32 to index
      %c0_225 = arith.constant 0 : index
      %717 = vector.load %arg3[%c0_224, %716, %c0_225] : memref<1x2304x8xf32, #tpu.memory_space<vmem>>, vector<1x2x8xf32>
      %718 = vector.shape_cast %717 : vector<1x2x8xf32> to vector<2x8xf32>
      %c144_i32_226 = arith.constant 144 : i32
      %719 = arith.addi %715, %c144_i32_226 : i32
      %c0_227 = arith.constant 0 : index
      %720 = arith.index_cast %719 : i32 to index
      %c0_228 = arith.constant 0 : index
      %721 = vector.load %arg3[%c0_227, %720, %c0_228] : memref<1x2304x8xf32, #tpu.memory_space<vmem>>, vector<1x2x8xf32>
      %722 = vector.shape_cast %721 : vector<1x2x8xf32> to vector<2x8xf32>
      %723 = vector.extract_strided_slice %718 {offsets = [0, 0], sizes = [1, 8], strides = [1, 1]} : vector<2x8xf32> to vector<1x8xf32>
      %724 = vector.broadcast %164 : f32 to vector<1x8xf32>
      %725 = arith.mulf %724, %723 : vector<1x8xf32>
      %726 = vector.extract_strided_slice %718 {offsets = [1, 0], sizes = [1, 8], strides = [1, 1]} : vector<2x8xf32> to vector<1x8xf32>
      %727 = vector.broadcast %163 : f32 to vector<1x8xf32>
      %728 = arith.mulf %727, %726 : vector<1x8xf32>
      %729 = arith.addf %725, %728 : vector<1x8xf32>
      %730 = vector.extract_strided_slice %722 {offsets = [0, 0], sizes = [1, 8], strides = [1, 1]} : vector<2x8xf32> to vector<1x8xf32>
      %731 = vector.broadcast %164 : f32 to vector<1x8xf32>
      %732 = arith.mulf %731, %730 : vector<1x8xf32>
      %733 = vector.extract_strided_slice %722 {offsets = [1, 0], sizes = [1, 8], strides = [1, 1]} : vector<2x8xf32> to vector<1x8xf32>
      %734 = vector.broadcast %163 : f32 to vector<1x8xf32>
      %735 = arith.mulf %734, %733 : vector<1x8xf32>
      %736 = arith.addf %732, %735 : vector<1x8xf32>
      %737 = vector.broadcast %71 : f32 to vector<1x8xf32>
      %738 = arith.mulf %737, %729 : vector<1x8xf32>
      %739 = vector.broadcast %69 : f32 to vector<1x8xf32>
      %740 = arith.mulf %739, %736 : vector<1x8xf32>
      %741 = arith.addf %738, %740 : vector<1x8xf32>
      %742 = arith.ori %63, %157 : i1
      %cst_229 = arith.constant 0.000000e+00 : f32
      %743 = vector.broadcast %cst_229 : f32 to vector<1x8xf32>
      %744 = arith.select %742, %743, %741 : vector<1x8xf32>
      %745 = arith.maximumf %0, %744 : vector<1x8xf32>
      %746 = arith.addi %714, %176 : i32
      %c0_230 = arith.constant 0 : index
      %747 = arith.index_cast %746 : i32 to index
      %c0_231 = arith.constant 0 : index
      %748 = vector.load %arg3[%c0_230, %747, %c0_231] : memref<1x2304x8xf32, #tpu.memory_space<vmem>>, vector<1x2x8xf32>
      %749 = vector.shape_cast %748 : vector<1x2x8xf32> to vector<2x8xf32>
      %c144_i32_232 = arith.constant 144 : i32
      %750 = arith.addi %746, %c144_i32_232 : i32
      %c0_233 = arith.constant 0 : index
      %751 = arith.index_cast %750 : i32 to index
      %c0_234 = arith.constant 0 : index
      %752 = vector.load %arg3[%c0_233, %751, %c0_234] : memref<1x2304x8xf32, #tpu.memory_space<vmem>>, vector<1x2x8xf32>
      %753 = vector.shape_cast %752 : vector<1x2x8xf32> to vector<2x8xf32>
      %754 = vector.extract_strided_slice %749 {offsets = [0, 0], sizes = [1, 8], strides = [1, 1]} : vector<2x8xf32> to vector<1x8xf32>
      %755 = vector.broadcast %179 : f32 to vector<1x8xf32>
      %756 = arith.mulf %755, %754 : vector<1x8xf32>
      %757 = vector.extract_strided_slice %749 {offsets = [1, 0], sizes = [1, 8], strides = [1, 1]} : vector<2x8xf32> to vector<1x8xf32>
      %758 = vector.broadcast %178 : f32 to vector<1x8xf32>
      %759 = arith.mulf %758, %757 : vector<1x8xf32>
      %760 = arith.addf %756, %759 : vector<1x8xf32>
      %761 = vector.extract_strided_slice %753 {offsets = [0, 0], sizes = [1, 8], strides = [1, 1]} : vector<2x8xf32> to vector<1x8xf32>
      %762 = vector.broadcast %179 : f32 to vector<1x8xf32>
      %763 = arith.mulf %762, %761 : vector<1x8xf32>
      %764 = vector.extract_strided_slice %753 {offsets = [1, 0], sizes = [1, 8], strides = [1, 1]} : vector<2x8xf32> to vector<1x8xf32>
      %765 = vector.broadcast %178 : f32 to vector<1x8xf32>
      %766 = arith.mulf %765, %764 : vector<1x8xf32>
      %767 = arith.addf %763, %766 : vector<1x8xf32>
      %768 = vector.broadcast %71 : f32 to vector<1x8xf32>
      %769 = arith.mulf %768, %760 : vector<1x8xf32>
      %770 = vector.broadcast %69 : f32 to vector<1x8xf32>
      %771 = arith.mulf %770, %767 : vector<1x8xf32>
      %772 = arith.addf %769, %771 : vector<1x8xf32>
      %773 = arith.ori %63, %172 : i1
      %cst_235 = arith.constant 0.000000e+00 : f32
      %774 = vector.broadcast %cst_235 : f32 to vector<1x8xf32>
      %775 = arith.select %773, %774, %772 : vector<1x8xf32>
      %776 = arith.maximumf %745, %775 : vector<1x8xf32>
      %c64_i32_236 = arith.constant 64 : i32
      %777 = arith.addi %86, %c64_i32_236 : i32
      %778 = arith.addi %777, %161 : i32
      %c0_237 = arith.constant 0 : index
      %779 = arith.index_cast %778 : i32 to index
      %c0_238 = arith.constant 0 : index
      %780 = vector.load %arg3[%c0_237, %779, %c0_238] : memref<1x2304x8xf32, #tpu.memory_space<vmem>>, vector<1x2x8xf32>
      %781 = vector.shape_cast %780 : vector<1x2x8xf32> to vector<2x8xf32>
      %c144_i32_239 = arith.constant 144 : i32
      %782 = arith.addi %778, %c144_i32_239 : i32
      %c0_240 = arith.constant 0 : index
      %783 = arith.index_cast %782 : i32 to index
      %c0_241 = arith.constant 0 : index
      %784 = vector.load %arg3[%c0_240, %783, %c0_241] : memref<1x2304x8xf32, #tpu.memory_space<vmem>>, vector<1x2x8xf32>
      %785 = vector.shape_cast %784 : vector<1x2x8xf32> to vector<2x8xf32>
      %786 = vector.extract_strided_slice %781 {offsets = [0, 0], sizes = [1, 8], strides = [1, 1]} : vector<2x8xf32> to vector<1x8xf32>
      %787 = vector.broadcast %164 : f32 to vector<1x8xf32>
      %788 = arith.mulf %787, %786 : vector<1x8xf32>
      %789 = vector.extract_strided_slice %781 {offsets = [1, 0], sizes = [1, 8], strides = [1, 1]} : vector<2x8xf32> to vector<1x8xf32>
      %790 = vector.broadcast %163 : f32 to vector<1x8xf32>
      %791 = arith.mulf %790, %789 : vector<1x8xf32>
      %792 = arith.addf %788, %791 : vector<1x8xf32>
      %793 = vector.extract_strided_slice %785 {offsets = [0, 0], sizes = [1, 8], strides = [1, 1]} : vector<2x8xf32> to vector<1x8xf32>
      %794 = vector.broadcast %164 : f32 to vector<1x8xf32>
      %795 = arith.mulf %794, %793 : vector<1x8xf32>
      %796 = vector.extract_strided_slice %785 {offsets = [1, 0], sizes = [1, 8], strides = [1, 1]} : vector<2x8xf32> to vector<1x8xf32>
      %797 = vector.broadcast %163 : f32 to vector<1x8xf32>
      %798 = arith.mulf %797, %796 : vector<1x8xf32>
      %799 = arith.addf %795, %798 : vector<1x8xf32>
      %800 = vector.broadcast %87 : f32 to vector<1x8xf32>
      %801 = arith.mulf %800, %792 : vector<1x8xf32>
      %802 = vector.broadcast %85 : f32 to vector<1x8xf32>
      %803 = arith.mulf %802, %799 : vector<1x8xf32>
      %804 = arith.addf %801, %803 : vector<1x8xf32>
      %805 = arith.ori %79, %157 : i1
      %cst_242 = arith.constant 0.000000e+00 : f32
      %806 = vector.broadcast %cst_242 : f32 to vector<1x8xf32>
      %807 = arith.select %805, %806, %804 : vector<1x8xf32>
      %808 = arith.maximumf %776, %807 : vector<1x8xf32>
      %809 = arith.addi %777, %176 : i32
      %c0_243 = arith.constant 0 : index
      %810 = arith.index_cast %809 : i32 to index
      %c0_244 = arith.constant 0 : index
      %811 = vector.load %arg3[%c0_243, %810, %c0_244] : memref<1x2304x8xf32, #tpu.memory_space<vmem>>, vector<1x2x8xf32>
      %812 = vector.shape_cast %811 : vector<1x2x8xf32> to vector<2x8xf32>
      %c144_i32_245 = arith.constant 144 : i32
      %813 = arith.addi %809, %c144_i32_245 : i32
      %c0_246 = arith.constant 0 : index
      %814 = arith.index_cast %813 : i32 to index
      %c0_247 = arith.constant 0 : index
      %815 = vector.load %arg3[%c0_246, %814, %c0_247] : memref<1x2304x8xf32, #tpu.memory_space<vmem>>, vector<1x2x8xf32>
      %816 = vector.shape_cast %815 : vector<1x2x8xf32> to vector<2x8xf32>
      %817 = vector.extract_strided_slice %812 {offsets = [0, 0], sizes = [1, 8], strides = [1, 1]} : vector<2x8xf32> to vector<1x8xf32>
      %818 = vector.broadcast %179 : f32 to vector<1x8xf32>
      %819 = arith.mulf %818, %817 : vector<1x8xf32>
      %820 = vector.extract_strided_slice %812 {offsets = [1, 0], sizes = [1, 8], strides = [1, 1]} : vector<2x8xf32> to vector<1x8xf32>
      %821 = vector.broadcast %178 : f32 to vector<1x8xf32>
      %822 = arith.mulf %821, %820 : vector<1x8xf32>
      %823 = arith.addf %819, %822 : vector<1x8xf32>
      %824 = vector.extract_strided_slice %816 {offsets = [0, 0], sizes = [1, 8], strides = [1, 1]} : vector<2x8xf32> to vector<1x8xf32>
      %825 = vector.broadcast %179 : f32 to vector<1x8xf32>
      %826 = arith.mulf %825, %824 : vector<1x8xf32>
      %827 = vector.extract_strided_slice %816 {offsets = [1, 0], sizes = [1, 8], strides = [1, 1]} : vector<2x8xf32> to vector<1x8xf32>
      %828 = vector.broadcast %178 : f32 to vector<1x8xf32>
      %829 = arith.mulf %828, %827 : vector<1x8xf32>
      %830 = arith.addf %826, %829 : vector<1x8xf32>
      %831 = vector.broadcast %87 : f32 to vector<1x8xf32>
      %832 = arith.mulf %831, %823 : vector<1x8xf32>
      %833 = vector.broadcast %85 : f32 to vector<1x8xf32>
      %834 = arith.mulf %833, %830 : vector<1x8xf32>
      %835 = arith.addf %832, %834 : vector<1x8xf32>
      %836 = arith.ori %79, %172 : i1
      %cst_248 = arith.constant 0.000000e+00 : f32
      %837 = vector.broadcast %cst_248 : f32 to vector<1x8xf32>
      %838 = arith.select %836, %837, %835 : vector<1x8xf32>
      %839 = arith.maximumf %808, %838 : vector<1x8xf32>
      %c80_i32 = arith.constant 80 : i32
      %840 = arith.addi %70, %c80_i32 : i32
      %841 = arith.addi %840, %191 : i32
      %c0_249 = arith.constant 0 : index
      %842 = arith.index_cast %841 : i32 to index
      %c0_250 = arith.constant 0 : index
      %843 = vector.load %arg3[%c0_249, %842, %c0_250] : memref<1x2304x8xf32, #tpu.memory_space<vmem>>, vector<1x2x8xf32>
      %844 = vector.shape_cast %843 : vector<1x2x8xf32> to vector<2x8xf32>
      %c144_i32_251 = arith.constant 144 : i32
      %845 = arith.addi %841, %c144_i32_251 : i32
      %c0_252 = arith.constant 0 : index
      %846 = arith.index_cast %845 : i32 to index
      %c0_253 = arith.constant 0 : index
      %847 = vector.load %arg3[%c0_252, %846, %c0_253] : memref<1x2304x8xf32, #tpu.memory_space<vmem>>, vector<1x2x8xf32>
      %848 = vector.shape_cast %847 : vector<1x2x8xf32> to vector<2x8xf32>
      %849 = vector.extract_strided_slice %844 {offsets = [0, 0], sizes = [1, 8], strides = [1, 1]} : vector<2x8xf32> to vector<1x8xf32>
      %850 = vector.broadcast %194 : f32 to vector<1x8xf32>
      %851 = arith.mulf %850, %849 : vector<1x8xf32>
      %852 = vector.extract_strided_slice %844 {offsets = [1, 0], sizes = [1, 8], strides = [1, 1]} : vector<2x8xf32> to vector<1x8xf32>
      %853 = vector.broadcast %193 : f32 to vector<1x8xf32>
      %854 = arith.mulf %853, %852 : vector<1x8xf32>
      %855 = arith.addf %851, %854 : vector<1x8xf32>
      %856 = vector.extract_strided_slice %848 {offsets = [0, 0], sizes = [1, 8], strides = [1, 1]} : vector<2x8xf32> to vector<1x8xf32>
      %857 = vector.broadcast %194 : f32 to vector<1x8xf32>
      %858 = arith.mulf %857, %856 : vector<1x8xf32>
      %859 = vector.extract_strided_slice %848 {offsets = [1, 0], sizes = [1, 8], strides = [1, 1]} : vector<2x8xf32> to vector<1x8xf32>
      %860 = vector.broadcast %193 : f32 to vector<1x8xf32>
      %861 = arith.mulf %860, %859 : vector<1x8xf32>
      %862 = arith.addf %858, %861 : vector<1x8xf32>
      %863 = vector.broadcast %71 : f32 to vector<1x8xf32>
      %864 = arith.mulf %863, %855 : vector<1x8xf32>
      %865 = vector.broadcast %69 : f32 to vector<1x8xf32>
      %866 = arith.mulf %865, %862 : vector<1x8xf32>
      %867 = arith.addf %864, %866 : vector<1x8xf32>
      %868 = arith.ori %63, %187 : i1
      %cst_254 = arith.constant 0.000000e+00 : f32
      %869 = vector.broadcast %cst_254 : f32 to vector<1x8xf32>
      %870 = arith.select %868, %869, %867 : vector<1x8xf32>
      %871 = arith.maximumf %0, %870 : vector<1x8xf32>
      %872 = arith.addi %840, %206 : i32
      %c0_255 = arith.constant 0 : index
      %873 = arith.index_cast %872 : i32 to index
      %c0_256 = arith.constant 0 : index
      %874 = vector.load %arg3[%c0_255, %873, %c0_256] : memref<1x2304x8xf32, #tpu.memory_space<vmem>>, vector<1x2x8xf32>
      %875 = vector.shape_cast %874 : vector<1x2x8xf32> to vector<2x8xf32>
      %c144_i32_257 = arith.constant 144 : i32
      %876 = arith.addi %872, %c144_i32_257 : i32
      %c0_258 = arith.constant 0 : index
      %877 = arith.index_cast %876 : i32 to index
      %c0_259 = arith.constant 0 : index
      %878 = vector.load %arg3[%c0_258, %877, %c0_259] : memref<1x2304x8xf32, #tpu.memory_space<vmem>>, vector<1x2x8xf32>
      %879 = vector.shape_cast %878 : vector<1x2x8xf32> to vector<2x8xf32>
      %880 = vector.extract_strided_slice %875 {offsets = [0, 0], sizes = [1, 8], strides = [1, 1]} : vector<2x8xf32> to vector<1x8xf32>
      %881 = vector.broadcast %209 : f32 to vector<1x8xf32>
      %882 = arith.mulf %881, %880 : vector<1x8xf32>
      %883 = vector.extract_strided_slice %875 {offsets = [1, 0], sizes = [1, 8], strides = [1, 1]} : vector<2x8xf32> to vector<1x8xf32>
      %884 = vector.broadcast %208 : f32 to vector<1x8xf32>
      %885 = arith.mulf %884, %883 : vector<1x8xf32>
      %886 = arith.addf %882, %885 : vector<1x8xf32>
      %887 = vector.extract_strided_slice %879 {offsets = [0, 0], sizes = [1, 8], strides = [1, 1]} : vector<2x8xf32> to vector<1x8xf32>
      %888 = vector.broadcast %209 : f32 to vector<1x8xf32>
      %889 = arith.mulf %888, %887 : vector<1x8xf32>
      %890 = vector.extract_strided_slice %879 {offsets = [1, 0], sizes = [1, 8], strides = [1, 1]} : vector<2x8xf32> to vector<1x8xf32>
      %891 = vector.broadcast %208 : f32 to vector<1x8xf32>
      %892 = arith.mulf %891, %890 : vector<1x8xf32>
      %893 = arith.addf %889, %892 : vector<1x8xf32>
      %894 = vector.broadcast %71 : f32 to vector<1x8xf32>
      %895 = arith.mulf %894, %886 : vector<1x8xf32>
      %896 = vector.broadcast %69 : f32 to vector<1x8xf32>
      %897 = arith.mulf %896, %893 : vector<1x8xf32>
      %898 = arith.addf %895, %897 : vector<1x8xf32>
      %899 = arith.ori %63, %202 : i1
      %cst_260 = arith.constant 0.000000e+00 : f32
      %900 = vector.broadcast %cst_260 : f32 to vector<1x8xf32>
      %901 = arith.select %899, %900, %898 : vector<1x8xf32>
      %902 = arith.maximumf %871, %901 : vector<1x8xf32>
      %c80_i32_261 = arith.constant 80 : i32
      %903 = arith.addi %86, %c80_i32_261 : i32
      %904 = arith.addi %903, %191 : i32
      %c0_262 = arith.constant 0 : index
      %905 = arith.index_cast %904 : i32 to index
      %c0_263 = arith.constant 0 : index
      %906 = vector.load %arg3[%c0_262, %905, %c0_263] : memref<1x2304x8xf32, #tpu.memory_space<vmem>>, vector<1x2x8xf32>
      %907 = vector.shape_cast %906 : vector<1x2x8xf32> to vector<2x8xf32>
      %c144_i32_264 = arith.constant 144 : i32
      %908 = arith.addi %904, %c144_i32_264 : i32
      %c0_265 = arith.constant 0 : index
      %909 = arith.index_cast %908 : i32 to index
      %c0_266 = arith.constant 0 : index
      %910 = vector.load %arg3[%c0_265, %909, %c0_266] : memref<1x2304x8xf32, #tpu.memory_space<vmem>>, vector<1x2x8xf32>
      %911 = vector.shape_cast %910 : vector<1x2x8xf32> to vector<2x8xf32>
      %912 = vector.extract_strided_slice %907 {offsets = [0, 0], sizes = [1, 8], strides = [1, 1]} : vector<2x8xf32> to vector<1x8xf32>
      %913 = vector.broadcast %194 : f32 to vector<1x8xf32>
      %914 = arith.mulf %913, %912 : vector<1x8xf32>
      %915 = vector.extract_strided_slice %907 {offsets = [1, 0], sizes = [1, 8], strides = [1, 1]} : vector<2x8xf32> to vector<1x8xf32>
      %916 = vector.broadcast %193 : f32 to vector<1x8xf32>
      %917 = arith.mulf %916, %915 : vector<1x8xf32>
      %918 = arith.addf %914, %917 : vector<1x8xf32>
      %919 = vector.extract_strided_slice %911 {offsets = [0, 0], sizes = [1, 8], strides = [1, 1]} : vector<2x8xf32> to vector<1x8xf32>
      %920 = vector.broadcast %194 : f32 to vector<1x8xf32>
      %921 = arith.mulf %920, %919 : vector<1x8xf32>
      %922 = vector.extract_strided_slice %911 {offsets = [1, 0], sizes = [1, 8], strides = [1, 1]} : vector<2x8xf32> to vector<1x8xf32>
      %923 = vector.broadcast %193 : f32 to vector<1x8xf32>
      %924 = arith.mulf %923, %922 : vector<1x8xf32>
      %925 = arith.addf %921, %924 : vector<1x8xf32>
      %926 = vector.broadcast %87 : f32 to vector<1x8xf32>
      %927 = arith.mulf %926, %918 : vector<1x8xf32>
      %928 = vector.broadcast %85 : f32 to vector<1x8xf32>
      %929 = arith.mulf %928, %925 : vector<1x8xf32>
      %930 = arith.addf %927, %929 : vector<1x8xf32>
      %931 = arith.ori %79, %187 : i1
      %cst_267 = arith.constant 0.000000e+00 : f32
      %932 = vector.broadcast %cst_267 : f32 to vector<1x8xf32>
      %933 = arith.select %931, %932, %930 : vector<1x8xf32>
      %934 = arith.maximumf %902, %933 : vector<1x8xf32>
      %935 = arith.addi %903, %206 : i32
      %c0_268 = arith.constant 0 : index
      %936 = arith.index_cast %935 : i32 to index
      %c0_269 = arith.constant 0 : index
      %937 = vector.load %arg3[%c0_268, %936, %c0_269] : memref<1x2304x8xf32, #tpu.memory_space<vmem>>, vector<1x2x8xf32>
      %938 = vector.shape_cast %937 : vector<1x2x8xf32> to vector<2x8xf32>
      %c144_i32_270 = arith.constant 144 : i32
      %939 = arith.addi %935, %c144_i32_270 : i32
      %c0_271 = arith.constant 0 : index
      %940 = arith.index_cast %939 : i32 to index
      %c0_272 = arith.constant 0 : index
      %941 = vector.load %arg3[%c0_271, %940, %c0_272] : memref<1x2304x8xf32, #tpu.memory_space<vmem>>, vector<1x2x8xf32>
      %942 = vector.shape_cast %941 : vector<1x2x8xf32> to vector<2x8xf32>
      %943 = vector.extract_strided_slice %938 {offsets = [0, 0], sizes = [1, 8], strides = [1, 1]} : vector<2x8xf32> to vector<1x8xf32>
      %944 = vector.broadcast %209 : f32 to vector<1x8xf32>
      %945 = arith.mulf %944, %943 : vector<1x8xf32>
      %946 = vector.extract_strided_slice %938 {offsets = [1, 0], sizes = [1, 8], strides = [1, 1]} : vector<2x8xf32> to vector<1x8xf32>
      %947 = vector.broadcast %208 : f32 to vector<1x8xf32>
      %948 = arith.mulf %947, %946 : vector<1x8xf32>
      %949 = arith.addf %945, %948 : vector<1x8xf32>
      %950 = vector.extract_strided_slice %942 {offsets = [0, 0], sizes = [1, 8], strides = [1, 1]} : vector<2x8xf32> to vector<1x8xf32>
      %951 = vector.broadcast %209 : f32 to vector<1x8xf32>
      %952 = arith.mulf %951, %950 : vector<1x8xf32>
      %953 = vector.extract_strided_slice %942 {offsets = [1, 0], sizes = [1, 8], strides = [1, 1]} : vector<2x8xf32> to vector<1x8xf32>
      %954 = vector.broadcast %208 : f32 to vector<1x8xf32>
      %955 = arith.mulf %954, %953 : vector<1x8xf32>
      %956 = arith.addf %952, %955 : vector<1x8xf32>
      %957 = vector.broadcast %87 : f32 to vector<1x8xf32>
      %958 = arith.mulf %957, %949 : vector<1x8xf32>
      %959 = vector.broadcast %85 : f32 to vector<1x8xf32>
      %960 = arith.mulf %959, %956 : vector<1x8xf32>
      %961 = arith.addf %958, %960 : vector<1x8xf32>
      %962 = arith.ori %79, %202 : i1
      %cst_273 = arith.constant 0.000000e+00 : f32
      %963 = vector.broadcast %cst_273 : f32 to vector<1x8xf32>
      %964 = arith.select %962, %963, %961 : vector<1x8xf32>
      %965 = arith.maximumf %934, %964 : vector<1x8xf32>
      %c96_i32 = arith.constant 96 : i32
      %966 = arith.addi %102, %c96_i32 : i32
      %967 = arith.addi %966, %131 : i32
      %c0_274 = arith.constant 0 : index
      %968 = arith.index_cast %967 : i32 to index
      %c0_275 = arith.constant 0 : index
      %969 = vector.load %arg3[%c0_274, %968, %c0_275] : memref<1x2304x8xf32, #tpu.memory_space<vmem>>, vector<1x2x8xf32>
      %970 = vector.shape_cast %969 : vector<1x2x8xf32> to vector<2x8xf32>
      %c144_i32_276 = arith.constant 144 : i32
      %971 = arith.addi %967, %c144_i32_276 : i32
      %c0_277 = arith.constant 0 : index
      %972 = arith.index_cast %971 : i32 to index
      %c0_278 = arith.constant 0 : index
      %973 = vector.load %arg3[%c0_277, %972, %c0_278] : memref<1x2304x8xf32, #tpu.memory_space<vmem>>, vector<1x2x8xf32>
      %974 = vector.shape_cast %973 : vector<1x2x8xf32> to vector<2x8xf32>
      %975 = vector.extract_strided_slice %970 {offsets = [0, 0], sizes = [1, 8], strides = [1, 1]} : vector<2x8xf32> to vector<1x8xf32>
      %976 = vector.broadcast %134 : f32 to vector<1x8xf32>
      %977 = arith.mulf %976, %975 : vector<1x8xf32>
      %978 = vector.extract_strided_slice %970 {offsets = [1, 0], sizes = [1, 8], strides = [1, 1]} : vector<2x8xf32> to vector<1x8xf32>
      %979 = vector.broadcast %133 : f32 to vector<1x8xf32>
      %980 = arith.mulf %979, %978 : vector<1x8xf32>
      %981 = arith.addf %977, %980 : vector<1x8xf32>
      %982 = vector.extract_strided_slice %974 {offsets = [0, 0], sizes = [1, 8], strides = [1, 1]} : vector<2x8xf32> to vector<1x8xf32>
      %983 = vector.broadcast %134 : f32 to vector<1x8xf32>
      %984 = arith.mulf %983, %982 : vector<1x8xf32>
      %985 = vector.extract_strided_slice %974 {offsets = [1, 0], sizes = [1, 8], strides = [1, 1]} : vector<2x8xf32> to vector<1x8xf32>
      %986 = vector.broadcast %133 : f32 to vector<1x8xf32>
      %987 = arith.mulf %986, %985 : vector<1x8xf32>
      %988 = arith.addf %984, %987 : vector<1x8xf32>
      %989 = vector.broadcast %103 : f32 to vector<1x8xf32>
      %990 = arith.mulf %989, %981 : vector<1x8xf32>
      %991 = vector.broadcast %101 : f32 to vector<1x8xf32>
      %992 = arith.mulf %991, %988 : vector<1x8xf32>
      %993 = arith.addf %990, %992 : vector<1x8xf32>
      %994 = arith.ori %95, %127 : i1
      %cst_279 = arith.constant 0.000000e+00 : f32
      %995 = vector.broadcast %cst_279 : f32 to vector<1x8xf32>
      %996 = arith.select %994, %995, %993 : vector<1x8xf32>
      %997 = arith.maximumf %0, %996 : vector<1x8xf32>
      %998 = arith.addi %966, %146 : i32
      %c0_280 = arith.constant 0 : index
      %999 = arith.index_cast %998 : i32 to index
      %c0_281 = arith.constant 0 : index
      %1000 = vector.load %arg3[%c0_280, %999, %c0_281] : memref<1x2304x8xf32, #tpu.memory_space<vmem>>, vector<1x2x8xf32>
      %1001 = vector.shape_cast %1000 : vector<1x2x8xf32> to vector<2x8xf32>
      %c144_i32_282 = arith.constant 144 : i32
      %1002 = arith.addi %998, %c144_i32_282 : i32
      %c0_283 = arith.constant 0 : index
      %1003 = arith.index_cast %1002 : i32 to index
      %c0_284 = arith.constant 0 : index
      %1004 = vector.load %arg3[%c0_283, %1003, %c0_284] : memref<1x2304x8xf32, #tpu.memory_space<vmem>>, vector<1x2x8xf32>
      %1005 = vector.shape_cast %1004 : vector<1x2x8xf32> to vector<2x8xf32>
      %1006 = vector.extract_strided_slice %1001 {offsets = [0, 0], sizes = [1, 8], strides = [1, 1]} : vector<2x8xf32> to vector<1x8xf32>
      %1007 = vector.broadcast %149 : f32 to vector<1x8xf32>
      %1008 = arith.mulf %1007, %1006 : vector<1x8xf32>
      %1009 = vector.extract_strided_slice %1001 {offsets = [1, 0], sizes = [1, 8], strides = [1, 1]} : vector<2x8xf32> to vector<1x8xf32>
      %1010 = vector.broadcast %148 : f32 to vector<1x8xf32>
      %1011 = arith.mulf %1010, %1009 : vector<1x8xf32>
      %1012 = arith.addf %1008, %1011 : vector<1x8xf32>
      %1013 = vector.extract_strided_slice %1005 {offsets = [0, 0], sizes = [1, 8], strides = [1, 1]} : vector<2x8xf32> to vector<1x8xf32>
      %1014 = vector.broadcast %149 : f32 to vector<1x8xf32>
      %1015 = arith.mulf %1014, %1013 : vector<1x8xf32>
      %1016 = vector.extract_strided_slice %1005 {offsets = [1, 0], sizes = [1, 8], strides = [1, 1]} : vector<2x8xf32> to vector<1x8xf32>
      %1017 = vector.broadcast %148 : f32 to vector<1x8xf32>
      %1018 = arith.mulf %1017, %1016 : vector<1x8xf32>
      %1019 = arith.addf %1015, %1018 : vector<1x8xf32>
      %1020 = vector.broadcast %103 : f32 to vector<1x8xf32>
      %1021 = arith.mulf %1020, %1012 : vector<1x8xf32>
      %1022 = vector.broadcast %101 : f32 to vector<1x8xf32>
      %1023 = arith.mulf %1022, %1019 : vector<1x8xf32>
      %1024 = arith.addf %1021, %1023 : vector<1x8xf32>
      %1025 = arith.ori %95, %142 : i1
      %cst_285 = arith.constant 0.000000e+00 : f32
      %1026 = vector.broadcast %cst_285 : f32 to vector<1x8xf32>
      %1027 = arith.select %1025, %1026, %1024 : vector<1x8xf32>
      %1028 = arith.maximumf %997, %1027 : vector<1x8xf32>
      %c96_i32_286 = arith.constant 96 : i32
      %1029 = arith.addi %118, %c96_i32_286 : i32
      %1030 = arith.addi %1029, %131 : i32
      %c0_287 = arith.constant 0 : index
      %1031 = arith.index_cast %1030 : i32 to index
      %c0_288 = arith.constant 0 : index
      %1032 = vector.load %arg3[%c0_287, %1031, %c0_288] : memref<1x2304x8xf32, #tpu.memory_space<vmem>>, vector<1x2x8xf32>
      %1033 = vector.shape_cast %1032 : vector<1x2x8xf32> to vector<2x8xf32>
      %c144_i32_289 = arith.constant 144 : i32
      %1034 = arith.addi %1030, %c144_i32_289 : i32
      %c0_290 = arith.constant 0 : index
      %1035 = arith.index_cast %1034 : i32 to index
      %c0_291 = arith.constant 0 : index
      %1036 = vector.load %arg3[%c0_290, %1035, %c0_291] : memref<1x2304x8xf32, #tpu.memory_space<vmem>>, vector<1x2x8xf32>
      %1037 = vector.shape_cast %1036 : vector<1x2x8xf32> to vector<2x8xf32>
      %1038 = vector.extract_strided_slice %1033 {offsets = [0, 0], sizes = [1, 8], strides = [1, 1]} : vector<2x8xf32> to vector<1x8xf32>
      %1039 = vector.broadcast %134 : f32 to vector<1x8xf32>
      %1040 = arith.mulf %1039, %1038 : vector<1x8xf32>
      %1041 = vector.extract_strided_slice %1033 {offsets = [1, 0], sizes = [1, 8], strides = [1, 1]} : vector<2x8xf32> to vector<1x8xf32>
      %1042 = vector.broadcast %133 : f32 to vector<1x8xf32>
      %1043 = arith.mulf %1042, %1041 : vector<1x8xf32>
      %1044 = arith.addf %1040, %1043 : vector<1x8xf32>
      %1045 = vector.extract_strided_slice %1037 {offsets = [0, 0], sizes = [1, 8], strides = [1, 1]} : vector<2x8xf32> to vector<1x8xf32>
      %1046 = vector.broadcast %134 : f32 to vector<1x8xf32>
      %1047 = arith.mulf %1046, %1045 : vector<1x8xf32>
      %1048 = vector.extract_strided_slice %1037 {offsets = [1, 0], sizes = [1, 8], strides = [1, 1]} : vector<2x8xf32> to vector<1x8xf32>
      %1049 = vector.broadcast %133 : f32 to vector<1x8xf32>
      %1050 = arith.mulf %1049, %1048 : vector<1x8xf32>
      %1051 = arith.addf %1047, %1050 : vector<1x8xf32>
      %1052 = vector.broadcast %119 : f32 to vector<1x8xf32>
      %1053 = arith.mulf %1052, %1044 : vector<1x8xf32>
      %1054 = vector.broadcast %117 : f32 to vector<1x8xf32>
      %1055 = arith.mulf %1054, %1051 : vector<1x8xf32>
      %1056 = arith.addf %1053, %1055 : vector<1x8xf32>
      %1057 = arith.ori %111, %127 : i1
      %cst_292 = arith.constant 0.000000e+00 : f32
      %1058 = vector.broadcast %cst_292 : f32 to vector<1x8xf32>
      %1059 = arith.select %1057, %1058, %1056 : vector<1x8xf32>
      %1060 = arith.maximumf %1028, %1059 : vector<1x8xf32>
      %1061 = arith.addi %1029, %146 : i32
      %c0_293 = arith.constant 0 : index
      %1062 = arith.index_cast %1061 : i32 to index
      %c0_294 = arith.constant 0 : index
      %1063 = vector.load %arg3[%c0_293, %1062, %c0_294] : memref<1x2304x8xf32, #tpu.memory_space<vmem>>, vector<1x2x8xf32>
      %1064 = vector.shape_cast %1063 : vector<1x2x8xf32> to vector<2x8xf32>
      %c144_i32_295 = arith.constant 144 : i32
      %1065 = arith.addi %1061, %c144_i32_295 : i32
      %c0_296 = arith.constant 0 : index
      %1066 = arith.index_cast %1065 : i32 to index
      %c0_297 = arith.constant 0 : index
      %1067 = vector.load %arg3[%c0_296, %1066, %c0_297] : memref<1x2304x8xf32, #tpu.memory_space<vmem>>, vector<1x2x8xf32>
      %1068 = vector.shape_cast %1067 : vector<1x2x8xf32> to vector<2x8xf32>
      %1069 = vector.extract_strided_slice %1064 {offsets = [0, 0], sizes = [1, 8], strides = [1, 1]} : vector<2x8xf32> to vector<1x8xf32>
      %1070 = vector.broadcast %149 : f32 to vector<1x8xf32>
      %1071 = arith.mulf %1070, %1069 : vector<1x8xf32>
      %1072 = vector.extract_strided_slice %1064 {offsets = [1, 0], sizes = [1, 8], strides = [1, 1]} : vector<2x8xf32> to vector<1x8xf32>
      %1073 = vector.broadcast %148 : f32 to vector<1x8xf32>
      %1074 = arith.mulf %1073, %1072 : vector<1x8xf32>
      %1075 = arith.addf %1071, %1074 : vector<1x8xf32>
      %1076 = vector.extract_strided_slice %1068 {offsets = [0, 0], sizes = [1, 8], strides = [1, 1]} : vector<2x8xf32> to vector<1x8xf32>
      %1077 = vector.broadcast %149 : f32 to vector<1x8xf32>
      %1078 = arith.mulf %1077, %1076 : vector<1x8xf32>
      %1079 = vector.extract_strided_slice %1068 {offsets = [1, 0], sizes = [1, 8], strides = [1, 1]} : vector<2x8xf32> to vector<1x8xf32>
      %1080 = vector.broadcast %148 : f32 to vector<1x8xf32>
      %1081 = arith.mulf %1080, %1079 : vector<1x8xf32>
      %1082 = arith.addf %1078, %1081 : vector<1x8xf32>
      %1083 = vector.broadcast %119 : f32 to vector<1x8xf32>
      %1084 = arith.mulf %1083, %1075 : vector<1x8xf32>
      %1085 = vector.broadcast %117 : f32 to vector<1x8xf32>
      %1086 = arith.mulf %1085, %1082 : vector<1x8xf32>
      %1087 = arith.addf %1084, %1086 : vector<1x8xf32>
      %1088 = arith.ori %111, %142 : i1
      %cst_298 = arith.constant 0.000000e+00 : f32
      %1089 = vector.broadcast %cst_298 : f32 to vector<1x8xf32>
      %1090 = arith.select %1088, %1089, %1087 : vector<1x8xf32>
      %1091 = arith.maximumf %1060, %1090 : vector<1x8xf32>
      %c112_i32 = arith.constant 112 : i32
      %1092 = arith.addi %102, %c112_i32 : i32
      %1093 = arith.addi %1092, %161 : i32
      %c0_299 = arith.constant 0 : index
      %1094 = arith.index_cast %1093 : i32 to index
      %c0_300 = arith.constant 0 : index
      %1095 = vector.load %arg3[%c0_299, %1094, %c0_300] : memref<1x2304x8xf32, #tpu.memory_space<vmem>>, vector<1x2x8xf32>
      %1096 = vector.shape_cast %1095 : vector<1x2x8xf32> to vector<2x8xf32>
      %c144_i32_301 = arith.constant 144 : i32
      %1097 = arith.addi %1093, %c144_i32_301 : i32
      %c0_302 = arith.constant 0 : index
      %1098 = arith.index_cast %1097 : i32 to index
      %c0_303 = arith.constant 0 : index
      %1099 = vector.load %arg3[%c0_302, %1098, %c0_303] : memref<1x2304x8xf32, #tpu.memory_space<vmem>>, vector<1x2x8xf32>
      %1100 = vector.shape_cast %1099 : vector<1x2x8xf32> to vector<2x8xf32>
      %1101 = vector.extract_strided_slice %1096 {offsets = [0, 0], sizes = [1, 8], strides = [1, 1]} : vector<2x8xf32> to vector<1x8xf32>
      %1102 = vector.broadcast %164 : f32 to vector<1x8xf32>
      %1103 = arith.mulf %1102, %1101 : vector<1x8xf32>
      %1104 = vector.extract_strided_slice %1096 {offsets = [1, 0], sizes = [1, 8], strides = [1, 1]} : vector<2x8xf32> to vector<1x8xf32>
      %1105 = vector.broadcast %163 : f32 to vector<1x8xf32>
      %1106 = arith.mulf %1105, %1104 : vector<1x8xf32>
      %1107 = arith.addf %1103, %1106 : vector<1x8xf32>
      %1108 = vector.extract_strided_slice %1100 {offsets = [0, 0], sizes = [1, 8], strides = [1, 1]} : vector<2x8xf32> to vector<1x8xf32>
      %1109 = vector.broadcast %164 : f32 to vector<1x8xf32>
      %1110 = arith.mulf %1109, %1108 : vector<1x8xf32>
      %1111 = vector.extract_strided_slice %1100 {offsets = [1, 0], sizes = [1, 8], strides = [1, 1]} : vector<2x8xf32> to vector<1x8xf32>
      %1112 = vector.broadcast %163 : f32 to vector<1x8xf32>
      %1113 = arith.mulf %1112, %1111 : vector<1x8xf32>
      %1114 = arith.addf %1110, %1113 : vector<1x8xf32>
      %1115 = vector.broadcast %103 : f32 to vector<1x8xf32>
      %1116 = arith.mulf %1115, %1107 : vector<1x8xf32>
      %1117 = vector.broadcast %101 : f32 to vector<1x8xf32>
      %1118 = arith.mulf %1117, %1114 : vector<1x8xf32>
      %1119 = arith.addf %1116, %1118 : vector<1x8xf32>
      %1120 = arith.ori %95, %157 : i1
      %cst_304 = arith.constant 0.000000e+00 : f32
      %1121 = vector.broadcast %cst_304 : f32 to vector<1x8xf32>
      %1122 = arith.select %1120, %1121, %1119 : vector<1x8xf32>
      %1123 = arith.maximumf %0, %1122 : vector<1x8xf32>
      %1124 = arith.addi %1092, %176 : i32
      %c0_305 = arith.constant 0 : index
      %1125 = arith.index_cast %1124 : i32 to index
      %c0_306 = arith.constant 0 : index
      %1126 = vector.load %arg3[%c0_305, %1125, %c0_306] : memref<1x2304x8xf32, #tpu.memory_space<vmem>>, vector<1x2x8xf32>
      %1127 = vector.shape_cast %1126 : vector<1x2x8xf32> to vector<2x8xf32>
      %c144_i32_307 = arith.constant 144 : i32
      %1128 = arith.addi %1124, %c144_i32_307 : i32
      %c0_308 = arith.constant 0 : index
      %1129 = arith.index_cast %1128 : i32 to index
      %c0_309 = arith.constant 0 : index
      %1130 = vector.load %arg3[%c0_308, %1129, %c0_309] : memref<1x2304x8xf32, #tpu.memory_space<vmem>>, vector<1x2x8xf32>
      %1131 = vector.shape_cast %1130 : vector<1x2x8xf32> to vector<2x8xf32>
      %1132 = vector.extract_strided_slice %1127 {offsets = [0, 0], sizes = [1, 8], strides = [1, 1]} : vector<2x8xf32> to vector<1x8xf32>
      %1133 = vector.broadcast %179 : f32 to vector<1x8xf32>
      %1134 = arith.mulf %1133, %1132 : vector<1x8xf32>
      %1135 = vector.extract_strided_slice %1127 {offsets = [1, 0], sizes = [1, 8], strides = [1, 1]} : vector<2x8xf32> to vector<1x8xf32>
      %1136 = vector.broadcast %178 : f32 to vector<1x8xf32>
      %1137 = arith.mulf %1136, %1135 : vector<1x8xf32>
      %1138 = arith.addf %1134, %1137 : vector<1x8xf32>
      %1139 = vector.extract_strided_slice %1131 {offsets = [0, 0], sizes = [1, 8], strides = [1, 1]} : vector<2x8xf32> to vector<1x8xf32>
      %1140 = vector.broadcast %179 : f32 to vector<1x8xf32>
      %1141 = arith.mulf %1140, %1139 : vector<1x8xf32>
      %1142 = vector.extract_strided_slice %1131 {offsets = [1, 0], sizes = [1, 8], strides = [1, 1]} : vector<2x8xf32> to vector<1x8xf32>
      %1143 = vector.broadcast %178 : f32 to vector<1x8xf32>
      %1144 = arith.mulf %1143, %1142 : vector<1x8xf32>
      %1145 = arith.addf %1141, %1144 : vector<1x8xf32>
      %1146 = vector.broadcast %103 : f32 to vector<1x8xf32>
      %1147 = arith.mulf %1146, %1138 : vector<1x8xf32>
      %1148 = vector.broadcast %101 : f32 to vector<1x8xf32>
      %1149 = arith.mulf %1148, %1145 : vector<1x8xf32>
      %1150 = arith.addf %1147, %1149 : vector<1x8xf32>
      %1151 = arith.ori %95, %172 : i1
      %cst_310 = arith.constant 0.000000e+00 : f32
      %1152 = vector.broadcast %cst_310 : f32 to vector<1x8xf32>
      %1153 = arith.select %1151, %1152, %1150 : vector<1x8xf32>
      %1154 = arith.maximumf %1123, %1153 : vector<1x8xf32>
      %c112_i32_311 = arith.constant 112 : i32
      %1155 = arith.addi %118, %c112_i32_311 : i32
      %1156 = arith.addi %1155, %161 : i32
      %c0_312 = arith.constant 0 : index
      %1157 = arith.index_cast %1156 : i32 to index
      %c0_313 = arith.constant 0 : index
      %1158 = vector.load %arg3[%c0_312, %1157, %c0_313] : memref<1x2304x8xf32, #tpu.memory_space<vmem>>, vector<1x2x8xf32>
      %1159 = vector.shape_cast %1158 : vector<1x2x8xf32> to vector<2x8xf32>
      %c144_i32_314 = arith.constant 144 : i32
      %1160 = arith.addi %1156, %c144_i32_314 : i32
      %c0_315 = arith.constant 0 : index
      %1161 = arith.index_cast %1160 : i32 to index
      %c0_316 = arith.constant 0 : index
      %1162 = vector.load %arg3[%c0_315, %1161, %c0_316] : memref<1x2304x8xf32, #tpu.memory_space<vmem>>, vector<1x2x8xf32>
      %1163 = vector.shape_cast %1162 : vector<1x2x8xf32> to vector<2x8xf32>
      %1164 = vector.extract_strided_slice %1159 {offsets = [0, 0], sizes = [1, 8], strides = [1, 1]} : vector<2x8xf32> to vector<1x8xf32>
      %1165 = vector.broadcast %164 : f32 to vector<1x8xf32>
      %1166 = arith.mulf %1165, %1164 : vector<1x8xf32>
      %1167 = vector.extract_strided_slice %1159 {offsets = [1, 0], sizes = [1, 8], strides = [1, 1]} : vector<2x8xf32> to vector<1x8xf32>
      %1168 = vector.broadcast %163 : f32 to vector<1x8xf32>
      %1169 = arith.mulf %1168, %1167 : vector<1x8xf32>
      %1170 = arith.addf %1166, %1169 : vector<1x8xf32>
      %1171 = vector.extract_strided_slice %1163 {offsets = [0, 0], sizes = [1, 8], strides = [1, 1]} : vector<2x8xf32> to vector<1x8xf32>
      %1172 = vector.broadcast %164 : f32 to vector<1x8xf32>
      %1173 = arith.mulf %1172, %1171 : vector<1x8xf32>
      %1174 = vector.extract_strided_slice %1163 {offsets = [1, 0], sizes = [1, 8], strides = [1, 1]} : vector<2x8xf32> to vector<1x8xf32>
      %1175 = vector.broadcast %163 : f32 to vector<1x8xf32>
      %1176 = arith.mulf %1175, %1174 : vector<1x8xf32>
      %1177 = arith.addf %1173, %1176 : vector<1x8xf32>
      %1178 = vector.broadcast %119 : f32 to vector<1x8xf32>
      %1179 = arith.mulf %1178, %1170 : vector<1x8xf32>
      %1180 = vector.broadcast %117 : f32 to vector<1x8xf32>
      %1181 = arith.mulf %1180, %1177 : vector<1x8xf32>
      %1182 = arith.addf %1179, %1181 : vector<1x8xf32>
      %1183 = arith.ori %111, %157 : i1
      %cst_317 = arith.constant 0.000000e+00 : f32
      %1184 = vector.broadcast %cst_317 : f32 to vector<1x8xf32>
      %1185 = arith.select %1183, %1184, %1182 : vector<1x8xf32>
      %1186 = arith.maximumf %1154, %1185 : vector<1x8xf32>
      %1187 = arith.addi %1155, %176 : i32
      %c0_318 = arith.constant 0 : index
      %1188 = arith.index_cast %1187 : i32 to index
      %c0_319 = arith.constant 0 : index
      %1189 = vector.load %arg3[%c0_318, %1188, %c0_319] : memref<1x2304x8xf32, #tpu.memory_space<vmem>>, vector<1x2x8xf32>
      %1190 = vector.shape_cast %1189 : vector<1x2x8xf32> to vector<2x8xf32>
      %c144_i32_320 = arith.constant 144 : i32
      %1191 = arith.addi %1187, %c144_i32_320 : i32
      %c0_321 = arith.constant 0 : index
      %1192 = arith.index_cast %1191 : i32 to index
      %c0_322 = arith.constant 0 : index
      %1193 = vector.load %arg3[%c0_321, %1192, %c0_322] : memref<1x2304x8xf32, #tpu.memory_space<vmem>>, vector<1x2x8xf32>
      %1194 = vector.shape_cast %1193 : vector<1x2x8xf32> to vector<2x8xf32>
      %1195 = vector.extract_strided_slice %1190 {offsets = [0, 0], sizes = [1, 8], strides = [1, 1]} : vector<2x8xf32> to vector<1x8xf32>
      %1196 = vector.broadcast %179 : f32 to vector<1x8xf32>
      %1197 = arith.mulf %1196, %1195 : vector<1x8xf32>
      %1198 = vector.extract_strided_slice %1190 {offsets = [1, 0], sizes = [1, 8], strides = [1, 1]} : vector<2x8xf32> to vector<1x8xf32>
      %1199 = vector.broadcast %178 : f32 to vector<1x8xf32>
      %1200 = arith.mulf %1199, %1198 : vector<1x8xf32>
      %1201 = arith.addf %1197, %1200 : vector<1x8xf32>
      %1202 = vector.extract_strided_slice %1194 {offsets = [0, 0], sizes = [1, 8], strides = [1, 1]} : vector<2x8xf32> to vector<1x8xf32>
      %1203 = vector.broadcast %179 : f32 to vector<1x8xf32>
      %1204 = arith.mulf %1203, %1202 : vector<1x8xf32>
      %1205 = vector.extract_strided_slice %1194 {offsets = [1, 0], sizes = [1, 8], strides = [1, 1]} : vector<2x8xf32> to vector<1x8xf32>
      %1206 = vector.broadcast %178 : f32 to vector<1x8xf32>
      %1207 = arith.mulf %1206, %1205 : vector<1x8xf32>
      %1208 = arith.addf %1204, %1207 : vector<1x8xf32>
      %1209 = vector.broadcast %119 : f32 to vector<1x8xf32>
      %1210 = arith.mulf %1209, %1201 : vector<1x8xf32>
      %1211 = vector.broadcast %117 : f32 to vector<1x8xf32>
      %1212 = arith.mulf %1211, %1208 : vector<1x8xf32>
      %1213 = arith.addf %1210, %1212 : vector<1x8xf32>
      %1214 = arith.ori %111, %172 : i1
      %cst_323 = arith.constant 0.000000e+00 : f32
      %1215 = vector.broadcast %cst_323 : f32 to vector<1x8xf32>
      %1216 = arith.select %1214, %1215, %1213 : vector<1x8xf32>
      %1217 = arith.maximumf %1186, %1216 : vector<1x8xf32>
      %c128_i32 = arith.constant 128 : i32
      %1218 = arith.addi %102, %c128_i32 : i32
      %1219 = arith.addi %1218, %191 : i32
      %c0_324 = arith.constant 0 : index
      %1220 = arith.index_cast %1219 : i32 to index
      %c0_325 = arith.constant 0 : index
      %1221 = vector.load %arg3[%c0_324, %1220, %c0_325] : memref<1x2304x8xf32, #tpu.memory_space<vmem>>, vector<1x2x8xf32>
      %1222 = vector.shape_cast %1221 : vector<1x2x8xf32> to vector<2x8xf32>
      %c144_i32_326 = arith.constant 144 : i32
      %1223 = arith.addi %1219, %c144_i32_326 : i32
      %c0_327 = arith.constant 0 : index
      %1224 = arith.index_cast %1223 : i32 to index
      %c0_328 = arith.constant 0 : index
      %1225 = vector.load %arg3[%c0_327, %1224, %c0_328] : memref<1x2304x8xf32, #tpu.memory_space<vmem>>, vector<1x2x8xf32>
      %1226 = vector.shape_cast %1225 : vector<1x2x8xf32> to vector<2x8xf32>
      %1227 = vector.extract_strided_slice %1222 {offsets = [0, 0], sizes = [1, 8], strides = [1, 1]} : vector<2x8xf32> to vector<1x8xf32>
      %1228 = vector.broadcast %194 : f32 to vector<1x8xf32>
      %1229 = arith.mulf %1228, %1227 : vector<1x8xf32>
      %1230 = vector.extract_strided_slice %1222 {offsets = [1, 0], sizes = [1, 8], strides = [1, 1]} : vector<2x8xf32> to vector<1x8xf32>
      %1231 = vector.broadcast %193 : f32 to vector<1x8xf32>
      %1232 = arith.mulf %1231, %1230 : vector<1x8xf32>
      %1233 = arith.addf %1229, %1232 : vector<1x8xf32>
      %1234 = vector.extract_strided_slice %1226 {offsets = [0, 0], sizes = [1, 8], strides = [1, 1]} : vector<2x8xf32> to vector<1x8xf32>
      %1235 = vector.broadcast %194 : f32 to vector<1x8xf32>
      %1236 = arith.mulf %1235, %1234 : vector<1x8xf32>
      %1237 = vector.extract_strided_slice %1226 {offsets = [1, 0], sizes = [1, 8], strides = [1, 1]} : vector<2x8xf32> to vector<1x8xf32>
      %1238 = vector.broadcast %193 : f32 to vector<1x8xf32>
      %1239 = arith.mulf %1238, %1237 : vector<1x8xf32>
      %1240 = arith.addf %1236, %1239 : vector<1x8xf32>
      %1241 = vector.broadcast %103 : f32 to vector<1x8xf32>
      %1242 = arith.mulf %1241, %1233 : vector<1x8xf32>
      %1243 = vector.broadcast %101 : f32 to vector<1x8xf32>
      %1244 = arith.mulf %1243, %1240 : vector<1x8xf32>
      %1245 = arith.addf %1242, %1244 : vector<1x8xf32>
      %1246 = arith.ori %95, %187 : i1
      %cst_329 = arith.constant 0.000000e+00 : f32
      %1247 = vector.broadcast %cst_329 : f32 to vector<1x8xf32>
      %1248 = arith.select %1246, %1247, %1245 : vector<1x8xf32>
      %1249 = arith.maximumf %0, %1248 : vector<1x8xf32>
      %1250 = arith.addi %1218, %206 : i32
      %c0_330 = arith.constant 0 : index
      %1251 = arith.index_cast %1250 : i32 to index
      %c0_331 = arith.constant 0 : index
      %1252 = vector.load %arg3[%c0_330, %1251, %c0_331] : memref<1x2304x8xf32, #tpu.memory_space<vmem>>, vector<1x2x8xf32>
      %1253 = vector.shape_cast %1252 : vector<1x2x8xf32> to vector<2x8xf32>
      %c144_i32_332 = arith.constant 144 : i32
      %1254 = arith.addi %1250, %c144_i32_332 : i32
      %c0_333 = arith.constant 0 : index
      %1255 = arith.index_cast %1254 : i32 to index
      %c0_334 = arith.constant 0 : index
      %1256 = vector.load %arg3[%c0_333, %1255, %c0_334] : memref<1x2304x8xf32, #tpu.memory_space<vmem>>, vector<1x2x8xf32>
      %1257 = vector.shape_cast %1256 : vector<1x2x8xf32> to vector<2x8xf32>
      %1258 = vector.extract_strided_slice %1253 {offsets = [0, 0], sizes = [1, 8], strides = [1, 1]} : vector<2x8xf32> to vector<1x8xf32>
      %1259 = vector.broadcast %209 : f32 to vector<1x8xf32>
      %1260 = arith.mulf %1259, %1258 : vector<1x8xf32>
      %1261 = vector.extract_strided_slice %1253 {offsets = [1, 0], sizes = [1, 8], strides = [1, 1]} : vector<2x8xf32> to vector<1x8xf32>
      %1262 = vector.broadcast %208 : f32 to vector<1x8xf32>
      %1263 = arith.mulf %1262, %1261 : vector<1x8xf32>
      %1264 = arith.addf %1260, %1263 : vector<1x8xf32>
      %1265 = vector.extract_strided_slice %1257 {offsets = [0, 0], sizes = [1, 8], strides = [1, 1]} : vector<2x8xf32> to vector<1x8xf32>
      %1266 = vector.broadcast %209 : f32 to vector<1x8xf32>
      %1267 = arith.mulf %1266, %1265 : vector<1x8xf32>
      %1268 = vector.extract_strided_slice %1257 {offsets = [1, 0], sizes = [1, 8], strides = [1, 1]} : vector<2x8xf32> to vector<1x8xf32>
      %1269 = vector.broadcast %208 : f32 to vector<1x8xf32>
      %1270 = arith.mulf %1269, %1268 : vector<1x8xf32>
      %1271 = arith.addf %1267, %1270 : vector<1x8xf32>
      %1272 = vector.broadcast %103 : f32 to vector<1x8xf32>
      %1273 = arith.mulf %1272, %1264 : vector<1x8xf32>
      %1274 = vector.broadcast %101 : f32 to vector<1x8xf32>
      %1275 = arith.mulf %1274, %1271 : vector<1x8xf32>
      %1276 = arith.addf %1273, %1275 : vector<1x8xf32>
      %1277 = arith.ori %95, %202 : i1
      %cst_335 = arith.constant 0.000000e+00 : f32
      %1278 = vector.broadcast %cst_335 : f32 to vector<1x8xf32>
      %1279 = arith.select %1277, %1278, %1276 : vector<1x8xf32>
      %1280 = arith.maximumf %1249, %1279 : vector<1x8xf32>
      %c128_i32_336 = arith.constant 128 : i32
      %1281 = arith.addi %118, %c128_i32_336 : i32
      %1282 = arith.addi %1281, %191 : i32
      %c0_337 = arith.constant 0 : index
      %1283 = arith.index_cast %1282 : i32 to index
      %c0_338 = arith.constant 0 : index
      %1284 = vector.load %arg3[%c0_337, %1283, %c0_338] : memref<1x2304x8xf32, #tpu.memory_space<vmem>>, vector<1x2x8xf32>
      %1285 = vector.shape_cast %1284 : vector<1x2x8xf32> to vector<2x8xf32>
      %c144_i32_339 = arith.constant 144 : i32
      %1286 = arith.addi %1282, %c144_i32_339 : i32
      %c0_340 = arith.constant 0 : index
      %1287 = arith.index_cast %1286 : i32 to index
      %c0_341 = arith.constant 0 : index
      %1288 = vector.load %arg3[%c0_340, %1287, %c0_341] : memref<1x2304x8xf32, #tpu.memory_space<vmem>>, vector<1x2x8xf32>
      %1289 = vector.shape_cast %1288 : vector<1x2x8xf32> to vector<2x8xf32>
      %1290 = vector.extract_strided_slice %1285 {offsets = [0, 0], sizes = [1, 8], strides = [1, 1]} : vector<2x8xf32> to vector<1x8xf32>
      %1291 = vector.broadcast %194 : f32 to vector<1x8xf32>
      %1292 = arith.mulf %1291, %1290 : vector<1x8xf32>
      %1293 = vector.extract_strided_slice %1285 {offsets = [1, 0], sizes = [1, 8], strides = [1, 1]} : vector<2x8xf32> to vector<1x8xf32>
      %1294 = vector.broadcast %193 : f32 to vector<1x8xf32>
      %1295 = arith.mulf %1294, %1293 : vector<1x8xf32>
      %1296 = arith.addf %1292, %1295 : vector<1x8xf32>
      %1297 = vector.extract_strided_slice %1289 {offsets = [0, 0], sizes = [1, 8], strides = [1, 1]} : vector<2x8xf32> to vector<1x8xf32>
      %1298 = vector.broadcast %194 : f32 to vector<1x8xf32>
      %1299 = arith.mulf %1298, %1297 : vector<1x8xf32>
      %1300 = vector.extract_strided_slice %1289 {offsets = [1, 0], sizes = [1, 8], strides = [1, 1]} : vector<2x8xf32> to vector<1x8xf32>
      %1301 = vector.broadcast %193 : f32 to vector<1x8xf32>
      %1302 = arith.mulf %1301, %1300 : vector<1x8xf32>
      %1303 = arith.addf %1299, %1302 : vector<1x8xf32>
      %1304 = vector.broadcast %119 : f32 to vector<1x8xf32>
      %1305 = arith.mulf %1304, %1296 : vector<1x8xf32>
      %1306 = vector.broadcast %117 : f32 to vector<1x8xf32>
      %1307 = arith.mulf %1306, %1303 : vector<1x8xf32>
      %1308 = arith.addf %1305, %1307 : vector<1x8xf32>
      %1309 = arith.ori %111, %187 : i1
      %cst_342 = arith.constant 0.000000e+00 : f32
      %1310 = vector.broadcast %cst_342 : f32 to vector<1x8xf32>
      %1311 = arith.select %1309, %1310, %1308 : vector<1x8xf32>
      %1312 = arith.maximumf %1280, %1311 : vector<1x8xf32>
      %1313 = arith.addi %1281, %206 : i32
      %c0_343 = arith.constant 0 : index
      %1314 = arith.index_cast %1313 : i32 to index
      %c0_344 = arith.constant 0 : index
      %1315 = vector.load %arg3[%c0_343, %1314, %c0_344] : memref<1x2304x8xf32, #tpu.memory_space<vmem>>, vector<1x2x8xf32>
      %1316 = vector.shape_cast %1315 : vector<1x2x8xf32> to vector<2x8xf32>
      %c144_i32_345 = arith.constant 144 : i32
      %1317 = arith.addi %1313, %c144_i32_345 : i32
      %c0_346 = arith.constant 0 : index
      %1318 = arith.index_cast %1317 : i32 to index
      %c0_347 = arith.constant 0 : index
      %1319 = vector.load %arg3[%c0_346, %1318, %c0_347] : memref<1x2304x8xf32, #tpu.memory_space<vmem>>, vector<1x2x8xf32>
      %1320 = vector.shape_cast %1319 : vector<1x2x8xf32> to vector<2x8xf32>
      %1321 = vector.extract_strided_slice %1316 {offsets = [0, 0], sizes = [1, 8], strides = [1, 1]} : vector<2x8xf32> to vector<1x8xf32>
      %1322 = vector.broadcast %209 : f32 to vector<1x8xf32>
      %1323 = arith.mulf %1322, %1321 : vector<1x8xf32>
      %1324 = vector.extract_strided_slice %1316 {offsets = [1, 0], sizes = [1, 8], strides = [1, 1]} : vector<2x8xf32> to vector<1x8xf32>
      %1325 = vector.broadcast %208 : f32 to vector<1x8xf32>
      %1326 = arith.mulf %1325, %1324 : vector<1x8xf32>
      %1327 = arith.addf %1323, %1326 : vector<1x8xf32>
      %1328 = vector.extract_strided_slice %1320 {offsets = [0, 0], sizes = [1, 8], strides = [1, 1]} : vector<2x8xf32> to vector<1x8xf32>
      %1329 = vector.broadcast %209 : f32 to vector<1x8xf32>
      %1330 = arith.mulf %1329, %1328 : vector<1x8xf32>
      %1331 = vector.extract_strided_slice %1320 {offsets = [1, 0], sizes = [1, 8], strides = [1, 1]} : vector<2x8xf32> to vector<1x8xf32>
      %1332 = vector.broadcast %208 : f32 to vector<1x8xf32>
      %1333 = arith.mulf %1332, %1331 : vector<1x8xf32>
      %1334 = arith.addf %1330, %1333 : vector<1x8xf32>
      %1335 = vector.broadcast %119 : f32 to vector<1x8xf32>
      %1336 = arith.mulf %1335, %1327 : vector<1x8xf32>
      %1337 = vector.broadcast %117 : f32 to vector<1x8xf32>
      %1338 = arith.mulf %1337, %1334 : vector<1x8xf32>
      %1339 = arith.addf %1336, %1338 : vector<1x8xf32>
      %1340 = arith.ori %111, %202 : i1
      %cst_348 = arith.constant 0.000000e+00 : f32
      %1341 = vector.broadcast %cst_348 : f32 to vector<1x8xf32>
      %1342 = arith.select %1340, %1341, %1339 : vector<1x8xf32>
      %1343 = arith.maximumf %1312, %1342 : vector<1x8xf32>
      %1344 = tpu.concatenate %335, %461, %587, %713, %839, %965, %1091, %1217, %1343 in 1 : vector<1x8xf32>, vector<1x8xf32>, vector<1x8xf32>, vector<1x8xf32>, vector<1x8xf32>, vector<1x8xf32>, vector<1x8xf32>, vector<1x8xf32>, vector<1x8xf32> -> vector<1x72xf32>
      %1345 = arith.index_cast %3 : i32 to index
      %c0_349 = arith.constant 0 : index
      %1346 = vector.load %arg4[%1345, %c0_349] : memref<8x72xf32, #tpu.memory_space<vmem>>, vector<1x72xf32>
      tpu.vector_store %arg4[%1345, %c0_349], %1344 {strides = array<i32>} : memref<8x72xf32, #tpu.memory_space<vmem>>, vector<1x72xf32>,
    }
    %c8_i32_0 = arith.constant 8 : i32
    return
  }
  func.func @transform_0(%arg0: i32, %arg1: memref<3xi32, #tpu.memory_space<smem>>, %arg2: memref<5x24xf32, #tpu.memory_space<smem>>) -> (i32, i32, i32) {
    %0 = arith.index_cast %arg0 : i32 to index
    %1 = memref.load %arg1[%0] : memref<3xi32, #tpu.memory_space<smem>>
    %c0_i32 = arith.constant 0 : i32
    %c0_i32_0 = arith.constant 0 : i32
    %c0_i32_1 = arith.constant 0 : i32
    return %1, %c0_i32, %c0_i32_0 : i32, i32, i32
  }
  func.func @transform_1(%arg0: i32, %arg1: memref<3xi32, #tpu.memory_space<smem>>, %arg2: memref<5x24xf32, #tpu.memory_space<smem>>) -> (i32, i32) {
    %c0_i32 = arith.constant 0 : i32
    %c0_i32_0 = arith.constant 0 : i32
    return %arg0, %c0_i32 : i32, i32
  }
}

</mosaic_0001>

<llo_original>
// kernel: tpu_custom_call.1
$region0: #{tpu_custom_call.1}
  #allocation0 [shape = 'u32[]', space=smem, size = 0x4, offset = 0x4, fixed_abs, tag = 'smem constant byte address 0x4 - core index']
  #allocation1 [shape = 'u32[144,128]{1,0:T(1,128)}', space=vmem, size = 0x12000, scoped, tag = 'internal scratch']
  #allocation2 [shape = 's32[1]{0}', space=sflag, size = 0x4, scoped, tag = 'scoped memory for tpu_custom_call.1']
  #allocation3 [shape = 'u8[512]{0}', space=smem, size = 0x200, scoped, tag = 'prefetched SMEM operand 0']
  #allocation4 [shape = 'u8[4096]{0}', space=smem, size = 0x1000, scoped, tag = 'prefetched SMEM operand 1']
  %s0 = inlined_call_operand.vmem [shape: s32[3], index: 0, kind: input, shape index: {}]
  %s1 = inlined_call_operand.vmem [shape: f32[5,24], index: 1, kind: input, shape index: {}]
  %s2 = inlined_call_operand.vmem [shape: f32[2,2304,8], index: 2, kind: input, shape index: {}]
  %s3 = inlined_call_operand.hbm [shape: f32[24,72], index: 3, kind: output, shape index: {}]
  %s4 = sld [smem:[#allocation0]]
  $region44: #{tpu_custom_call.1} parent=0
    _
  %s6 = ssub.s32 1, %s4
  %s7 = scalar_select 0, %s6, %s4
  %s8 = sshll.u32 %s0, 4
  %s9 = int_to_ptr.vmem [resolvable:$true] %s8
  %11 = dma.vmem_to_smem %s9, 16, [#allocation3], [#allocation2]
  %s12 = sshll.u32 %s1, 4
  %s13 = int_to_ptr.vmem [resolvable:$true] %s12
  %15 = dma.vmem_to_smem %s13, 128, [#allocation4], [#allocation2]
  %16 = dma.done [#allocation2], 144
  %17 = sfence
  $region1: #{tpu_custom_call.1} parent=0
    #allocation5 [shape = 'u8[8192]{0}', space=vmem, size = 0x2000, scoped, tag = 'output window, operand 0']
    #allocation6 [shape = 's32[2]{0}', space=sflag, size = 0x8, scoped, tag = 'scoped memory for tpu_custom_call.1']
    %18 = vsyncpa [#allocation6], 0
    %s19 = scalar_lea.sflag [#allocation6], 1
    %20 = vsyncpa %s19, 0
    loop: start=0, step=1, limit=5
    $region2: #{tpu_custom_call.1} parent=1 // loop_pre_header
      _
    $region3: #{tpu_custom_call.1} parent=1 // loop_header
      %s22 = sphi 0, %s26
      %p23 = scmp.ge.s32.totalorder %s22, 5
      %s34 = sphi 0, %s36
      %s37 = sphi 0, %s34
      %s38 = sphi 0, %s37
      %s54 = sphi 0, %s38
      %s60 = sphi 0, %s62
      %s63 = sphi 0, %s60
      %s64 = sphi 0, %s63
      %s80 = sphi 0, %s64
    $region4: #{tpu_custom_call.1} parent=1 // loop_header_branch
      %25 = sbr.rel (%p23) target = $region8
    $region5: #{tpu_custom_call.1} parent=1 // loop_body
      %s27 = ssub.s32 %s22, 1
      %s28 = ssub.s32 %s22, 2
      %s29 = sadd.s32 %s22, 1
      %s30 = sld [smem:[#allocation3 + %s22]]
      %s31 = sld [smem:[#allocation3 + %s29]]
      %s32 = ssub.s32 %s30, %s31
      %p33 = scmp.eq.s32.totalorder %s32, 0
      %s35 = sadd.s32 %s34, 1
      %s36 = scalar_select %p33, %s34, %s35
      %p39 = pneg %p33
      %p40 = scmp.eq.s32.totalorder %s22, 2
      %p41 = por %p39, %p40
      %p42 = scmp.ne.s32.totalorder %s34, %s37
      %p43 = scmp.eq.s32.totalorder %s22, 0
      %p44 = por %p42, %p43
      %p45 = scmp.ne.s32.totalorder %s34, %s37
      %p46 = scmp.eq.s32.totalorder %s27, 2
      %p47 = por %p45, %p46
      %p48 = scmp.ne.s32.totalorder %s37, %s38
      %p49 = scmp.eq.s32.totalorder %s27, 0
      %p50 = por %p48, %p49
      %p51 = scmp.ne.s32.totalorder %s37, %s38
      %p52 = scmp.eq.s32.totalorder %s28, 2
      %p53 = por %p51, %p52
      %p55 = scmp.ne.s32.totalorder %s38, %s54
      %p56 = scmp.eq.s32.totalorder %s28, 0
      %p57 = por %p55, %p56
      %s58 = ssub.s32 %s22, %s29
      %p59 = scmp.eq.s32.totalorder %s58, 0
      %s61 = sadd.s32 %s60, 1
      %s62 = scalar_select %p59, %s60, %s61
      %p65 = pneg %p59
      %p66 = scmp.eq.s32.totalorder %s22, 2
      %p67 = por %p65, %p66
      %p68 = scmp.ne.s32.totalorder %s60, %s63
      %p69 = scmp.eq.s32.totalorder %s22, 0
      %p70 = por %p68, %p69
      %p71 = scmp.ne.s32.totalorder %s60, %s63
      %p72 = scmp.eq.s32.totalorder %s27, 2
      %p73 = por %p71, %p72
      %p74 = scmp.ne.s32.totalorder %s63, %s64
      %p75 = scmp.eq.s32.totalorder %s27, 0
      %p76 = por %p74, %p75
      %p77 = scmp.ne.s32.totalorder %s63, %s64
      %p78 = scmp.eq.s32.totalorder %s28, 2
      %p79 = por %p77, %p78
      %p81 = scmp.ne.s32.totalorder %s64, %s80
      %p82 = scmp.eq.s32.totalorder %s28, 0
      %p83 = por %p81, %p82
      %p84 = scmp.le.s32.totalorder 1, %s22
      %p85 = scmp.lt.s32.totalorder %s22, 4
      %p86 = pnand %p84, %p85
      %p87 = pneg %p86
      // Predicated region
      $region9: #{tpu_custom_call.1} parent=5 // pred_check
        _
      $region10: #{tpu_custom_call.1} parent=5 // pred_check_branch
        %89 = sbr.rel (%p86) target = $region12
      $region11: #{tpu_custom_call.1} parent=5 // pred_region
        %s90 = ssub.s32 %s22, 1
      $region12: #{tpu_custom_call.1} parent=5 // pred_fallthru
        _
      %p91 = scmp.lt.s32.totalorder %s22, 3
      // Predicated region
      $region13: #{tpu_custom_call.1} parent=5 // pred_check
        %p92 = pneg %p91
      $region14: #{tpu_custom_call.1} parent=5 // pred_check_branch
        %94 = sbr.rel (%p92) target = $region16
      $region15: #{tpu_custom_call.1} parent=5 // pred_region
        // Predicated region
        $region17: #{tpu_custom_call.1} parent=15 // pred_check
          %p95 = pneg %p44
        $region18: #{tpu_custom_call.1} parent=15 // pred_check_branch
          %97 = sbr.rel (%p95) target = $region20
        $region19: #{tpu_custom_call.1} parent=15 // pred_region
          %s98 = sld [smem:[#allocation3 + %s22]]
          %p99 = scmp.lt.s32.totalorder %s98, 1
          %s100 = scalar_select %p99, %s98, 1
          %s101 = smul.addr %s100, 288
          %s102 = smul.addr %s101, 8
          %s103 = scalar_lea.vmem %s2, %s102
          %s104 = sld [smem:[#allocation3 + %s22]]
        $region20: #{tpu_custom_call.1} parent=15 // pred_fallthru
          _
      $region16: #{tpu_custom_call.1} parent=5 // pred_fallthru
        _
      %p105 = scmp.le.s32.totalorder 1, %s22
      %p106 = scmp.lt.s32.totalorder %s22, 4
      %p107 = pnand %p105, %p106
      %p108 = pneg %p107
      // Predicated region
      $region21: #{tpu_custom_call.1} parent=5 // pred_check
        _
      $region22: #{tpu_custom_call.1} parent=5 // pred_check_branch
        %110 = sbr.rel (%p107) target = $region24
      $region23: #{tpu_custom_call.1} parent=5 // pred_region
        %s111 = ssub.s32 %s22, 1
        %s112 = sld [smem:[#allocation3 + %s27]]
        %p113 = scmp.lt.s32.totalorder %s112, 1
        %s114 = scalar_select %p113, %s112, 1
        %s115 = smul.addr %s114, 288
        %s116 = smul.addr %s115, 8
        %s117 = scalar_lea.vmem %s2, %s116
        %p118 = pneg %p50
        %p119 = pneg %p47
        %p120 = pneg %p76
        %p121 = pneg %p73
        %s122 = sand.u32 %s63, 1
        %s123 = scalar_lea.sflag [#allocation6], %s122
        %s124 = sand.u32 %s63, 1
        %s125 = smul.addr %s124, 8
        %s126 = scalar_lea.vmem [#allocation5], %s125
        %s127 = sld [smem:[#allocation3 + %s27]]
        %p128 = scmp.lt.s32.totalorder %s127, 1
        %s129 = scalar_select %p128, %s127, 1
        %s130 = smul.addr %s129, 288
        %s131 = smul.addr %s130, 8
        %s132 = scalar_lea.vmem %s2, %s131
        %s133 = sld [smem:[#allocation3 + %s27]]
        loop: start=0, step=1, limit=8
        $region25: #{tpu_custom_call.1} parent=23 // loop_pre_header
          _
        $region26: #{tpu_custom_call.1} parent=23 // loop_header
          %s135 = sphi 0, %s139
          %p136 = scmp.ge.s32.totalorder %s135, 8
        $region27: #{tpu_custom_call.1} parent=23 // loop_header_branch
          %138 = sbr.rel (%p136) target = $region31
        $region28: #{tpu_custom_call.1} parent=23 // loop_body
          %s140 = smul.u32 %s27, 8
          %s141 = sadd.s32 %s140, %s135
          %s142 = sshra.s32 %s141, 7
          %s143 = sand.u32 %s141, 127
          %s144 = sadd.s32 %s142, 1
          %s145 = smul.u32 %s144, 128
          %s146 = sshra.s32 %s141, 7
          %s147 = sand.u32 %s141, 127
          %s148 = sadd.s32 %s145, %s147
          %s149 = sld [smem:[#allocation4 + %s148]]
          %s150 = smul.f32 %s149, 0.25
          %s151 = sadd.s32 %s142, 2
          %s152 = smul.u32 %s151, 128
          %s153 = sadd.s32 %s152, %s147
          %s154 = sld [smem:[#allocation4 + %s153]]
          %s155 = smul.f32 %s154, 0.25
          %s156 = sadd.s32 %s142, 3
          %s157 = smul.u32 %s156, 128
          %s158 = sadd.s32 %s157, %s147
          %s159 = sld [smem:[#allocation4 + %s158]]
          %s160 = smul.f32 %s159, 0.25
          %s161 = sadd.s32 %s142, 4
          %s162 = smul.u32 %s161, 128
          %s163 = sadd.s32 %s162, %s147
          %s164 = sld [smem:[#allocation4 + %s163]]
          %s165 = smul.f32 %s164, 0.25
          %s166 = ssub.f32 %s160, %s150
          %s167 = smax.f32 %s166, 0.1
          %s168 = ssub.f32 %s165, %s155
          %s169 = smax.f32 %s168, 0.1
          %v170 = vrcp.pop 3.0
          %s171 = vtos %v170
          %s172 = smul.f32 %s167, %s171
          %v173 = vrcp.pop 3.0
          %s174 = vtos %v173
          %s175 = smul.f32 %s169, %s174
          %s176 = smul.f32 %s175, 0.0
          %s177 = sadd.f32 %s155, %s176
          %s178 = smul.f32 %s175, 0.5
          %v179 = vrcp.pop 2.0
          %s180 = vtos %v179
          %s181 = smul.f32 %s178, %s180
          %s182 = sadd.f32 %s177, %s181
          %p183 = scmp.lt.f32.partialorder %s182, -1.0
          %p184 = scmp.gt.f32.partialorder %s182, 16.0
          %p185 = por %p183, %p184
          %s186 = smax.f32 %s182, 0.0
          %s187 = smin.f32 %s186, 15.0
          %s188 = scvt.f32.s32.to.zero.pseudo %s187
          %p189 = scmp.lt.s32.totalorder %s188, 14
          %s190 = scalar_select %p189, %s188, 14
          %s191 = scvt.s32.f32 %s190
          %s192 = ssub.f32 %s187, %s191
          %s193 = smul.u32 %s190, 144
          %s194 = ssub.f32 1.0, %s192
          %s195 = smul.f32 %s175, 1.5
          %v196 = vrcp.pop 2.0
          %s197 = vtos %v196
          %s198 = smul.f32 %s195, %s197
          %s199 = sadd.f32 %s177, %s198
          %p200 = scmp.lt.f32.partialorder %s199, -1.0
          %p201 = scmp.gt.f32.partialorder %s199, 16.0
          %p202 = por %p200, %p201
          %s203 = smax.f32 %s199, 0.0
          %s204 = smin.f32 %s203, 15.0
          %s205 = scvt.f32.s32.to.zero.pseudo %s204
          %p206 = scmp.lt.s32.totalorder %s205, 14
          %s207 = scalar_select %p206, %s205, 14
          %s208 = scvt.s32.f32 %s207
          %s209 = ssub.f32 %s204, %s208
          %s210 = smul.u32 %s207, 144
          %s211 = ssub.f32 1.0, %s209
          %s212 = sadd.f32 %s155, %s175
          %s213 = sadd.f32 %s212, %s181
          %p214 = scmp.lt.f32.partialorder %s213, -1.0
          %p215 = scmp.gt.f32.partialorder %s213, 16.0
          %p216 = por %p214, %p215
          %s217 = smax.f32 %s213, 0.0
          %s218 = smin.f32 %s217, 15.0
          %s219 = scvt.f32.s32.to.zero.pseudo %s218
          %p220 = scmp.lt.s32.totalorder %s219, 14
          %s221 = scalar_select %p220, %s219, 14
          %s222 = scvt.s32.f32 %s221
          %s223 = ssub.f32 %s218, %s222
          %s224 = smul.u32 %s221, 144
          %s225 = ssub.f32 1.0, %s223
          %s226 = sadd.f32 %s212, %s198
          %p227 = scmp.lt.f32.partialorder %s226, -1.0
          %p228 = scmp.gt.f32.partialorder %s226, 16.0
          %p229 = por %p227, %p228
          %s230 = smax.f32 %s226, 0.0
          %s231 = smin.f32 %s230, 15.0
          %s232 = scvt.f32.s32.to.zero.pseudo %s231
          %p233 = scmp.lt.s32.totalorder %s232, 14
          %s234 = scalar_select %p233, %s232, 14
          %s235 = scvt.s32.f32 %s234
          %s236 = ssub.f32 %s231, %s235
          %s237 = smul.u32 %s234, 144
          %s238 = ssub.f32 1.0, %s236
          %s239 = smul.f32 %s175, 2.0
          %s240 = sadd.f32 %s155, %s239
          %s241 = sadd.f32 %s240, %s181
          %p242 = scmp.lt.f32.partialorder %s241, -1.0
          %p243 = scmp.gt.f32.partialorder %s241, 16.0
          %p244 = por %p242, %p243
          %s245 = smax.f32 %s241, 0.0
          %s246 = smin.f32 %s245, 15.0
          %s247 = scvt.f32.s32.to.zero.pseudo %s246
          %p248 = scmp.lt.s32.totalorder %s247, 14
          %s249 = scalar_select %p248, %s247, 14
          %s250 = scvt.s32.f32 %s249
          %s251 = ssub.f32 %s246, %s250
          %s252 = smul.u32 %s249, 144
          %s253 = ssub.f32 1.0, %s251
          %s254 = sadd.f32 %s240, %s198
          %p255 = scmp.lt.f32.partialorder %s254, -1.0
          %p256 = scmp.gt.f32.partialorder %s254, 16.0
          %p257 = por %p255, %p256
          %s258 = smax.f32 %s254, 0.0
          %s259 = smin.f32 %s258, 15.0
          %s260 = scvt.f32.s32.to.zero.pseudo %s259
          %p261 = scmp.lt.s32.totalorder %s260, 14
          %s262 = scalar_select %p261, %s260, 14
          %s263 = scvt.s32.f32 %s262
          %s264 = ssub.f32 %s259, %s263
          %s265 = smul.u32 %s262, 144
          %s266 = ssub.f32 1.0, %s264
          %s267 = smul.f32 %s172, 0.0
          %s268 = sadd.f32 %s150, %s267
          %s269 = smul.f32 %s172, 0.5
          %v270 = vrcp.pop 2.0
          %s271 = vtos %v270
          %s272 = smul.f32 %s269, %s271
          %s273 = sadd.f32 %s268, %s272
          %p274 = scmp.lt.f32.partialorder %s273, -1.0
          %p275 = scmp.gt.f32.partialorder %s273, 16.0
          %p276 = por %p274, %p275
          %s277 = smax.f32 %s273, 0.0
          %s278 = smin.f32 %s277, 15.0
          %s279 = scvt.f32.s32.to.zero.pseudo %s278
          %p280 = scmp.lt.s32.totalorder %s279, 14
          %s281 = scalar_select %p280, %s279, 14
          %s282 = scvt.s32.f32 %s281
          %s283 = ssub.f32 %s278, %s282
          %s284 = ssub.f32 1.0, %s283
          %s285 = smul.f32 %s172, 1.5
          %v286 = vrcp.pop 2.0
          %s287 = vtos %v286
          %s288 = smul.f32 %s285, %s287
          %s289 = sadd.f32 %s268, %s288
          %p290 = scmp.lt.f32.partialorder %s289, -1.0
          %p291 = scmp.gt.f32.partialorder %s289, 16.0
          %p292 = por %p290, %p291
          %s293 = smax.f32 %s289, 0.0
          %s294 = smin.f32 %s293, 15.0
          %s295 = scvt.f32.s32.to.zero.pseudo %s294
          %p296 = scmp.lt.s32.totalorder %s295, 14
          %s297 = scalar_select %p296, %s295, 14
          %s298 = scvt.s32.f32 %s297
          %s299 = ssub.f32 %s294, %s298
          %s300 = ssub.f32 1.0, %s299
          %s301 = sadd.f32 %s150, %s172
          %s302 = sadd.f32 %s301, %s272
          %p303 = scmp.lt.f32.partialorder %s302, -1.0
          %p304 = scmp.gt.f32.partialorder %s302, 16.0
          %p305 = por %p303, %p304
          %s306 = smax.f32 %s302, 0.0
          %s307 = smin.f32 %s306, 15.0
          %s308 = scvt.f32.s32.to.zero.pseudo %s307
          %p309 = scmp.lt.s32.totalorder %s308, 14
          %s310 = scalar_select %p309, %s308, 14
          %s311 = scvt.s32.f32 %s310
          %s312 = ssub.f32 %s307, %s311
          %s313 = ssub.f32 1.0, %s312
          %s314 = sadd.f32 %s301, %s288
          %p315 = scmp.lt.f32.partialorder %s314, -1.0
          %p316 = scmp.gt.f32.partialorder %s314, 16.0
          %p317 = por %p315, %p316
          %s318 = smax.f32 %s314, 0.0
          %s319 = smin.f32 %s318, 15.0
          %s320 = scvt.f32.s32.to.zero.pseudo %s319
          %p321 = scmp.lt.s32.totalorder %s320, 14
          %s322 = scalar_select %p321, %s320, 14
          %s323 = scvt.s32.f32 %s322
          %s324 = ssub.f32 %s319, %s323
          %s325 = ssub.f32 1.0, %s324
          %s326 = smul.f32 %s172, 2.0
          %s327 = sadd.f32 %s150, %s326
          %s328 = sadd.f32 %s327, %s272
          %p329 = scmp.lt.f32.partialorder %s328, -1.0
          %p330 = scmp.gt.f32.partialorder %s328, 16.0
          %p331 = por %p329, %p330
          %s332 = smax.f32 %s328, 0.0
          %s333 = smin.f32 %s332, 15.0
          %s334 = scvt.f32.s32.to.zero.pseudo %s333
          %p335 = scmp.lt.s32.totalorder %s334, 14
          %s336 = scalar_select %p335, %s334, 14
          %s337 = scvt.s32.f32 %s336
          %s338 = ssub.f32 %s333, %s337
          %s339 = ssub.f32 1.0, %s338
          %s340 = sadd.f32 %s327, %s288
          %p341 = scmp.lt.f32.partialorder %s340, -1.0
          %p342 = scmp.gt.f32.partialorder %s340, 16.0
          %p343 = por %p341, %p342
          %s344 = smax.f32 %s340, 0.0
          %s345 = smin.f32 %s344, 15.0
          %s346 = scvt.f32.s32.to.zero.pseudo %s345
          %p347 = scmp.lt.s32.totalorder %s346, 14
          %s348 = scalar_select %p347, %s346, 14
          %s349 = scvt.s32.f32 %s348
          %s350 = ssub.f32 %s345, %s349
          %s351 = ssub.f32 1.0, %s350
          %s352 = sadd.s32 %s193, %s281
          %s353 = scalar_lea.vmem %s132, %s352
          %v354 = vld [vmem:[%s353] sm:$0x3]
          %s355 = sadd.s32 %s352, 144
          %s356 = scalar_lea.vmem %s132, %s355
          %v357 = vld [vmem:[%s356] sm:$0x3]
          %v358 = vstv %s284
          %v359 = vmul.f32 %v358, %v354
          %v360 = vstv %s283
          %v361 = vmul.f32 %v360, %v354
          %v363 = vrot.slane %v361, 1
          %v365 = vadd.f32 %v359, %v363
          %v366 = vmul.f32 %v358, %v357
          %v367 = vmul.f32 %v360, %v357
          %v369 = vrot.slane %v367, 1
          %v371 = vadd.f32 %v366, %v369
          %v372 = vstv %s194
          %v373 = vmul.f32 %v372, %v365
          %v374 = vstv %s192
          %v375 = vmul.f32 %v374, %v371
          %v376 = vadd.f32 %v373, %v375
          %p377 = por %p185, %p276
          %s378 = scalar_select %p377, 1, 0
          %v379 = vstv %s378
          %vm380 = vcmp.eq.s32.totalorder %v379, 1
          %v381 = vsel %vm380, 0.0, %v376
          %v382 = vmax.f32 %v381, -1e+10
          %s383 = sadd.s32 %s193, %s297
          %s384 = scalar_lea.vmem %s132, %s383
          %v385 = vld [vmem:[%s384] sm:$0x3]
          %s386 = sadd.s32 %s383, 144
          %s387 = scalar_lea.vmem %s132, %s386
          %v388 = vld [vmem:[%s387] sm:$0x3]
          %v389 = vstv %s300
          %v390 = vmul.f32 %v389, %v385
          %v391 = vstv %s299
          %v392 = vmul.f32 %v391, %v385
          %v394 = vrot.slane %v392, 1
          %v396 = vadd.f32 %v390, %v394
          %v397 = vmul.f32 %v389, %v388
          %v398 = vmul.f32 %v391, %v388
          %v400 = vrot.slane %v398, 1
          %v402 = vadd.f32 %v397, %v400
          %v403 = vmul.f32 %v372, %v396
          %v404 = vmul.f32 %v374, %v402
          %v405 = vadd.f32 %v403, %v404
          %p406 = por %p185, %p292
          %s407 = scalar_select %p406, 1, 0
          %v408 = vstv %s407
          %vm409 = vcmp.eq.s32.totalorder %v408, 1
          %v410 = vsel %vm409, 0.0, %v405
          %v411 = vmax.f32 %v382, %v410
          %s412 = sadd.s32 %s210, %s281
          %s413 = scalar_lea.vmem %s132, %s412
          %v414 = vld [vmem:[%s413] sm:$0x3]
          %s415 = sadd.s32 %s412, 144
          %s416 = scalar_lea.vmem %s132, %s415
          %v417 = vld [vmem:[%s416] sm:$0x3]
          %v418 = vmul.f32 %v358, %v414
          %v419 = vmul.f32 %v360, %v414
          %v421 = vrot.slane %v419, 1
          %v423 = vadd.f32 %v418, %v421
          %v424 = vmul.f32 %v358, %v417
          %v425 = vmul.f32 %v360, %v417
          %v427 = vrot.slane %v425, 1
          %v429 = vadd.f32 %v424, %v427
          %v430 = vstv %s211
          %v431 = vmul.f32 %v430, %v423
          %v432 = vstv %s209
          %v433 = vmul.f32 %v432, %v429
          %v434 = vadd.f32 %v431, %v433
          %p435 = por %p202, %p276
          %s436 = scalar_select %p435, 1, 0
          %v437 = vstv %s436
          %vm438 = vcmp.eq.s32.totalorder %v437, 1
          %v439 = vsel %vm438, 0.0, %v434
          %v440 = vmax.f32 %v411, %v439
          %s441 = sadd.s32 %s210, %s297
          %s442 = scalar_lea.vmem %s132, %s441
          %v443 = vld [vmem:[%s442] sm:$0x3]
          %s444 = sadd.s32 %s441, 144
          %s445 = scalar_lea.vmem %s132, %s444
          %v446 = vld [vmem:[%s445] sm:$0x3]
          %v447 = vmul.f32 %v389, %v443
          %v448 = vmul.f32 %v391, %v443
          %v450 = vrot.slane %v448, 1
          %v452 = vadd.f32 %v447, %v450
          %v453 = vmul.f32 %v389, %v446
          %v454 = vmul.f32 %v391, %v446
          %v456 = vrot.slane %v454, 1
          %v458 = vadd.f32 %v453, %v456
          %v459 = vmul.f32 %v430, %v452
          %v460 = vmul.f32 %v432, %v458
          %v461 = vadd.f32 %v459, %v460
          %p462 = por %p202, %p292
          %s463 = scalar_select %p462, 1, 0
          %v464 = vstv %s463
          %vm465 = vcmp.eq.s32.totalorder %v464, 1
          %v466 = vsel %vm465, 0.0, %v461
          %v467 = vmax.f32 %v440, %v466
          %s468 = sadd.s32 %s193, 16
          %s469 = sadd.s32 %s468, %s310
          %s470 = scalar_lea.vmem %s132, %s469
          %v471 = vld [vmem:[%s470] sm:$0x3]
          %s472 = sadd.s32 %s469, 144
          %s473 = scalar_lea.vmem %s132, %s472
          %v474 = vld [vmem:[%s473] sm:$0x3]
          %v475 = vstv %s313
          %v476 = vmul.f32 %v475, %v471
          %v477 = vstv %s312
          %v478 = vmul.f32 %v477, %v471
          %v480 = vrot.slane %v478, 1
          %v482 = vadd.f32 %v476, %v480
          %v483 = vmul.f32 %v475, %v474
          %v484 = vmul.f32 %v477, %v474
          %v486 = vrot.slane %v484, 1
          %v488 = vadd.f32 %v483, %v486
          %v489 = vmul.f32 %v372, %v482
          %v490 = vmul.f32 %v374, %v488
          %v491 = vadd.f32 %v489, %v490
          %p492 = por %p185, %p305
          %s493 = scalar_select %p492, 1, 0
          %v494 = vstv %s493
          %vm495 = vcmp.eq.s32.totalorder %v494, 1
          %v496 = vsel %vm495, 0.0, %v491
          %v497 = vmax.f32 %v496, -1e+10
          %s498 = sadd.s32 %s468, %s322
          %s499 = scalar_lea.vmem %s132, %s498
          %v500 = vld [vmem:[%s499] sm:$0x3]
          %s501 = sadd.s32 %s498, 144
          %s502 = scalar_lea.vmem %s132, %s501
          %v503 = vld [vmem:[%s502] sm:$0x3]
          %v504 = vstv %s325
          %v505 = vmul.f32 %v504, %v500
          %v506 = vstv %s324
          %v507 = vmul.f32 %v506, %v500
          %v509 = vrot.slane %v507, 1
          %v511 = vadd.f32 %v505, %v509
          %v512 = vmul.f32 %v504, %v503
          %v513 = vmul.f32 %v506, %v503
          %v515 = vrot.slane %v513, 1
          %v517 = vadd.f32 %v512, %v515
          %v518 = vmul.f32 %v372, %v511
          %v519 = vmul.f32 %v374, %v517
          %v520 = vadd.f32 %v518, %v519
          %p521 = por %p185, %p317
          %s522 = scalar_select %p521, 1, 0
          %v523 = vstv %s522
          %vm524 = vcmp.eq.s32.totalorder %v523, 1
          %v525 = vsel %vm524, 0.0, %v520
          %v526 = vmax.f32 %v497, %v525
          %s527 = sadd.s32 %s210, 16
          %s528 = sadd.s32 %s527, %s310
          %s529 = scalar_lea.vmem %s132, %s528
          %v530 = vld [vmem:[%s529] sm:$0x3]
          %s531 = sadd.s32 %s528, 144
          %s532 = scalar_lea.vmem %s132, %s531
          %v533 = vld [vmem:[%s532] sm:$0x3]
          %v534 = vmul.f32 %v475, %v530
          %v535 = vmul.f32 %v477, %v530
          %v537 = vrot.slane %v535, 1
          %v539 = vadd.f32 %v534, %v537
          %v540 = vmul.f32 %v475, %v533
          %v541 = vmul.f32 %v477, %v533
          %v543 = vrot.slane %v541, 1
          %v545 = vadd.f32 %v540, %v543
          %v546 = vmul.f32 %v430, %v539
          %v547 = vmul.f32 %v432, %v545
          %v548 = vadd.f32 %v546, %v547
          %p549 = por %p202, %p305
          %s550 = scalar_select %p549, 1, 0
          %v551 = vstv %s550
          %vm552 = vcmp.eq.s32.totalorder %v551, 1
          %v553 = vsel %vm552, 0.0, %v548
          %v554 = vmax.f32 %v526, %v553
          %s555 = sadd.s32 %s527, %s322
          %s556 = scalar_lea.vmem %s132, %s555
          %v557 = vld [vmem:[%s556] sm:$0x3]
          %s558 = sadd.s32 %s555, 144
          %s559 = scalar_lea.vmem %s132, %s558
          %v560 = vld [vmem:[%s559] sm:$0x3]
          %v561 = vmul.f32 %v504, %v557
          %v562 = vmul.f32 %v506, %v557
          %v564 = vrot.slane %v562, 1
          %v566 = vadd.f32 %v561, %v564
          %v567 = vmul.f32 %v504, %v560
          %v568 = vmul.f32 %v506, %v560
          %v570 = vrot.slane %v568, 1
          %v572 = vadd.f32 %v567, %v570
          %v573 = vmul.f32 %v430, %v566
          %v574 = vmul.f32 %v432, %v572
          %v575 = vadd.f32 %v573, %v574
          %p576 = por %p202, %p317
          %s577 = scalar_select %p576, 1, 0
          %v578 = vstv %s577
          %vm579 = vcmp.eq.s32.totalorder %v578, 1
          %v580 = vsel %vm579, 0.0, %v575
          %v581 = vmax.f32 %v554, %v580
          %s582 = sadd.s32 %s193, 32
          %s583 = sadd.s32 %s582, %s336
          %s584 = scalar_lea.vmem %s132, %s583
          %v585 = vld [vmem:[%s584] sm:$0x3]
          %s586 = sadd.s32 %s583, 144
          %s587 = scalar_lea.vmem %s132, %s586
          %v588 = vld [vmem:[%s587] sm:$0x3]
          %v589 = vstv %s339
          %v590 = vmul.f32 %v589, %v585
          %v591 = vstv %s338
          %v592 = vmul.f32 %v591, %v585
          %v594 = vrot.slane %v592, 1
          %v596 = vadd.f32 %v590, %v594
          %v597 = vmul.f32 %v589, %v588
          %v598 = vmul.f32 %v591, %v588
          %v600 = vrot.slane %v598, 1
          %v602 = vadd.f32 %v597, %v600
          %v603 = vmul.f32 %v372, %v596
          %v604 = vmul.f32 %v374, %v602
          %v605 = vadd.f32 %v603, %v604
          %p606 = por %p185, %p331
          %s607 = scalar_select %p606, 1, 0
          %v608 = vstv %s607
          %vm609 = vcmp.eq.s32.totalorder %v608, 1
          %v610 = vsel %vm609, 0.0, %v605
          %v611 = vmax.f32 %v610, -1e+10
          %s612 = sadd.s32 %s582, %s348
          %s613 = scalar_lea.vmem %s132, %s612
          %v614 = vld [vmem:[%s613] sm:$0x3]
          %s615 = sadd.s32 %s612, 144
          %s616 = scalar_lea.vmem %s132, %s615
          %v617 = vld [vmem:[%s616] sm:$0x3]
          %v618 = vstv %s351
          %v619 = vmul.f32 %v618, %v614
          %v620 = vstv %s350
          %v621 = vmul.f32 %v620, %v614
          %v623 = vrot.slane %v621, 1
          %v625 = vadd.f32 %v619, %v623
          %v626 = vmul.f32 %v618, %v617
          %v627 = vmul.f32 %v620, %v617
          %v629 = vrot.slane %v627, 1
          %v631 = vadd.f32 %v626, %v629
          %v632 = vmul.f32 %v372, %v625
          %v633 = vmul.f32 %v374, %v631
          %v634 = vadd.f32 %v632, %v633
          %p635 = por %p185, %p343
          %s636 = scalar_select %p635, 1, 0
          %v637 = vstv %s636
          %vm638 = vcmp.eq.s32.totalorder %v637, 1
          %v639 = vsel %vm638, 0.0, %v634
          %v640 = vmax.f32 %v611, %v639
          %s641 = sadd.s32 %s210, 32
          %s642 = sadd.s32 %s641, %s336
          %s643 = scalar_lea.vmem %s132, %s642
          %v644 = vld [vmem:[%s643] sm:$0x3]
          %s645 = sadd.s32 %s642, 144
          %s646 = scalar_lea.vmem %s132, %s645
          %v647 = vld [vmem:[%s646] sm:$0x3]
          %v648 = vmul.f32 %v589, %v644
          %v649 = vmul.f32 %v591, %v644
          %v651 = vrot.slane %v649, 1
          %v653 = vadd.f32 %v648, %v651
          %v654 = vmul.f32 %v589, %v647
          %v655 = vmul.f32 %v591, %v647
          %v657 = vrot.slane %v655, 1
          %v659 = vadd.f32 %v654, %v657
          %v660 = vmul.f32 %v430, %v653
          %v661 = vmul.f32 %v432, %v659
          %v662 = vadd.f32 %v660, %v661
          %p663 = por %p202, %p331
          %s664 = scalar_select %p663, 1, 0
          %v665 = vstv %s664
          %vm666 = vcmp.eq.s32.totalorder %v665, 1
          %v667 = vsel %vm666, 0.0, %v662
          %v668 = vmax.f32 %v640, %v667
          %s669 = sadd.s32 %s641, %s348
          %s670 = scalar_lea.vmem %s132, %s669
          %v671 = vld [vmem:[%s670] sm:$0x3]
          %s672 = sadd.s32 %s669, 144
          %s673 = scalar_lea.vmem %s132, %s672
          %v674 = vld [vmem:[%s673] sm:$0x3]
          %v675 = vmul.f32 %v618, %v671
          %v676 = vmul.f32 %v620, %v671
          %v678 = vrot.slane %v676, 1
          %v680 = vadd.f32 %v675, %v678
          %v681 = vmul.f32 %v618, %v674
          %v682 = vmul.f32 %v620, %v674
          %v684 = vrot.slane %v682, 1
          %v686 = vadd.f32 %v681, %v684
          %v687 = vmul.f32 %v430, %v680
          %v688 = vmul.f32 %v432, %v686
          %v689 = vadd.f32 %v687, %v688
          %p690 = por %p202, %p343
          %s691 = scalar_select %p690, 1, 0
          %v692 = vstv %s691
          %vm693 = vcmp.eq.s32.totalorder %v692, 1
          %v694 = vsel %vm693, 0.0, %v689
          %v695 = vmax.f32 %v668, %v694
          %s696 = sadd.s32 %s224, 48
          %s697 = sadd.s32 %s696, %s281
          %s698 = scalar_lea.vmem %s132, %s697
          %v699 = vld [vmem:[%s698] sm:$0x3]
          %s700 = sadd.s32 %s697, 144
          %s701 = scalar_lea.vmem %s132, %s700
          %v702 = vld [vmem:[%s701] sm:$0x3]
          %v703 = vmul.f32 %v358, %v699
          %v704 = vmul.f32 %v360, %v699
          %v706 = vrot.slane %v704, 1
          %v708 = vadd.f32 %v703, %v706
          %v709 = vmul.f32 %v358, %v702
          %v710 = vmul.f32 %v360, %v702
          %v712 = vrot.slane %v710, 1
          %v714 = vadd.f32 %v709, %v712
          %v715 = vstv %s225
          %v716 = vmul.f32 %v715, %v708
          %v717 = vstv %s223
          %v718 = vmul.f32 %v717, %v714
          %v719 = vadd.f32 %v716, %v718
          %p720 = por %p216, %p276
          %s721 = scalar_select %p720, 1, 0
          %v722 = vstv %s721
          %vm723 = vcmp.eq.s32.totalorder %v722, 1
          %v724 = vsel %vm723, 0.0, %v719
          %v725 = vmax.f32 %v724, -1e+10
          %s726 = sadd.s32 %s696, %s297
          %s727 = scalar_lea.vmem %s132, %s726
          %v728 = vld [vmem:[%s727] sm:$0x3]
          %s729 = sadd.s32 %s726, 144
          %s730 = scalar_lea.vmem %s132, %s729
          %v731 = vld [vmem:[%s730] sm:$0x3]
          %v732 = vmul.f32 %v389, %v728
          %v733 = vmul.f32 %v391, %v728
          %v735 = vrot.slane %v733, 1
          %v737 = vadd.f32 %v732, %v735
          %v738 = vmul.f32 %v389, %v731
          %v739 = vmul.f32 %v391, %v731
          %v741 = vrot.slane %v739, 1
          %v743 = vadd.f32 %v738, %v741
          %v744 = vmul.f32 %v715, %v737
          %v745 = vmul.f32 %v717, %v743
          %v746 = vadd.f32 %v744, %v745
          %p747 = por %p216, %p292
          %s748 = scalar_select %p747, 1, 0
          %v749 = vstv %s748
          %vm750 = vcmp.eq.s32.totalorder %v749, 1
          %v751 = vsel %vm750, 0.0, %v746
          %v752 = vmax.f32 %v725, %v751
          %s753 = sadd.s32 %s237, 48
          %s754 = sadd.s32 %s753, %s281
          %s755 = scalar_lea.vmem %s132, %s754
          %v756 = vld [vmem:[%s755] sm:$0x3]
          %s757 = sadd.s32 %s754, 144
          %s758 = scalar_lea.vmem %s132, %s757
          %v759 = vld [vmem:[%s758] sm:$0x3]
          %v760 = vmul.f32 %v358, %v756
          %v761 = vmul.f32 %v360, %v756
          %v763 = vrot.slane %v761, 1
          %v765 = vadd.f32 %v760, %v763
          %v766 = vmul.f32 %v358, %v759
          %v767 = vmul.f32 %v360, %v759
          %v769 = vrot.slane %v767, 1
          %v771 = vadd.f32 %v766, %v769
          %v772 = vstv %s238
          %v773 = vmul.f32 %v772, %v765
          %v774 = vstv %s236
          %v775 = vmul.f32 %v774, %v771
          %v776 = vadd.f32 %v773, %v775
          %p777 = por %p229, %p276
          %s778 = scalar_select %p777, 1, 0
          %v779 = vstv %s778
          %vm780 = vcmp.eq.s32.totalorder %v779, 1
          %v781 = vsel %vm780, 0.0, %v776
          %v782 = vmax.f32 %v752, %v781
          %s783 = sadd.s32 %s753, %s297
          %s784 = scalar_lea.vmem %s132, %s783
          %v785 = vld [vmem:[%s784] sm:$0x3]
          %s786 = sadd.s32 %s783, 144
          %s787 = scalar_lea.vmem %s132, %s786
          %v788 = vld [vmem:[%s787] sm:$0x3]
          %v789 = vmul.f32 %v389, %v785
          %v790 = vmul.f32 %v391, %v785
          %v792 = vrot.slane %v790, 1
          %v794 = vadd.f32 %v789, %v792
          %v795 = vmul.f32 %v389, %v788
          %v796 = vmul.f32 %v391, %v788
          %v798 = vrot.slane %v796, 1
          %v800 = vadd.f32 %v795, %v798
          %v801 = vmul.f32 %v772, %v794
          %v802 = vmul.f32 %v774, %v800
          %v803 = vadd.f32 %v801, %v802
          %p804 = por %p229, %p292
          %s805 = scalar_select %p804, 1, 0
          %v806 = vstv %s805
          %vm807 = vcmp.eq.s32.totalorder %v806, 1
          %v808 = vsel %vm807, 0.0, %v803
          %v809 = vmax.f32 %v782, %v808
          %s810 = sadd.s32 %s224, 64
          %s811 = sadd.s32 %s810, %s310
          %s812 = scalar_lea.vmem %s132, %s811
          %v813 = vld [vmem:[%s812] sm:$0x3]
          %s814 = sadd.s32 %s811, 144
          %s815 = scalar_lea.vmem %s132, %s814
          %v816 = vld [vmem:[%s815] sm:$0x3]
          %v817 = vmul.f32 %v475, %v813
          %v818 = vmul.f32 %v477, %v813
          %v820 = vrot.slane %v818, 1
          %v822 = vadd.f32 %v817, %v820
          %v823 = vmul.f32 %v475, %v816
          %v824 = vmul.f32 %v477, %v816
          %v826 = vrot.slane %v824, 1
          %v828 = vadd.f32 %v823, %v826
          %v829 = vmul.f32 %v715, %v822
          %v830 = vmul.f32 %v717, %v828
          %v831 = vadd.f32 %v829, %v830
          %p832 = por %p216, %p305
          %s833 = scalar_select %p832, 1, 0
          %v834 = vstv %s833
          %vm835 = vcmp.eq.s32.totalorder %v834, 1
          %v836 = vsel %vm835, 0.0, %v831
          %v837 = vmax.f32 %v836, -1e+10
          %s838 = sadd.s32 %s810, %s322
          %s839 = scalar_lea.vmem %s132, %s838
          %v840 = vld [vmem:[%s839] sm:$0x3]
          %s841 = sadd.s32 %s838, 144
          %s842 = scalar_lea.vmem %s132, %s841
          %v843 = vld [vmem:[%s842] sm:$0x3]
          %v844 = vmul.f32 %v504, %v840
          %v845 = vmul.f32 %v506, %v840
          %v847 = vrot.slane %v845, 1
          %v849 = vadd.f32 %v844, %v847
          %v850 = vmul.f32 %v504, %v843
          %v851 = vmul.f32 %v506, %v843
          %v853 = vrot.slane %v851, 1
          %v855 = vadd.f32 %v850, %v853
          %v856 = vmul.f32 %v715, %v849
          %v857 = vmul.f32 %v717, %v855
          %v858 = vadd.f32 %v856, %v857
          %p859 = por %p216, %p317
          %s860 = scalar_select %p859, 1, 0
          %v861 = vstv %s860
          %vm862 = vcmp.eq.s32.totalorder %v861, 1
          %v863 = vsel %vm862, 0.0, %v858
          %v864 = vmax.f32 %v837, %v863
          %s865 = sadd.s32 %s237, 64
          %s866 = sadd.s32 %s865, %s310
          %s867 = scalar_lea.vmem %s132, %s866
          %v868 = vld [vmem:[%s867] sm:$0x3]
          %s869 = sadd.s32 %s866, 144
          %s870 = scalar_lea.vmem %s132, %s869
          %v871 = vld [vmem:[%s870] sm:$0x3]
          %v872 = vmul.f32 %v475, %v868
          %v873 = vmul.f32 %v477, %v868
          %v875 = vrot.slane %v873, 1
          %v877 = vadd.f32 %v872, %v875
          %v878 = vmul.f32 %v475, %v871
          %v879 = vmul.f32 %v477, %v871
          %v881 = vrot.slane %v879, 1
          %v883 = vadd.f32 %v878, %v881
          %v884 = vmul.f32 %v772, %v877
          %v885 = vmul.f32 %v774, %v883
          %v886 = vadd.f32 %v884, %v885
          %p887 = por %p229, %p305
          %s888 = scalar_select %p887, 1, 0
          %v889 = vstv %s888
          %vm890 = vcmp.eq.s32.totalorder %v889, 1
          %v891 = vsel %vm890, 0.0, %v886
          %v892 = vmax.f32 %v864, %v891
          %s893 = sadd.s32 %s865, %s322
          %s894 = scalar_lea.vmem %s132, %s893
          %v895 = vld [vmem:[%s894] sm:$0x3]
          %s896 = sadd.s32 %s893, 144
          %s897 = scalar_lea.vmem %s132, %s896
          %v898 = vld [vmem:[%s897] sm:$0x3]
          %v899 = vmul.f32 %v504, %v895
          %v900 = vmul.f32 %v506, %v895
          %v902 = vrot.slane %v900, 1
          %v904 = vadd.f32 %v899, %v902
          %v905 = vmul.f32 %v504, %v898
          %v906 = vmul.f32 %v506, %v898
          %v908 = vrot.slane %v906, 1
          %v910 = vadd.f32 %v905, %v908
          %v911 = vmul.f32 %v772, %v904
          %v912 = vmul.f32 %v774, %v910
          %v913 = vadd.f32 %v911, %v912
          %p914 = por %p229, %p317
          %s915 = scalar_select %p914, 1, 0
          %v916 = vstv %s915
          %vm917 = vcmp.eq.s32.totalorder %v916, 1
          %v918 = vsel %vm917, 0.0, %v913
          %v919 = vmax.f32 %v892, %v918
          %s920 = sadd.s32 %s224, 80
          %s921 = sadd.s32 %s920, %s336
          %s922 = scalar_lea.vmem %s132, %s921
          %v923 = vld [vmem:[%s922] sm:$0x3]
          %s924 = sadd.s32 %s921, 144
          %s925 = scalar_lea.vmem %s132, %s924
          %v926 = vld [vmem:[%s925] sm:$0x3]
          %v927 = vmul.f32 %v589, %v923
          %v928 = vmul.f32 %v591, %v923
          %v930 = vrot.slane %v928, 1
          %v932 = vadd.f32 %v927, %v930
          %v933 = vmul.f32 %v589, %v926
          %v934 = vmul.f32 %v591, %v926
          %v936 = vrot.slane %v934, 1
          %v938 = vadd.f32 %v933, %v936
          %v939 = vmul.f32 %v715, %v932
          %v940 = vmul.f32 %v717, %v938
          %v941 = vadd.f32 %v939, %v940
          %p942 = por %p216, %p331
          %s943 = scalar_select %p942, 1, 0
          %v944 = vstv %s943
          %vm945 = vcmp.eq.s32.totalorder %v944, 1
          %v946 = vsel %vm945, 0.0, %v941
          %v947 = vmax.f32 %v946, -1e+10
          %s948 = sadd.s32 %s920, %s348
          %s949 = scalar_lea.vmem %s132, %s948
          %v950 = vld [vmem:[%s949] sm:$0x3]
          %s951 = sadd.s32 %s948, 144
          %s952 = scalar_lea.vmem %s132, %s951
          %v953 = vld [vmem:[%s952] sm:$0x3]
          %v954 = vmul.f32 %v618, %v950
          %v955 = vmul.f32 %v620, %v950
          %v957 = vrot.slane %v955, 1
          %v959 = vadd.f32 %v954, %v957
          %v960 = vmul.f32 %v618, %v953
          %v961 = vmul.f32 %v620, %v953
          %v963 = vrot.slane %v961, 1
          %v965 = vadd.f32 %v960, %v963
          %v966 = vmul.f32 %v715, %v959
          %v967 = vmul.f32 %v717, %v965
          %v968 = vadd.f32 %v966, %v967
          %p969 = por %p216, %p343
          %s970 = scalar_select %p969, 1, 0
          %v971 = vstv %s970
          %vm972 = vcmp.eq.s32.totalorder %v971, 1
          %v973 = vsel %vm972, 0.0, %v968
          %v974 = vmax.f32 %v947, %v973
          %s975 = sadd.s32 %s237, 80
          %s976 = sadd.s32 %s975, %s336
          %s977 = scalar_lea.vmem %s132, %s976
          %v978 = vld [vmem:[%s977] sm:$0x3]
          %s979 = sadd.s32 %s976, 144
          %s980 = scalar_lea.vmem %s132, %s979
          %v981 = vld [vmem:[%s980] sm:$0x3]
          %v982 = vmul.f32 %v589, %v978
          %v983 = vmul.f32 %v591, %v978
          %v985 = vrot.slane %v983, 1
          %v987 = vadd.f32 %v982, %v985
          %v988 = vmul.f32 %v589, %v981
          %v989 = vmul.f32 %v591, %v981
          %v991 = vrot.slane %v989, 1
          %v993 = vadd.f32 %v988, %v991
          %v994 = vmul.f32 %v772, %v987
          %v995 = vmul.f32 %v774, %v993
          %v996 = vadd.f32 %v994, %v995
          %p997 = por %p229, %p331
          %s998 = scalar_select %p997, 1, 0
          %v999 = vstv %s998
          %vm1000 = vcmp.eq.s32.totalorder %v999, 1
          %v1001 = vsel %vm1000, 0.0, %v996
          %v1002 = vmax.f32 %v974, %v1001
          %s1003 = sadd.s32 %s975, %s348
          %s1004 = scalar_lea.vmem %s132, %s1003
          %v1005 = vld [vmem:[%s1004] sm:$0x3]
          %s1006 = sadd.s32 %s1003, 144
          %s1007 = scalar_lea.vmem %s132, %s1006
          %v1008 = vld [vmem:[%s1007] sm:$0x3]
          %v1009 = vmul.f32 %v618, %v1005
          %v1010 = vmul.f32 %v620, %v1005
          %v1012 = vrot.slane %v1010, 1
          %v1014 = vadd.f32 %v1009, %v1012
          %v1015 = vmul.f32 %v618, %v1008
          %v1016 = vmul.f32 %v620, %v1008
          %v1018 = vrot.slane %v1016, 1
          %v1020 = vadd.f32 %v1015, %v1018
          %v1021 = vmul.f32 %v772, %v1014
          %v1022 = vmul.f32 %v774, %v1020
          %v1023 = vadd.f32 %v1021, %v1022
          %p1024 = por %p229, %p343
          %s1025 = scalar_select %p1024, 1, 0
          %v1026 = vstv %s1025
          %vm1027 = vcmp.eq.s32.totalorder %v1026, 1
          %v1028 = vsel %vm1027, 0.0, %v1023
          %v1029 = vmax.f32 %v1002, %v1028
          %s1030 = sadd.s32 %s252, 96
          %s1031 = sadd.s32 %s1030, %s281
          %s1032 = scalar_lea.vmem %s132, %s1031
          %v1033 = vld [vmem:[%s1032] sm:$0x3]
          %s1034 = sadd.s32 %s1031, 144
          %s1035 = scalar_lea.vmem %s132, %s1034
          %v1036 = vld [vmem:[%s1035] sm:$0x3]
          %v1037 = vmul.f32 %v358, %v1033
          %v1038 = vmul.f32 %v360, %v1033
          %v1040 = vrot.slane %v1038, 1
          %v1042 = vadd.f32 %v1037, %v1040
          %v1043 = vmul.f32 %v358, %v1036
          %v1044 = vmul.f32 %v360, %v1036
          %v1046 = vrot.slane %v1044, 1
          %v1048 = vadd.f32 %v1043, %v1046
          %v1049 = vstv %s253
          %v1050 = vmul.f32 %v1049, %v1042
          %v1051 = vstv %s251
          %v1052 = vmul.f32 %v1051, %v1048
          %v1053 = vadd.f32 %v1050, %v1052
          %p1054 = por %p244, %p276
          %s1055 = scalar_select %p1054, 1, 0
          %v1056 = vstv %s1055
          %vm1057 = vcmp.eq.s32.totalorder %v1056, 1
          %v1058 = vsel %vm1057, 0.0, %v1053
          %v1059 = vmax.f32 %v1058, -1e+10
          %s1060 = sadd.s32 %s1030, %s297
          %s1061 = scalar_lea.vmem %s132, %s1060
          %v1062 = vld [vmem:[%s1061] sm:$0x3]
          %s1063 = sadd.s32 %s1060, 144
          %s1064 = scalar_lea.vmem %s132, %s1063
          %v1065 = vld [vmem:[%s1064] sm:$0x3]
          %v1066 = vmul.f32 %v389, %v1062
          %v1067 = vmul.f32 %v391, %v1062
          %v1069 = vrot.slane %v1067, 1
          %v1071 = vadd.f32 %v1066, %v1069
          %v1072 = vmul.f32 %v389, %v1065
          %v1073 = vmul.f32 %v391, %v1065
          %v1075 = vrot.slane %v1073, 1
          %v1077 = vadd.f32 %v1072, %v1075
          %v1078 = vmul.f32 %v1049, %v1071
          %v1079 = vmul.f32 %v1051, %v1077
          %v1080 = vadd.f32 %v1078, %v1079
          %p1081 = por %p244, %p292
          %s1082 = scalar_select %p1081, 1, 0
          %v1083 = vstv %s1082
          %vm1084 = vcmp.eq.s32.totalorder %v1083, 1
          %v1085 = vsel %vm1084, 0.0, %v1080
          %v1086 = vmax.f32 %v1059, %v1085
          %s1087 = sadd.s32 %s265, 96
          %s1088 = sadd.s32 %s1087, %s281
          %s1089 = scalar_lea.vmem %s132, %s1088
          %v1090 = vld [vmem:[%s1089] sm:$0x3]
          %s1091 = sadd.s32 %s1088, 144
          %s1092 = scalar_lea.vmem %s132, %s1091
          %v1093 = vld [vmem:[%s1092] sm:$0x3]
          %v1094 = vmul.f32 %v358, %v1090
          %v1095 = vmul.f32 %v360, %v1090
          %v1097 = vrot.slane %v1095, 1
          %v1099 = vadd.f32 %v1094, %v1097
          %v1100 = vmul.f32 %v358, %v1093
          %v1101 = vmul.f32 %v360, %v1093
          %v1103 = vrot.slane %v1101, 1
          %v1105 = vadd.f32 %v1100, %v1103
          %v1106 = vstv %s266
          %v1107 = vmul.f32 %v1106, %v1099
          %v1108 = vstv %s264
          %v1109 = vmul.f32 %v1108, %v1105
          %v1110 = vadd.f32 %v1107, %v1109
          %p1111 = por %p257, %p276
          %s1112 = scalar_select %p1111, 1, 0
          %v1113 = vstv %s1112
          %vm1114 = vcmp.eq.s32.totalorder %v1113, 1
          %v1115 = vsel %vm1114, 0.0, %v1110
          %v1116 = vmax.f32 %v1086, %v1115
          %s1117 = sadd.s32 %s1087, %s297
          %s1118 = scalar_lea.vmem %s132, %s1117
          %v1119 = vld [vmem:[%s1118] sm:$0x3]
          %s1120 = sadd.s32 %s1117, 144
          %s1121 = scalar_lea.vmem %s132, %s1120
          %v1122 = vld [vmem:[%s1121] sm:$0x3]
          %v1123 = vmul.f32 %v389, %v1119
          %v1124 = vmul.f32 %v391, %v1119
          %v1126 = vrot.slane %v1124, 1
          %v1128 = vadd.f32 %v1123, %v1126
          %v1129 = vmul.f32 %v389, %v1122
          %v1130 = vmul.f32 %v391, %v1122
          %v1132 = vrot.slane %v1130, 1
          %v1134 = vadd.f32 %v1129, %v1132
          %v1135 = vmul.f32 %v1106, %v1128
          %v1136 = vmul.f32 %v1108, %v1134
          %v1137 = vadd.f32 %v1135, %v1136
          %p1138 = por %p257, %p292
          %s1139 = scalar_select %p1138, 1, 0
          %v1140 = vstv %s1139
          %vm1141 = vcmp.eq.s32.totalorder %v1140, 1
          %v1142 = vsel %vm1141, 0.0, %v1137
          %v1143 = vmax.f32 %v1116, %v1142
          %s1144 = sadd.s32 %s252, 112
          %s1145 = sadd.s32 %s1144, %s310
          %s1146 = scalar_lea.vmem %s132, %s1145
          %v1147 = vld [vmem:[%s1146] sm:$0x3]
          %s1148 = sadd.s32 %s1145, 144
          %s1149 = scalar_lea.vmem %s132, %s1148
          %v1150 = vld [vmem:[%s1149] sm:$0x3]
          %v1151 = vmul.f32 %v475, %v1147
          %v1152 = vmul.f32 %v477, %v1147
          %v1154 = vrot.slane %v1152, 1
          %v1156 = vadd.f32 %v1151, %v1154
          %v1157 = vmul.f32 %v475, %v1150
          %v1158 = vmul.f32 %v477, %v1150
          %v1160 = vrot.slane %v1158, 1
          %v1162 = vadd.f32 %v1157, %v1160
          %v1163 = vmul.f32 %v1049, %v1156
          %v1164 = vmul.f32 %v1051, %v1162
          %v1165 = vadd.f32 %v1163, %v1164
          %p1166 = por %p244, %p305
          %s1167 = scalar_select %p1166, 1, 0
          %v1168 = vstv %s1167
          %vm1169 = vcmp.eq.s32.totalorder %v1168, 1
          %v1170 = vsel %vm1169, 0.0, %v1165
          %v1171 = vmax.f32 %v1170, -1e+10
          %s1172 = sadd.s32 %s1144, %s322
          %s1173 = scalar_lea.vmem %s132, %s1172
          %v1174 = vld [vmem:[%s1173] sm:$0x3]
          %s1175 = sadd.s32 %s1172, 144
          %s1176 = scalar_lea.vmem %s132, %s1175
          %v1177 = vld [vmem:[%s1176] sm:$0x3]
          %v1178 = vmul.f32 %v504, %v1174
          %v1179 = vmul.f32 %v506, %v1174
          %v1181 = vrot.slane %v1179, 1
          %v1183 = vadd.f32 %v1178, %v1181
          %v1184 = vmul.f32 %v504, %v1177
          %v1185 = vmul.f32 %v506, %v1177
          %v1187 = vrot.slane %v1185, 1
          %v1189 = vadd.f32 %v1184, %v1187
          %v1190 = vmul.f32 %v1049, %v1183
          %v1191 = vmul.f32 %v1051, %v1189
          %v1192 = vadd.f32 %v1190, %v1191
          %p1193 = por %p244, %p317
          %s1194 = scalar_select %p1193, 1, 0
          %v1195 = vstv %s1194
          %vm1196 = vcmp.eq.s32.totalorder %v1195, 1
          %v1197 = vsel %vm1196, 0.0, %v1192
          %v1198 = vmax.f32 %v1171, %v1197
          %s1199 = sadd.s32 %s265, 112
          %s1200 = sadd.s32 %s1199, %s310
          %s1201 = scalar_lea.vmem %s132, %s1200
          %v1202 = vld [vmem:[%s1201] sm:$0x3]
          %s1203 = sadd.s32 %s1200, 144
          %s1204 = scalar_lea.vmem %s132, %s1203
          %v1205 = vld [vmem:[%s1204] sm:$0x3]
          %v1206 = vmul.f32 %v475, %v1202
          %v1207 = vmul.f32 %v477, %v1202
          %v1209 = vrot.slane %v1207, 1
          %v1211 = vadd.f32 %v1206, %v1209
          %v1212 = vmul.f32 %v475, %v1205
          %v1213 = vmul.f32 %v477, %v1205
          %v1215 = vrot.slane %v1213, 1
          %v1217 = vadd.f32 %v1212, %v1215
          %v1218 = vmul.f32 %v1106, %v1211
          %v1219 = vmul.f32 %v1108, %v1217
          %v1220 = vadd.f32 %v1218, %v1219
          %p1221 = por %p257, %p305
          %s1222 = scalar_select %p1221, 1, 0
          %v1223 = vstv %s1222
          %vm1224 = vcmp.eq.s32.totalorder %v1223, 1
          %v1225 = vsel %vm1224, 0.0, %v1220
          %v1226 = vmax.f32 %v1198, %v1225
          %s1227 = sadd.s32 %s1199, %s322
          %s1228 = scalar_lea.vmem %s132, %s1227
          %v1229 = vld [vmem:[%s1228] sm:$0x3]
          %s1230 = sadd.s32 %s1227, 144
          %s1231 = scalar_lea.vmem %s132, %s1230
          %v1232 = vld [vmem:[%s1231] sm:$0x3]
          %v1233 = vmul.f32 %v504, %v1229
          %v1234 = vmul.f32 %v506, %v1229
          %v1236 = vrot.slane %v1234, 1
          %v1238 = vadd.f32 %v1233, %v1236
          %v1239 = vmul.f32 %v504, %v1232
          %v1240 = vmul.f32 %v506, %v1232
          %v1242 = vrot.slane %v1240, 1
          %v1244 = vadd.f32 %v1239, %v1242
          %v1245 = vmul.f32 %v1106, %v1238
          %v1246 = vmul.f32 %v1108, %v1244
          %v1247 = vadd.f32 %v1245, %v1246
          %p1248 = por %p257, %p317
          %s1249 = scalar_select %p1248, 1, 0
          %v1250 = vstv %s1249
          %vm1251 = vcmp.eq.s32.totalorder %v1250, 1
          %v1252 = vsel %vm1251, 0.0, %v1247
          %v1253 = vmax.f32 %v1226, %v1252
          %s1254 = sadd.s32 %s252, 128
          %s1255 = sadd.s32 %s1254, %s336
          %s1256 = scalar_lea.vmem %s132, %s1255
          %v1257 = vld [vmem:[%s1256] sm:$0x3]
          %s1258 = sadd.s32 %s1255, 144
          %s1259 = scalar_lea.vmem %s132, %s1258
          %v1260 = vld [vmem:[%s1259] sm:$0x3]
          %v1261 = vmul.f32 %v589, %v1257
          %v1262 = vmul.f32 %v591, %v1257
          %v1264 = vrot.slane %v1262, 1
          %v1266 = vadd.f32 %v1261, %v1264
          %v1267 = vmul.f32 %v589, %v1260
          %v1268 = vmul.f32 %v591, %v1260
          %v1270 = vrot.slane %v1268, 1
          %v1272 = vadd.f32 %v1267, %v1270
          %v1273 = vmul.f32 %v1049, %v1266
          %v1274 = vmul.f32 %v1051, %v1272
          %v1275 = vadd.f32 %v1273, %v1274
          %p1276 = por %p244, %p331
          %s1277 = scalar_select %p1276, 1, 0
          %v1278 = vstv %s1277
          %vm1279 = vcmp.eq.s32.totalorder %v1278, 1
          %v1280 = vsel %vm1279, 0.0, %v1275
          %v1281 = vmax.f32 %v1280, -1e+10
          %s1282 = sadd.s32 %s1254, %s348
          %s1283 = scalar_lea.vmem %s132, %s1282
          %v1284 = vld [vmem:[%s1283] sm:$0x3]
          %s1285 = sadd.s32 %s1282, 144
          %s1286 = scalar_lea.vmem %s132, %s1285
          %v1287 = vld [vmem:[%s1286] sm:$0x3]
          %v1288 = vmul.f32 %v618, %v1284
          %v1289 = vmul.f32 %v620, %v1284
          %v1291 = vrot.slane %v1289, 1
          %v1293 = vadd.f32 %v1288, %v1291
          %v1294 = vmul.f32 %v618, %v1287
          %v1295 = vmul.f32 %v620, %v1287
          %v1297 = vrot.slane %v1295, 1
          %v1299 = vadd.f32 %v1294, %v1297
          %v1300 = vmul.f32 %v1049, %v1293
          %v1301 = vmul.f32 %v1051, %v1299
          %v1302 = vadd.f32 %v1300, %v1301
          %p1303 = por %p244, %p343
          %s1304 = scalar_select %p1303, 1, 0
          %v1305 = vstv %s1304
          %vm1306 = vcmp.eq.s32.totalorder %v1305, 1
          %v1307 = vsel %vm1306, 0.0, %v1302
          %v1308 = vmax.f32 %v1281, %v1307
          %s1309 = sadd.s32 %s265, 128
          %s1310 = sadd.s32 %s1309, %s336
          %s1311 = scalar_lea.vmem %s132, %s1310
          %v1312 = vld [vmem:[%s1311] sm:$0x3]
          %s1313 = sadd.s32 %s1310, 144
          %s1314 = scalar_lea.vmem %s132, %s1313
          %v1315 = vld [vmem:[%s1314] sm:$0x3]
          %v1316 = vmul.f32 %v589, %v1312
          %v1317 = vmul.f32 %v591, %v1312
          %v1319 = vrot.slane %v1317, 1
          %v1321 = vadd.f32 %v1316, %v1319
          %v1322 = vmul.f32 %v589, %v1315
          %v1323 = vmul.f32 %v591, %v1315
          %v1325 = vrot.slane %v1323, 1
          %v1327 = vadd.f32 %v1322, %v1325
          %v1328 = vmul.f32 %v1106, %v1321
          %v1329 = vmul.f32 %v1108, %v1327
          %v1330 = vadd.f32 %v1328, %v1329
          %p1331 = por %p257, %p331
          %s1332 = scalar_select %p1331, 1, 0
          %v1333 = vstv %s1332
          %vm1334 = vcmp.eq.s32.totalorder %v1333, 1
          %v1335 = vsel %vm1334, 0.0, %v1330
          %v1336 = vmax.f32 %v1308, %v1335
          %s1337 = sadd.s32 %s1309, %s348
          %s1338 = scalar_lea.vmem %s132, %s1337
          %v1339 = vld [vmem:[%s1338] sm:$0x3]
          %s1340 = sadd.s32 %s1337, 144
          %s1341 = scalar_lea.vmem %s132, %s1340
          %v1342 = vld [vmem:[%s1341] sm:$0x3]
          %v1343 = vmul.f32 %v618, %v1339
          %v1344 = vmul.f32 %v620, %v1339
          %v1346 = vrot.slane %v1344, 1
          %v1348 = vadd.f32 %v1343, %v1346
          %v1349 = vmul.f32 %v618, %v1342
          %v1350 = vmul.f32 %v620, %v1342
          %v1352 = vrot.slane %v1350, 1
          %v1354 = vadd.f32 %v1349, %v1352
          %v1355 = vmul.f32 %v1106, %v1348
          %v1356 = vmul.f32 %v1108, %v1354
          %v1357 = vadd.f32 %v1355, %v1356
          %p1358 = por %p257, %p343
          %s1359 = scalar_select %p1358, 1, 0
          %v1360 = vstv %s1359
          %vm1361 = vcmp.eq.s32.totalorder %v1360, 1
          %v1362 = vsel %vm1361, 0.0, %v1357
          %v1363 = vmax.f32 %v1336, %v1362
          %1365 = vrot.lane.b32.xlu0 %v581, 8
          %v1366 = vpop.permute.xlu0 %1365
          %1369 = vrot.lane.b32.xlu0 %v695, 16
          %v1370 = vpop.permute.xlu0 %1369
          %1373 = vrot.lane.b32.xlu0 %v809, 24
          %v1374 = vpop.permute.xlu0 %1373
          %1377 = vrot.lane.b32.xlu0 %v919, 32
          %v1378 = vpop.permute.xlu0 %1377
          %1381 = vrot.lane.b32.xlu0 %v1029, 40
          %v1382 = vpop.permute.xlu0 %1381
          %1385 = vrot.lane.b32.xlu0 %v1143, 48
          %v1386 = vpop.permute.xlu0 %1385
          %1389 = vrot.lane.b32.xlu0 %v1253, 56
          %v1390 = vpop.permute.xlu0 %1389
          %1393 = vrot.lane.b32.xlu0 %v1363, 64
          %v1394 = vpop.permute.xlu0 %1393
          %vm1396 = vcmask 64512
          %v1397 = vsel %vm1396, %v467, %v1366
          %vm1398 = vcmask 130048
          %v1399 = vsel %vm1398, %v1397, %v1370
          %vm1400 = vcmask 195584
          %v1401 = vsel %vm1400, %v1399, %v1374
          %vm1402 = vcmask 261120
          %v1403 = vsel %vm1402, %v1401, %v1378
          %vm1404 = vcmask 326656
          %v1405 = vsel %vm1404, %v1403, %v1382
          %vm1406 = vcmask 392192
          %v1407 = vsel %vm1406, %v1405, %v1386
          %vm1408 = vcmask 457728
          %v1409 = vsel %vm1408, %v1407, %v1390
          %vm1410 = vcmask 523264
          %v1411 = vsel %vm1410, %v1409, %v1394
          %s1412 = scalar_lea.vmem %s126, %s135 [#allocation5]
          %vm1413 = vcmask 581632
          %1414 = vst.msk [vmem:[%s1412] sm:$0x1] %vm1413, %v1411
        $region29: #{tpu_custom_call.1} parent=23 // loop_footer
          %s139 = sadd.s32 1, %s135
        $region30: #{tpu_custom_call.1} parent=23 // loop_footer_branch
          %134 = sbr.rel target = $region26
        $region31: #{tpu_custom_call.1} parent=23 // loop_exit
          _
        %s1415 = sand.u32 %s63, 1
        %s1416 = scalar_lea.sflag [#allocation6], %s1415
        %s1417 = sand.u32 %s63, 1
        %s1418 = smul.addr %s1417, 8
        %s1419 = scalar_lea.vmem [#allocation5], %s1418
        // Predicated region
        $region32: #{tpu_custom_call.1} parent=23 // pred_check
          %p1420 = pneg %p73
        $region33: #{tpu_custom_call.1} parent=23 // pred_check_branch
          %1422 = sbr.rel (%p1420) target = $region35
        $region34: #{tpu_custom_call.1} parent=23 // pred_region
          %s1424 = ssub.s32 128, 128
          %1425 = vsyncadd %s1416, %s1424
          %s1426 = smul.addr %s27, 128
          %s1427 = scalar_lea.hbm %s3, %s1426
          %s1429 = sshll.u32 %s1419, 4
          %s1430 = int_to_ptr.vmem [resolvable:$true] %s1429
          %1432 = dma.vmem_to_hbm [thread:$0]  %s1430, 128, %s1427, %s1416
        $region35: #{tpu_custom_call.1} parent=23 // pred_fallthru
          _
      $region24: #{tpu_custom_call.1} parent=5 // pred_fallthru
        _
      %p1433 = scmp.le.s32.totalorder 2, %s22
      // Predicated region
      $region36: #{tpu_custom_call.1} parent=5 // pred_check
        %p1434 = pneg %p1433
      $region37: #{tpu_custom_call.1} parent=5 // pred_check_branch
        %1436 = sbr.rel (%p1434) target = $region39
      $region38: #{tpu_custom_call.1} parent=5 // pred_region
        %s1437 = ssub.s32 %s22, 2
        // Predicated region
        $region40: #{tpu_custom_call.1} parent=38 // pred_check
          %p1438 = pneg %p79
        $region41: #{tpu_custom_call.1} parent=38 // pred_check_branch
          %1440 = sbr.rel (%p1438) target = $region43
        $region42: #{tpu_custom_call.1} parent=38 // pred_region
          %s1441 = sand.u32 %s64, 1
          %s1442 = scalar_lea.sflag [#allocation6], %s1441
          %s1443 = sand.u32 %s64, 1
          %s1444 = smul.addr %s1443, 8
          %s1445 = scalar_lea.vmem [#allocation5], %s1444
          %1446 = dma.done %s1442, 128
        $region43: #{tpu_custom_call.1} parent=38 // pred_fallthru
          _
      $region39: #{tpu_custom_call.1} parent=5 // pred_fallthru
        _
    $region6: #{tpu_custom_call.1} parent=1 // loop_footer
      %s26 = sadd.s32 1, %s22
    $region7: #{tpu_custom_call.1} parent=1 // loop_footer_branch
      %21 = sbr.rel target = $region3
    $region8: #{tpu_custom_call.1} parent=1 // loop_exit
      _
    %1447 = vsyncpa [#allocation6], 1
    %s1448 = scalar_lea.sflag [#allocation6], 1
    %1449 = vsyncpa %s1448, 1

</llo_original>
